<compile_context>
chip_gen: v6e
topology: v6e:2x2x1
jax: 0.10.0
libtpu: 0.0.40
codegen_flags: <defaults>
</compile_context>

<pallas_src>
import math
from functools import partial

import jax
import jax.numpy as jnp
from jax.experimental import pallas as pl
from jax.experimental.pallas import tpu as pltpu

LN_EPS = 1e-5  # nn.LayerNorm default (Block's default norm_layer)


def _layernorm(x, gamma, beta):
    mu = jnp.mean(x, axis=-1, keepdims=True)
    var = jnp.mean((x - mu) ** 2, axis=-1, keepdims=True)
    return (x - mu) * jax.lax.rsqrt(var + LN_EPS) * gamma + beta


def _gelu_exact(x):
    return 0.5 * x * (1.0 + jax.lax.erf(x * (1.0 / math.sqrt(2.0))))


def pooling_kernel(x_ref,
                   ln1_g_ref, ln1_b_ref,
                   w_qkv_ref,
                   w_proj_ref, b_proj_ref,
                   ln2_g_ref, ln2_b_ref,
                   w_fc1_ref, b_fc1_ref,
                   w_fc2_ref, b_fc2_ref,
                   pool_ref,
                   o_ref,
                   *, tg, seq):
    """One grid step = `tg` groups. x block is (1, tg*seq, C)."""
    x = x_ref[0].astype(jnp.float32)                         # (M, C), M = tg*seq
    M, C = x.shape
    bf16 = w_qkv_ref.dtype

    # ---- Block part 1: x = x + Attention(LN1(x)), single head ----
    h = _layernorm(x, ln1_g_ref[...], ln1_b_ref[...])
    qkv = jnp.dot(h.astype(bf16), w_qkv_ref[...],
                  preferred_element_type=jnp.float32)        # (M, 3C), f32 acc
    q = qkv[:, :C].reshape(tg, seq, C)
    k = qkv[:, C:2 * C].reshape(tg, seq, C)
    v = qkv[:, 2 * C:].reshape(tg, seq, C)

    scale = C ** -0.5                                        # head_dim = C (1 head)
    # contract k on its last dim directly; no materialized transpose
    logits = jax.lax.dot_general(
        q.astype(bf16), k.astype(bf16),
        dimension_numbers=(((2,), (2,)), ((0,), (0,))),
        preferred_element_type=jnp.float32) * scale          # (tg, S, S)
    logits = logits - jnp.max(logits, axis=-1, keepdims=True)
    p = jnp.exp(logits)
    denom = jnp.sum(p, axis=-1, keepdims=True)
    p = p * pl.reciprocal(denom, approx=True)                # EUP, ~free
    attn = jax.lax.dot_general(
        p.astype(bf16), v.astype(bf16),
        dimension_numbers=(((2,), (1,)), ((0,), (0,))),
        preferred_element_type=jnp.float32)                  # (tg, S, C)
    attn = attn.reshape(M, C)
    attn = jnp.dot(attn.astype(bf16), w_proj_ref[...],
                   preferred_element_type=jnp.float32) + b_proj_ref[...]
    x = x + attn

    # ---- Block part 2: x = x + MLP(LN2(x)), mlp_ratio = 4, exact GELU ----
    h = _layernorm(x, ln2_g_ref[...], ln2_b_ref[...])
    h = jnp.dot(h.astype(bf16), w_fc1_ref[...],
                preferred_element_type=jnp.float32) + b_fc1_ref[...]
    h = _gelu_exact(h)
    h = jnp.dot(h.astype(bf16), w_fc2_ref[...],
                preferred_element_type=jnp.float32) + b_fc2_ref[...]
    x = x + h

    # ---- per-group mean over the sequence as a small MXU matmul ----
    # pool_ref is a block-diagonal (tg, M) matrix with 1/S on group g's tokens,
    # so this replaces an XLU sublane reduction and writes a dense (tg, C) tile.
    o_ref[0] = jnp.dot(pool_ref[...], x,
                       preferred_element_type=jnp.float32).astype(o_ref.dtype)


def _choose_group_tile(num_groups, target=8):
    """Largest divisor of num_groups <= target, keeping >=2 grid steps when
    possible so the 'parallel' axis can shard across v7x's two TensorCores."""
    cap = max(1, min(target, num_groups if num_groups < 2 else num_groups // 2))
    for tg in range(cap, 0, -1):
        if num_groups % tg == 0:
            return tg
    return 1


def transformer_multi_image_pooling(x_nchw, params, *, num_images_per_group,
                                    group_tile=None):
    """x_nchw: (bn, c, h, w) float32. Returns (bn // n, out_features)."""
    bn, c, h, w = x_nchw.shape
    n = num_images_per_group                  # training / always_apply_mi=True path
    if bn % n != 0:
        raise ValueError(f"batch {bn} not divisible by num_images_per_group {n}")
    G = bn // n
    S = n * h * w
    tg = group_tile if group_tile is not None else _choose_group_tile(G)
    if G % tg != 0:
        raise ValueError(f"group_tile {tg} must divide number of groups {G}")
    M = tg * S
    steps = G // tg

    # NCHW -> NHWC -> (steps, TG*S, C). allow_input_fusion below lets XLA fuse
    # this permute/reshape into the pallas_call operand instead of
    # materializing an extra HBM copy of x.
    x = jnp.transpose(x_nchw, (0, 2, 3, 1)).reshape(steps, M, c)

    # block-diagonal mean-pooling operator: row g averages group g's S tokens.
    pool = jnp.repeat(jnp.eye(tg, dtype=jnp.float32), S, axis=1) * (1.0 / S)

    bf16 = jnp.bfloat16
    weight_args = (
        params["ln1_g"], params["ln1_b"],
        params["w_qkv"].astype(bf16),
        params["w_proj"].astype(bf16), params["b_proj"],
        params["ln2_g"], params["ln2_b"],
        params["w_fc1"].astype(bf16), params["b_fc1"],
        params["w_fc2"].astype(bf16), params["b_fc2"],
        pool,
    )

    const2d = lambda a: pl.BlockSpec(a.shape, lambda g: (0, 0))
    kernel = partial(pooling_kernel, tg=tg, seq=S)

    pooled = pl.pallas_call(
        kernel,
        out_shape=jax.ShapeDtypeStruct((steps, tg, c), jnp.float32),
        grid=(steps,),
        in_specs=[pl.BlockSpec((1, M, c), lambda g: (g, 0, 0))]
        + [const2d(a) for a in weight_args],
        out_specs=pl.BlockSpec((1, tg, c), lambda g: (g, 0, 0)),
        compiler_params=pltpu.CompilerParams(
            dimension_semantics=("parallel",),
            vmem_limit_bytes=48 * 1024 * 1024,           # headroom under v7x 64 MiB
            allow_input_fusion=[True] + [False] * len(weight_args),
        ),
    )(x, *weight_args)

    # Final Linear(in_features -> out_features): one dense (G, C) @ (C, F)
    # matmul in plain XLA instead of G degenerate (1, C) @ (C, F) kernel ops.
    pooled = pooled.reshape(G, c)
    return pooled @ params["w_out"] + params["b_out"]


def reference_forward(x_nchw, params, *, num_images_per_group):
    """Pure-JAX f32 reference replicating the PyTorch forward for validation."""
    bn, c, h, w = x_nchw.shape
    n = num_images_per_group
    x = jnp.transpose(x_nchw, (0, 2, 3, 1)).reshape(bn // n, n * h * w, c)

    hnorm = _layernorm(x, params["ln1_g"][0], params["ln1_b"][0])
    qkv = hnorm @ params["w_qkv"]
    q, k, v = qkv[..., :c], qkv[..., c:2 * c], qkv[..., 2 * c:]
    logits = jnp.einsum("gsc,gtc->gst", q, k) * (c ** -0.5)
    p = jax.nn.softmax(logits, axis=-1)
    a = jnp.einsum("gst,gtc->gsc", p, v) @ params["w_proj"] + params["b_proj"][0]
    x = x + a

    hnorm = _layernorm(x, params["ln2_g"][0], params["ln2_b"][0])
    hmid = _gelu_exact(hnorm @ params["w_fc1"] + params["b_fc1"][0])
    x = x + (hmid @ params["w_fc2"] + params["b_fc2"][0])

    m = jnp.mean(x, axis=1)
    return m @ params["w_out"] + params["b_out"]


def init_params(key, in_features, out_features):
    """Matches init_weights(): Linear weights ~ N(0, 0.01), biases 0, LN g=1 b=0.
    Linear weights are generated in torch (out, in) layout then transposed."""
    C, F, Hm = in_features, out_features, 4 * in_features
    ks = jax.random.split(key, 4)
    normal = lambda k, shape: (0.01 * jax.random.normal(k, shape, jnp.float32))
    return {
        "ln1_g": jnp.ones((1, C), jnp.float32),
        "ln1_b": jnp.zeros((1, C), jnp.float32),
        "w_qkv": normal(ks[0], (3 * C, C)).T,      # qkv_bias=False (timm default)
        "w_proj": normal(ks[1], (C, C)).T,
        "b_proj": jnp.zeros((1, C), jnp.float32),
        "ln2_g": jnp.ones((1, C), jnp.float32),
        "ln2_b": jnp.zeros((1, C), jnp.float32),
        "w_fc1": normal(ks[2], (Hm, C)).T,
        "b_fc1": jnp.zeros((1, Hm), jnp.float32),
        "w_fc2": normal(ks[3], (C, Hm)).T,
        "b_fc2": jnp.zeros((1, C), jnp.float32),
        "w_out": normal(jax.random.fold_in(key, 99), (F, C)).T,
        "b_out": jnp.zeros((1, F), jnp.float32),
    }


if __name__ == "__main__":
    in_features, out_features = 32, 16
    num_images_per_group = 2              # always_apply_mi=True path
    bn, h, w = 16, 8, 8                   # G=8 groups, S=128 tokens/group
                                          # group tile TG=4 -> grid of 2 steps

    key = jax.random.PRNGKey(0)
    kx, kp = jax.random.split(key)
    x = jax.random.normal(kx, (bn, in_features, h, w), jnp.float32)
    params = init_params(kp, in_features, out_features)

    run = jax.jit(partial(transformer_multi_image_pooling,
                          num_images_per_group=num_images_per_group))
    out = jax.block_until_ready(run(x, params))

    ref = reference_forward(x, params, num_images_per_group=num_images_per_group)
    assert out.shape == (bn // num_images_per_group, out_features)
    max_err = float(jnp.max(jnp.abs(out - ref)))
    assert jnp.allclose(out, ref, atol=5e-4, rtol=5e-3), (
        f"mismatch vs pure-JAX reference, max abs err {max_err:.3e}")

    print("KERNEL_OK")
</pallas_src>

<mosaic_0001>
module attributes {stable_mosaic.version = 11 : i64} {
  func.func @pooling_kernel(%arg0: i32, %arg1: memref<1x512x32xf32, #tpu.memory_space<vmem>>, %arg2: memref<1x32xf32, #tpu.memory_space<vmem>>, %arg3: memref<1x32xf32, #tpu.memory_space<vmem>>, %arg4: memref<32x96xbf16, #tpu.memory_space<vmem>>, %arg5: memref<32x32xbf16, #tpu.memory_space<vmem>>, %arg6: memref<1x32xf32, #tpu.memory_space<vmem>>, %arg7: memref<1x32xf32, #tpu.memory_space<vmem>>, %arg8: memref<1x32xf32, #tpu.memory_space<vmem>>, %arg9: memref<32x128xbf16, #tpu.memory_space<vmem>>, %arg10: memref<1x128xf32, #tpu.memory_space<vmem>>, %arg11: memref<128x32xbf16, #tpu.memory_space<vmem>>, %arg12: memref<1x32xf32, #tpu.memory_space<vmem>>, %arg13: memref<4x512xf32, #tpu.memory_space<vmem>>, %arg14: memref<1x4x32xf32, #tpu.memory_space<vmem>>) attributes {dimension_semantics = [#tpu.dimension_semantics<parallel>], iteration_bounds = array<i64: 2>, scalar_prefetch = 0 : i64, scratch_operands = 0 : i64, tpu.core_type = #tpu.core_type<tc>, window_params = [{transform_indices = @transform_0, window_bounds = array<i64: 1, 512, 32>}, {pipeline_mode = #tpu.pipeline_mode<synchronous>, transform_indices = @transform_1, window_bounds = array<i64: 1, 32>}, {pipeline_mode = #tpu.pipeline_mode<synchronous>, transform_indices = @transform_2, window_bounds = array<i64: 1, 32>}, {pipeline_mode = #tpu.pipeline_mode<synchronous>, transform_indices = @transform_3, window_bounds = array<i64: 32, 96>}, {pipeline_mode = #tpu.pipeline_mode<synchronous>, transform_indices = @transform_4, window_bounds = array<i64: 32, 32>}, {pipeline_mode = #tpu.pipeline_mode<synchronous>, transform_indices = @transform_5, window_bounds = array<i64: 1, 32>}, {pipeline_mode = #tpu.pipeline_mode<synchronous>, transform_indices = @transform_6, window_bounds = array<i64: 1, 32>}, {pipeline_mode = #tpu.pipeline_mode<synchronous>, transform_indices = @transform_7, window_bounds = array<i64: 1, 32>}, {pipeline_mode = #tpu.pipeline_mode<synchronous>, transform_indices = @transform_8, window_bounds = array<i64: 32, 128>}, {pipeline_mode = #tpu.pipeline_mode<synchronous>, transform_indices = @transform_9, window_bounds = array<i64: 1, 128>}, {pipeline_mode = #tpu.pipeline_mode<synchronous>, transform_indices = @transform_10, window_bounds = array<i64: 128, 32>}, {pipeline_mode = #tpu.pipeline_mode<synchronous>, transform_indices = @transform_11, window_bounds = array<i64: 1, 32>}, {pipeline_mode = #tpu.pipeline_mode<synchronous>, transform_indices = @transform_12, window_bounds = array<i64: 4, 512>}, {transform_indices = @transform_13, window_bounds = array<i64: 1, 4, 32>}]} {
    %c0 = arith.constant 0 : index
    %c0_0 = arith.constant 0 : index
    %c0_1 = arith.constant 0 : index
    %0 = vector.load %arg1[%c0, %c0_0, %c0_1] : memref<1x512x32xf32, #tpu.memory_space<vmem>>, vector<1x512x32xf32>
    %1 = vector.shape_cast %0 : vector<1x512x32xf32> to vector<512x32xf32>
    %c0_2 = arith.constant 0 : index
    %c0_3 = arith.constant 0 : index
    %2 = vector.load %arg2[%c0_2, %c0_3] : memref<1x32xf32, #tpu.memory_space<vmem>>, vector<1x32xf32>
    %c0_4 = arith.constant 0 : index
    %c0_5 = arith.constant 0 : index
    %3 = vector.load %arg3[%c0_4, %c0_5] : memref<1x32xf32, #tpu.memory_space<vmem>>, vector<1x32xf32>
    %cst = arith.constant dense<0.000000e+00> : vector<512xf32>
    %4 = vector.multi_reduction <add>, %1, %cst [1] : vector<512x32xf32> to vector<512xf32>
    %5 = vector.shape_cast %4 : vector<512xf32> to vector<512x1xf32>
    %cst_6 = arith.constant 3.200000e+01 : f32
    %6 = vector.broadcast %cst_6 : f32 to vector<512x1xf32>
    %7 = arith.divf %5, %6 : vector<512x1xf32>
    %8 = vector.broadcast %7 : vector<512x1xf32> to vector<512x32xf32>
    %9 = arith.subf %1, %8 : vector<512x32xf32>
    %10 = arith.mulf %9, %9 : vector<512x32xf32>
    %cst_7 = arith.constant dense<0.000000e+00> : vector<512xf32>
    %11 = vector.multi_reduction <add>, %10, %cst_7 [1] : vector<512x32xf32> to vector<512xf32>
    %12 = vector.shape_cast %11 : vector<512xf32> to vector<512x1xf32>
    %cst_8 = arith.constant 3.200000e+01 : f32
    %13 = vector.broadcast %cst_8 : f32 to vector<512x1xf32>
    %14 = arith.divf %12, %13 : vector<512x1xf32>
    %15 = vector.broadcast %7 : vector<512x1xf32> to vector<512x32xf32>
    %16 = arith.subf %1, %15 : vector<512x32xf32>
    %cst_9 = arith.constant 9.99999974E-6 : f32
    %17 = vector.broadcast %cst_9 : f32 to vector<512x1xf32>
    %18 = arith.addf %14, %17 : vector<512x1xf32>
    %19 = math.rsqrt %18 : vector<512x1xf32>
    %20 = vector.broadcast %19 : vector<512x1xf32> to vector<512x32xf32>
    %21 = arith.mulf %16, %20 : vector<512x32xf32>
    %22 = vector.broadcast %2 : vector<1x32xf32> to vector<512x32xf32>
    %23 = arith.mulf %21, %22 : vector<512x32xf32>
    %24 = vector.broadcast %3 : vector<1x32xf32> to vector<512x32xf32>
    %25 = arith.addf %23, %24 : vector<512x32xf32>
    %26 = arith.truncf %25 : vector<512x32xf32> to vector<512x32xbf16>
    %c0_10 = arith.constant 0 : index
    %c0_11 = arith.constant 0 : index
    %27 = vector.load %arg4[%c0_10, %c0_11] : memref<32x96xbf16, #tpu.memory_space<vmem>>, vector<32x96xbf16>
    %cst_12 = arith.constant dense<0.000000e+00> : vector<512x96xf32>
    %28 = tpu.matmul %26, %27, %cst_12 {dimension_numbers = #tpu.dot_dimension_numbers<[1], [0], [0], [1], [0, 0, 1, 1], [], []>} : vector<512x32xbf16>, vector<32x96xbf16>, vector<512x96xf32> -> vector<512x96xf32>
    %29 = vector.extract_strided_slice %28 {offsets = [0, 0], sizes = [512, 32], strides = [1, 1]} : vector<512x96xf32> to vector<512x32xf32>
    %30 = vector.shape_cast %29 : vector<512x32xf32> to vector<4x128x32xf32>
    %31 = vector.extract_strided_slice %28 {offsets = [0, 32], sizes = [512, 32], strides = [1, 1]} : vector<512x96xf32> to vector<512x32xf32>
    %32 = vector.shape_cast %31 : vector<512x32xf32> to vector<4x128x32xf32>
    %33 = vector.extract_strided_slice %28 {offsets = [0, 64], sizes = [512, 32], strides = [1, 1]} : vector<512x96xf32> to vector<512x32xf32>
    %34 = vector.shape_cast %33 : vector<512x32xf32> to vector<4x128x32xf32>
    %35 = arith.truncf %30 : vector<4x128x32xf32> to vector<4x128x32xbf16>
    %36 = arith.truncf %32 : vector<4x128x32xf32> to vector<4x128x32xbf16>
    %cst_13 = arith.constant dense<0.000000e+00> : vector<4x128x128xf32>
    %37 = tpu.matmul %35, %36, %cst_13 {dimension_numbers = #tpu.dot_dimension_numbers<[2], [2], [1], [1], [0, 0, 0, 1, 1, 1], [0], [0]>} : vector<4x128x32xbf16>, vector<4x128x32xbf16>, vector<4x128x128xf32> -> vector<4x128x128xf32>
    %cst_14 = arith.constant 0.176776692 : f32
    %38 = vector.broadcast %cst_14 : f32 to vector<4x128x128xf32>
    %39 = arith.mulf %37, %38 : vector<4x128x128xf32>
    %cst_15 = arith.constant dense<0xFF800000> : vector<4x128xf32>
    %40 = vector.multi_reduction <maximumf>, %39, %cst_15 [2] : vector<4x128x128xf32> to vector<4x128xf32>
    %41 = vector.shape_cast %40 : vector<4x128xf32> to vector<4x128x1xf32>
    %42 = vector.broadcast %41 : vector<4x128x1xf32> to vector<4x128x128xf32>
    %43 = arith.subf %39, %42 : vector<4x128x128xf32>
    %44 = math.exp %43 : vector<4x128x128xf32>
    %cst_16 = arith.constant dense<0.000000e+00> : vector<4x128xf32>
    %45 = vector.multi_reduction <add>, %44, %cst_16 [2] : vector<4x128x128xf32> to vector<4x128xf32>
    %46 = vector.shape_cast %45 : vector<4x128xf32> to vector<4x128x1xf32>
    %47 = tpu.reciprocal %46 {approx = true} : vector<4x128x1xf32> -> vector<4x128x1xf32>
    %48 = vector.broadcast %47 : vector<4x128x1xf32> to vector<4x128x128xf32>
    %49 = arith.mulf %44, %48 : vector<4x128x128xf32>
    %50 = arith.truncf %49 : vector<4x128x128xf32> to vector<4x128x128xbf16>
    %51 = arith.truncf %34 : vector<4x128x32xf32> to vector<4x128x32xbf16>
    %cst_17 = arith.constant dense<0.000000e+00> : vector<4x128x32xf32>
    %52 = tpu.matmul %50, %51, %cst_17 {dimension_numbers = #tpu.dot_dimension_numbers<[2], [1], [1], [2], [0, 0, 0, 1, 1, 2], [0], [0]>} : vector<4x128x128xbf16>, vector<4x128x32xbf16>, vector<4x128x32xf32> -> vector<4x128x32xf32>
    %53 = vector.shape_cast %52 : vector<4x128x32xf32> to vector<512x32xf32>
    %54 = arith.truncf %53 : vector<512x32xf32> to vector<512x32xbf16>
    %c0_18 = arith.constant 0 : index
    %c0_19 = arith.constant 0 : index
    %55 = vector.load %arg5[%c0_18, %c0_19] : memref<32x32xbf16, #tpu.memory_space<vmem>>, vector<32x32xbf16>
    %cst_20 = arith.constant dense<0.000000e+00> : vector<512x32xf32>
    %56 = tpu.matmul %54, %55, %cst_20 {dimension_numbers = #tpu.dot_dimension_numbers<[1], [0], [0], [1], [0, 0, 1, 1], [], []>} : vector<512x32xbf16>, vector<32x32xbf16>, vector<512x32xf32> -> vector<512x32xf32>
    %c0_21 = arith.constant 0 : index
    %c0_22 = arith.constant 0 : index
    %57 = vector.load %arg6[%c0_21, %c0_22] : memref<1x32xf32, #tpu.memory_space<vmem>>, vector<1x32xf32>
    %58 = vector.broadcast %57 : vector<1x32xf32> to vector<512x32xf32>
    %59 = arith.addf %56, %58 : vector<512x32xf32>
    %60 = arith.addf %1, %59 : vector<512x32xf32>
    %c0_23 = arith.constant 0 : index
    %c0_24 = arith.constant 0 : index
    %61 = vector.load %arg7[%c0_23, %c0_24] : memref<1x32xf32, #tpu.memory_space<vmem>>, vector<1x32xf32>
    %c0_25 = arith.constant 0 : index
    %c0_26 = arith.constant 0 : index
    %62 = vector.load %arg8[%c0_25, %c0_26] : memref<1x32xf32, #tpu.memory_space<vmem>>, vector<1x32xf32>
    %cst_27 = arith.constant dense<0.000000e+00> : vector<512xf32>
    %63 = vector.multi_reduction <add>, %60, %cst_27 [1] : vector<512x32xf32> to vector<512xf32>
    %64 = vector.shape_cast %63 : vector<512xf32> to vector<512x1xf32>
    %cst_28 = arith.constant 3.200000e+01 : f32
    %65 = vector.broadcast %cst_28 : f32 to vector<512x1xf32>
    %66 = arith.divf %64, %65 : vector<512x1xf32>
    %67 = vector.broadcast %66 : vector<512x1xf32> to vector<512x32xf32>
    %68 = arith.subf %60, %67 : vector<512x32xf32>
    %69 = arith.mulf %68, %68 : vector<512x32xf32>
    %cst_29 = arith.constant dense<0.000000e+00> : vector<512xf32>
    %70 = vector.multi_reduction <add>, %69, %cst_29 [1] : vector<512x32xf32> to vector<512xf32>
    %71 = vector.shape_cast %70 : vector<512xf32> to vector<512x1xf32>
    %cst_30 = arith.constant 3.200000e+01 : f32
    %72 = vector.broadcast %cst_30 : f32 to vector<512x1xf32>
    %73 = arith.divf %71, %72 : vector<512x1xf32>
    %74 = vector.broadcast %66 : vector<512x1xf32> to vector<512x32xf32>
    %75 = arith.subf %60, %74 : vector<512x32xf32>
    %cst_31 = arith.constant 9.99999974E-6 : f32
    %76 = vector.broadcast %cst_31 : f32 to vector<512x1xf32>
    %77 = arith.addf %73, %76 : vector<512x1xf32>
    %78 = math.rsqrt %77 : vector<512x1xf32>
    %79 = vector.broadcast %78 : vector<512x1xf32> to vector<512x32xf32>
    %80 = arith.mulf %75, %79 : vector<512x32xf32>
    %81 = vector.broadcast %61 : vector<1x32xf32> to vector<512x32xf32>
    %82 = arith.mulf %80, %81 : vector<512x32xf32>
    %83 = vector.broadcast %62 : vector<1x32xf32> to vector<512x32xf32>
    %84 = arith.addf %82, %83 : vector<512x32xf32>
    %85 = arith.truncf %84 : vector<512x32xf32> to vector<512x32xbf16>
    %c0_32 = arith.constant 0 : index
    %c0_33 = arith.constant 0 : index
    %86 = vector.load %arg9[%c0_32, %c0_33] : memref<32x128xbf16, #tpu.memory_space<vmem>>, vector<32x128xbf16>
    %cst_34 = arith.constant dense<0.000000e+00> : vector<512x128xf32>
    %87 = tpu.matmul %85, %86, %cst_34 {dimension_numbers = #tpu.dot_dimension_numbers<[1], [0], [0], [1], [0, 0, 1, 1], [], []>} : vector<512x32xbf16>, vector<32x128xbf16>, vector<512x128xf32> -> vector<512x128xf32>
    %c0_35 = arith.constant 0 : index
    %c0_36 = arith.constant 0 : index
    %88 = vector.load %arg10[%c0_35, %c0_36] : memref<1x128xf32, #tpu.memory_space<vmem>>, vector<1x128xf32>
    %89 = vector.broadcast %88 : vector<1x128xf32> to vector<512x128xf32>
    %90 = arith.addf %87, %89 : vector<512x128xf32>
    %cst_37 = arith.constant 5.000000e-01 : f32
    %91 = vector.broadcast %cst_37 : f32 to vector<512x128xf32>
    %92 = arith.mulf %91, %90 : vector<512x128xf32>
    %cst_38 = arith.constant 0.707106769 : f32
    %93 = vector.broadcast %cst_38 : f32 to vector<512x128xf32>
    %94 = arith.mulf %90, %93 : vector<512x128xf32>
    %95 = math.erf %94 : vector<512x128xf32>
    %cst_39 = arith.constant 1.000000e+00 : f32
    %96 = vector.broadcast %cst_39 : f32 to vector<512x128xf32>
    %97 = arith.addf %96, %95 : vector<512x128xf32>
    %98 = arith.mulf %92, %97 : vector<512x128xf32>
    %99 = arith.truncf %98 : vector<512x128xf32> to vector<512x128xbf16>
    %c0_40 = arith.constant 0 : index
    %c0_41 = arith.constant 0 : index
    %100 = vector.load %arg11[%c0_40, %c0_41] : memref<128x32xbf16, #tpu.memory_space<vmem>>, vector<128x32xbf16>
    %cst_42 = arith.constant dense<0.000000e+00> : vector<512x32xf32>
    %101 = tpu.matmul %99, %100, %cst_42 {dimension_numbers = #tpu.dot_dimension_numbers<[1], [0], [0], [1], [0, 0, 1, 1], [], []>} : vector<512x128xbf16>, vector<128x32xbf16>, vector<512x32xf32> -> vector<512x32xf32>
    %c0_43 = arith.constant 0 : index
    %c0_44 = arith.constant 0 : index
    %102 = vector.load %arg12[%c0_43, %c0_44] : memref<1x32xf32, #tpu.memory_space<vmem>>, vector<1x32xf32>
    %103 = vector.broadcast %102 : vector<1x32xf32> to vector<512x32xf32>
    %104 = arith.addf %101, %103 : vector<512x32xf32>
    %105 = arith.addf %60, %104 : vector<512x32xf32>
    %c0_45 = arith.constant 0 : index
    %c0_46 = arith.constant 0 : index
    %106 = vector.load %arg13[%c0_45, %c0_46] : memref<4x512xf32, #tpu.memory_space<vmem>>, vector<4x512xf32>
    %cst_47 = arith.constant dense<0.000000e+00> : vector<4x32xf32>
    %107 = tpu.matmul %106, %105, %cst_47 {dimension_numbers = #tpu.dot_dimension_numbers<[1], [0], [0], [1], [0, 0, 1, 1], [], []>} : vector<4x512xf32>, vector<512x32xf32>, vector<4x32xf32> -> vector<4x32xf32>
    %c0_48 = arith.constant 0 : index
    %c0_49 = arith.constant 0 : index
    %c0_50 = arith.constant 0 : index
    %108 = vector.load %arg14[%c0_48, %c0_49, %c0_50] : memref<1x4x32xf32, #tpu.memory_space<vmem>>, vector<1x4x32xf32>
    %109 = vector.shape_cast %108 : vector<1x4x32xf32> to vector<4x32xf32>
    %110 = vector.shape_cast %107 : vector<4x32xf32> to vector<1x4x32xf32>
    tpu.vector_store %arg14[%c0_48, %c0_49, %c0_50], %110 {strides = array<i32>} : memref<1x4x32xf32, #tpu.memory_space<vmem>>, vector<1x4x32xf32>,
    return
  }
  func.func @transform_0(%arg0: i32) -> (i32, i32, i32) {
    %c0_i32 = arith.constant 0 : i32
    %c0_i32_0 = arith.constant 0 : i32
    %c0_i32_1 = arith.constant 0 : i32
    return %arg0, %c0_i32, %c0_i32_0 : i32, i32, i32
  }
  func.func @transform_1(%arg0: i32) -> (i32, i32) {
    %c0_i32 = arith.constant 0 : i32
    %c0_i32_0 = arith.constant 0 : i32
    %c0_i32_1 = arith.constant 0 : i32
    return %c0_i32, %c0_i32_0 : i32, i32
  }
  func.func @transform_2(%arg0: i32) -> (i32, i32) {
    %c0_i32 = arith.constant 0 : i32
    %c0_i32_0 = arith.constant 0 : i32
    %c0_i32_1 = arith.constant 0 : i32
    return %c0_i32, %c0_i32_0 : i32, i32
  }
  func.func @transform_3(%arg0: i32) -> (i32, i32) {
    %c0_i32 = arith.constant 0 : i32
    %c0_i32_0 = arith.constant 0 : i32
    %c0_i32_1 = arith.constant 0 : i32
    return %c0_i32, %c0_i32_0 : i32, i32
  }
  func.func @transform_4(%arg0: i32) -> (i32, i32) {
    %c0_i32 = arith.constant 0 : i32
    %c0_i32_0 = arith.constant 0 : i32
    %c0_i32_1 = arith.constant 0 : i32
    return %c0_i32, %c0_i32_0 : i32, i32
  }
  func.func @transform_5(%arg0: i32) -> (i32, i32) {
    %c0_i32 = arith.constant 0 : i32
    %c0_i32_0 = arith.constant 0 : i32
    %c0_i32_1 = arith.constant 0 : i32
    return %c0_i32, %c0_i32_0 : i32, i32
  }
  func.func @transform_6(%arg0: i32) -> (i32, i32) {
    %c0_i32 = arith.constant 0 : i32
    %c0_i32_0 = arith.constant 0 : i32
    %c0_i32_1 = arith.constant 0 : i32
    return %c0_i32, %c0_i32_0 : i32, i32
  }
  func.func @transform_7(%arg0: i32) -> (i32, i32) {
    %c0_i32 = arith.constant 0 : i32
    %c0_i32_0 = arith.constant 0 : i32
    %c0_i32_1 = arith.constant 0 : i32
    return %c0_i32, %c0_i32_0 : i32, i32
  }
  func.func @transform_8(%arg0: i32) -> (i32, i32) {
    %c0_i32 = arith.constant 0 : i32
    %c0_i32_0 = arith.constant 0 : i32
    %c0_i32_1 = arith.constant 0 : i32
    return %c0_i32, %c0_i32_0 : i32, i32
  }
  func.func @transform_9(%arg0: i32) -> (i32, i32) {
    %c0_i32 = arith.constant 0 : i32
    %c0_i32_0 = arith.constant 0 : i32
    %c0_i32_1 = arith.constant 0 : i32
    return %c0_i32, %c0_i32_0 : i32, i32
  }
  func.func @transform_10(%arg0: i32) -> (i32, i32) {
    %c0_i32 = arith.constant 0 : i32
    %c0_i32_0 = arith.constant 0 : i32
    %c0_i32_1 = arith.constant 0 : i32
    return %c0_i32, %c0_i32_0 : i32, i32
  }
  func.func @transform_11(%arg0: i32) -> (i32, i32) {
    %c0_i32 = arith.constant 0 : i32
    %c0_i32_0 = arith.constant 0 : i32
    %c0_i32_1 = arith.constant 0 : i32
    return %c0_i32, %c0_i32_0 : i32, i32
  }
  func.func @transform_12(%arg0: i32) -> (i32, i32) {
    %c0_i32 = arith.constant 0 : i32
    %c0_i32_0 = arith.constant 0 : i32
    %c0_i32_1 = arith.constant 0 : i32
    return %c0_i32, %c0_i32_0 : i32, i32
  }
  func.func @transform_13(%arg0: i32) -> (i32, i32, i32) {
    %c0_i32 = arith.constant 0 : i32
    %c0_i32_0 = arith.constant 0 : i32
    %c0_i32_1 = arith.constant 0 : i32
    return %arg0, %c0_i32, %c0_i32_0 : i32, i32, i32
  }
}

</mosaic_0001>

<llo_original>
// kernel: transformer_multi_image_pooling.1
$region0: #{transformer_multi_image_pooling.1}
  #allocation0 [shape = 'u32[]', space=smem, size = 0x4, offset = 0x4, fixed_abs, tag = 'smem constant byte address 0x4 - core index']
  #allocation1 [shape = 'u32[144,128]{1,0:T(1,128)}', space=vmem, size = 0x12000, scoped, tag = 'internal scratch']
  %s0 = inlined_call_operand.hbm [shape: f32[2,512,32], index: 0, kind: input, shape index: {}]
  %s1 = inlined_call_operand.vmem [shape: f32[1,32], index: 1, kind: input, shape index: {}]
  %s2 = inlined_call_operand.vmem [shape: f32[1,32], index: 2, kind: input, shape index: {}]
  %s3 = inlined_call_operand.vmem [shape: bf16[32,96], index: 3, kind: input, shape index: {}]
  %s4 = inlined_call_operand.vmem [shape: bf16[32,32], index: 4, kind: input, shape index: {}]
  %s5 = inlined_call_operand.vmem [shape: f32[1,32], index: 5, kind: input, shape index: {}]
  %s6 = inlined_call_operand.vmem [shape: f32[1,32], index: 6, kind: input, shape index: {}]
  %s7 = inlined_call_operand.vmem [shape: f32[1,32], index: 7, kind: input, shape index: {}]
  %s8 = inlined_call_operand.vmem [shape: bf16[32,128], index: 8, kind: input, shape index: {}]
  %s9 = inlined_call_operand.vmem [shape: f32[1,128], index: 9, kind: input, shape index: {}]
  %s10 = inlined_call_operand.vmem [shape: bf16[128,32], index: 10, kind: input, shape index: {}]
  %s11 = inlined_call_operand.vmem [shape: f32[1,32], index: 11, kind: input, shape index: {}]
  %s12 = inlined_call_operand.vmem [shape: f32[4,512], index: 12, kind: input, shape index: {}]
  %s13 = inlined_call_operand.vmem [shape: f32[2,4,32], index: 13, kind: output, shape index: {}]
  %s14 = sld [smem:[#allocation0]]
  $region89: #{transformer_multi_image_pooling.1} parent=0
    _
  %s16 = ssub.s32 1, %s14
  %s17 = scalar_select 0, %s16, %s14
  $region1: #{transformer_multi_image_pooling.1} parent=0
    #allocation2 [shape = 'u8[524288]{0}', space=vmem, size = 0x80000, scoped, tag = 'input window, operand 0']
    #allocation3 [shape = 's32[2]{0}', space=sflag, size = 0x8, scoped, tag = 'scoped memory for transformer_multi_image_pooling.1']
    %18 = vsyncpa [#allocation3], 0
    %s19 = scalar_lea.sflag [#allocation3], 1
    %20 = vsyncpa %s19, 0
    loop: start=0, step=1, limit=4
    $region2: #{transformer_multi_image_pooling.1} parent=1 // loop_pre_header
      _
    $region3: #{transformer_multi_image_pooling.1} parent=1 // loop_header
      %s22 = sphi 0, %s26
      %p23 = scmp.ge.s32.totalorder %s22, 4
      %s32 = sphi 0, %s34
      %s35 = sphi 0, %s32
      %s36 = sphi 0, %s35
      %s52 = sphi 0, %s36
      %s56 = sphi 0, %s56
      %s58 = sphi 0, %s56
      %s59 = sphi 0, %s58
      %s73 = sphi 0, %s59
      %s77 = sphi 0, %s77
      %s79 = sphi 0, %s77
      %s80 = sphi 0, %s79
      %s94 = sphi 0, %s80
      %s98 = sphi 0, %s98
      %s100 = sphi 0, %s98
      %s101 = sphi 0, %s100
      %s115 = sphi 0, %s101
      %s119 = sphi 0, %s119
      %s121 = sphi 0, %s119
      %s122 = sphi 0, %s121
      %s136 = sphi 0, %s122
      %s140 = sphi 0, %s140
      %s142 = sphi 0, %s140
      %s143 = sphi 0, %s142
      %s157 = sphi 0, %s143
      %s161 = sphi 0, %s161
      %s163 = sphi 0, %s161
      %s164 = sphi 0, %s163
      %s178 = sphi 0, %s164
      %s182 = sphi 0, %s182
      %s184 = sphi 0, %s182
      %s185 = sphi 0, %s184
      %s199 = sphi 0, %s185
      %s203 = sphi 0, %s203
      %s205 = sphi 0, %s203
      %s206 = sphi 0, %s205
      %s220 = sphi 0, %s206
      %s224 = sphi 0, %s224
      %s226 = sphi 0, %s224
      %s227 = sphi 0, %s226
      %s241 = sphi 0, %s227
      %s245 = sphi 0, %s245
      %s247 = sphi 0, %s245
      %s248 = sphi 0, %s247
      %s262 = sphi 0, %s248
      %s266 = sphi 0, %s266
      %s268 = sphi 0, %s266
      %s269 = sphi 0, %s268
      %s283 = sphi 0, %s269
      %s287 = sphi 0, %s287
      %s289 = sphi 0, %s287
      %s290 = sphi 0, %s289
      %s304 = sphi 0, %s290
      %s310 = sphi 0, %s312
      %s313 = sphi 0, %s310
      %s314 = sphi 0, %s313
      %s330 = sphi 0, %s314
    $region4: #{transformer_multi_image_pooling.1} parent=1 // loop_header_branch
      %25 = sbr.rel (%p23) target = $region8
    $region5: #{transformer_multi_image_pooling.1} parent=1 // loop_body
      %s27 = ssub.s32 %s22, 1
      %s28 = ssub.s32 %s22, 2
      %s29 = sadd.s32 %s22, 1
      %s30 = ssub.s32 %s22, %s29
      %p31 = scmp.eq.s32.totalorder %s30, 0
      %s33 = sadd.s32 %s32, 1
      %s34 = scalar_select %p31, %s32, %s33
      %p37 = pneg %p31
      %p38 = scmp.eq.s32.totalorder %s22, 1
      %p39 = por %p37, %p38
      %p40 = scmp.ne.s32.totalorder %s32, %s35
      %p41 = scmp.eq.s32.totalorder %s22, 0
      %p42 = por %p40, %p41
      %p43 = scmp.ne.s32.totalorder %s32, %s35
      %p44 = scmp.eq.s32.totalorder %s27, 1
      %p45 = por %p43, %p44
      %p46 = scmp.ne.s32.totalorder %s35, %s36
      %p47 = scmp.eq.s32.totalorder %s27, 0
      %p48 = por %p46, %p47
      %p49 = scmp.ne.s32.totalorder %s35, %s36
      %p50 = scmp.eq.s32.totalorder %s28, 1
      %p51 = por %p49, %p50
      %p53 = scmp.ne.s32.totalorder %s36, %s52
      %p54 = scmp.eq.s32.totalorder %s28, 0
      %p55 = por %p53, %p54
      %s57 = sadd.s32 %s56, 1
      %p60 = scmp.eq.s32.totalorder %s22, 1
      %p61 = scmp.ne.s32.totalorder %s56, %s58
      %p62 = scmp.eq.s32.totalorder %s22, 0
      %p63 = por %p61, %p62
      %p64 = scmp.ne.s32.totalorder %s56, %s58
      %p65 = scmp.eq.s32.totalorder %s27, 1
      %p66 = por %p64, %p65
      %p67 = scmp.ne.s32.totalorder %s58, %s59
      %p68 = scmp.eq.s32.totalorder %s27, 0
      %p69 = por %p67, %p68
      %p70 = scmp.ne.s32.totalorder %s58, %s59
      %p71 = scmp.eq.s32.totalorder %s28, 1
      %p72 = por %p70, %p71
      %p74 = scmp.ne.s32.totalorder %s59, %s73
      %p75 = scmp.eq.s32.totalorder %s28, 0
      %p76 = por %p74, %p75
      %s78 = sadd.s32 %s77, 1
      %p81 = scmp.eq.s32.totalorder %s22, 1
      %p82 = scmp.ne.s32.totalorder %s77, %s79
      %p83 = scmp.eq.s32.totalorder %s22, 0
      %p84 = por %p82, %p83
      %p85 = scmp.ne.s32.totalorder %s77, %s79
      %p86 = scmp.eq.s32.totalorder %s27, 1
      %p87 = por %p85, %p86
      %p88 = scmp.ne.s32.totalorder %s79, %s80
      %p89 = scmp.eq.s32.totalorder %s27, 0
      %p90 = por %p88, %p89
      %p91 = scmp.ne.s32.totalorder %s79, %s80
      %p92 = scmp.eq.s32.totalorder %s28, 1
      %p93 = por %p91, %p92
      %p95 = scmp.ne.s32.totalorder %s80, %s94
      %p96 = scmp.eq.s32.totalorder %s28, 0
      %p97 = por %p95, %p96
      %s99 = sadd.s32 %s98, 1
      %p102 = scmp.eq.s32.totalorder %s22, 1
      %p103 = scmp.ne.s32.totalorder %s98, %s100
      %p104 = scmp.eq.s32.totalorder %s22, 0
      %p105 = por %p103, %p104
      %p106 = scmp.ne.s32.totalorder %s98, %s100
      %p107 = scmp.eq.s32.totalorder %s27, 1
      %p108 = por %p106, %p107
      %p109 = scmp.ne.s32.totalorder %s100, %s101
      %p110 = scmp.eq.s32.totalorder %s27, 0
      %p111 = por %p109, %p110
      %p112 = scmp.ne.s32.totalorder %s100, %s101
      %p113 = scmp.eq.s32.totalorder %s28, 1
      %p114 = por %p112, %p113
      %p116 = scmp.ne.s32.totalorder %s101, %s115
      %p117 = scmp.eq.s32.totalorder %s28, 0
      %p118 = por %p116, %p117
      %s120 = sadd.s32 %s119, 1
      %p123 = scmp.eq.s32.totalorder %s22, 1
      %p124 = scmp.ne.s32.totalorder %s119, %s121
      %p125 = scmp.eq.s32.totalorder %s22, 0
      %p126 = por %p124, %p125
      %p127 = scmp.ne.s32.totalorder %s119, %s121
      %p128 = scmp.eq.s32.totalorder %s27, 1
      %p129 = por %p127, %p128
      %p130 = scmp.ne.s32.totalorder %s121, %s122
      %p131 = scmp.eq.s32.totalorder %s27, 0
      %p132 = por %p130, %p131
      %p133 = scmp.ne.s32.totalorder %s121, %s122
      %p134 = scmp.eq.s32.totalorder %s28, 1
      %p135 = por %p133, %p134
      %p137 = scmp.ne.s32.totalorder %s122, %s136
      %p138 = scmp.eq.s32.totalorder %s28, 0
      %p139 = por %p137, %p138
      %s141 = sadd.s32 %s140, 1
      %p144 = scmp.eq.s32.totalorder %s22, 1
      %p145 = scmp.ne.s32.totalorder %s140, %s142
      %p146 = scmp.eq.s32.totalorder %s22, 0
      %p147 = por %p145, %p146
      %p148 = scmp.ne.s32.totalorder %s140, %s142
      %p149 = scmp.eq.s32.totalorder %s27, 1
      %p150 = por %p148, %p149
      %p151 = scmp.ne.s32.totalorder %s142, %s143
      %p152 = scmp.eq.s32.totalorder %s27, 0
      %p153 = por %p151, %p152
      %p154 = scmp.ne.s32.totalorder %s142, %s143
      %p155 = scmp.eq.s32.totalorder %s28, 1
      %p156 = por %p154, %p155
      %p158 = scmp.ne.s32.totalorder %s143, %s157
      %p159 = scmp.eq.s32.totalorder %s28, 0
      %p160 = por %p158, %p159
      %s162 = sadd.s32 %s161, 1
      %p165 = scmp.eq.s32.totalorder %s22, 1
      %p166 = scmp.ne.s32.totalorder %s161, %s163
      %p167 = scmp.eq.s32.totalorder %s22, 0
      %p168 = por %p166, %p167
      %p169 = scmp.ne.s32.totalorder %s161, %s163
      %p170 = scmp.eq.s32.totalorder %s27, 1
      %p171 = por %p169, %p170
      %p172 = scmp.ne.s32.totalorder %s163, %s164
      %p173 = scmp.eq.s32.totalorder %s27, 0
      %p174 = por %p172, %p173
      %p175 = scmp.ne.s32.totalorder %s163, %s164
      %p176 = scmp.eq.s32.totalorder %s28, 1
      %p177 = por %p175, %p176
      %p179 = scmp.ne.s32.totalorder %s164, %s178
      %p180 = scmp.eq.s32.totalorder %s28, 0
      %p181 = por %p179, %p180
      %s183 = sadd.s32 %s182, 1
      %p186 = scmp.eq.s32.totalorder %s22, 1
      %p187 = scmp.ne.s32.totalorder %s182, %s184
      %p188 = scmp.eq.s32.totalorder %s22, 0
      %p189 = por %p187, %p188
      %p190 = scmp.ne.s32.totalorder %s182, %s184
      %p191 = scmp.eq.s32.totalorder %s27, 1
      %p192 = por %p190, %p191
      %p193 = scmp.ne.s32.totalorder %s184, %s185
      %p194 = scmp.eq.s32.totalorder %s27, 0
      %p195 = por %p193, %p194
      %p196 = scmp.ne.s32.totalorder %s184, %s185
      %p197 = scmp.eq.s32.totalorder %s28, 1
      %p198 = por %p196, %p197
      %p200 = scmp.ne.s32.totalorder %s185, %s199
      %p201 = scmp.eq.s32.totalorder %s28, 0
      %p202 = por %p200, %p201
      %s204 = sadd.s32 %s203, 1
      %p207 = scmp.eq.s32.totalorder %s22, 1
      %p208 = scmp.ne.s32.totalorder %s203, %s205
      %p209 = scmp.eq.s32.totalorder %s22, 0
      %p210 = por %p208, %p209
      %p211 = scmp.ne.s32.totalorder %s203, %s205
      %p212 = scmp.eq.s32.totalorder %s27, 1
      %p213 = por %p211, %p212
      %p214 = scmp.ne.s32.totalorder %s205, %s206
      %p215 = scmp.eq.s32.totalorder %s27, 0
      %p216 = por %p214, %p215
      %p217 = scmp.ne.s32.totalorder %s205, %s206
      %p218 = scmp.eq.s32.totalorder %s28, 1
      %p219 = por %p217, %p218
      %p221 = scmp.ne.s32.totalorder %s206, %s220
      %p222 = scmp.eq.s32.totalorder %s28, 0
      %p223 = por %p221, %p222
      %s225 = sadd.s32 %s224, 1
      %p228 = scmp.eq.s32.totalorder %s22, 1
      %p229 = scmp.ne.s32.totalorder %s224, %s226
      %p230 = scmp.eq.s32.totalorder %s22, 0
      %p231 = por %p229, %p230
      %p232 = scmp.ne.s32.totalorder %s224, %s226
      %p233 = scmp.eq.s32.totalorder %s27, 1
      %p234 = por %p232, %p233
      %p235 = scmp.ne.s32.totalorder %s226, %s227
      %p236 = scmp.eq.s32.totalorder %s27, 0
      %p237 = por %p235, %p236
      %p238 = scmp.ne.s32.totalorder %s226, %s227
      %p239 = scmp.eq.s32.totalorder %s28, 1
      %p240 = por %p238, %p239
      %p242 = scmp.ne.s32.totalorder %s227, %s241
      %p243 = scmp.eq.s32.totalorder %s28, 0
      %p244 = por %p242, %p243
      %s246 = sadd.s32 %s245, 1
      %p249 = scmp.eq.s32.totalorder %s22, 1
      %p250 = scmp.ne.s32.totalorder %s245, %s247
      %p251 = scmp.eq.s32.totalorder %s22, 0
      %p252 = por %p250, %p251
      %p253 = scmp.ne.s32.totalorder %s245, %s247
      %p254 = scmp.eq.s32.totalorder %s27, 1
      %p255 = por %p253, %p254
      %p256 = scmp.ne.s32.totalorder %s247, %s248
      %p257 = scmp.eq.s32.totalorder %s27, 0
      %p258 = por %p256, %p257
      %p259 = scmp.ne.s32.totalorder %s247, %s248
      %p260 = scmp.eq.s32.totalorder %s28, 1
      %p261 = por %p259, %p260
      %p263 = scmp.ne.s32.totalorder %s248, %s262
      %p264 = scmp.eq.s32.totalorder %s28, 0
      %p265 = por %p263, %p264
      %s267 = sadd.s32 %s266, 1
      %p270 = scmp.eq.s32.totalorder %s22, 1
      %p271 = scmp.ne.s32.totalorder %s266, %s268
      %p272 = scmp.eq.s32.totalorder %s22, 0
      %p273 = por %p271, %p272
      %p274 = scmp.ne.s32.totalorder %s266, %s268
      %p275 = scmp.eq.s32.totalorder %s27, 1
      %p276 = por %p274, %p275
      %p277 = scmp.ne.s32.totalorder %s268, %s269
      %p278 = scmp.eq.s32.totalorder %s27, 0
      %p279 = por %p277, %p278
      %p280 = scmp.ne.s32.totalorder %s268, %s269
      %p281 = scmp.eq.s32.totalorder %s28, 1
      %p282 = por %p280, %p281
      %p284 = scmp.ne.s32.totalorder %s269, %s283
      %p285 = scmp.eq.s32.totalorder %s28, 0
      %p286 = por %p284, %p285
      %s288 = sadd.s32 %s287, 1
      %p291 = scmp.eq.s32.totalorder %s22, 1
      %p292 = scmp.ne.s32.totalorder %s287, %s289
      %p293 = scmp.eq.s32.totalorder %s22, 0
      %p294 = por %p292, %p293
      %p295 = scmp.ne.s32.totalorder %s287, %s289
      %p296 = scmp.eq.s32.totalorder %s27, 1
      %p297 = por %p295, %p296
      %p298 = scmp.ne.s32.totalorder %s289, %s290
      %p299 = scmp.eq.s32.totalorder %s27, 0
      %p300 = por %p298, %p299
      %p301 = scmp.ne.s32.totalorder %s289, %s290
      %p302 = scmp.eq.s32.totalorder %s28, 1
      %p303 = por %p301, %p302
      %p305 = scmp.ne.s32.totalorder %s290, %s304
      %p306 = scmp.eq.s32.totalorder %s28, 0
      %p307 = por %p305, %p306
      %s308 = ssub.s32 %s22, %s29
      %p309 = scmp.eq.s32.totalorder %s308, 0
      %s311 = sadd.s32 %s310, 1
      %s312 = scalar_select %p309, %s310, %s311
      %p315 = pneg %p309
      %p316 = scmp.eq.s32.totalorder %s22, 1
      %p317 = por %p315, %p316
      %p318 = scmp.ne.s32.totalorder %s310, %s313
      %p319 = scmp.eq.s32.totalorder %s22, 0
      %p320 = por %p318, %p319
      %p321 = scmp.ne.s32.totalorder %s310, %s313
      %p322 = scmp.eq.s32.totalorder %s27, 1
      %p323 = por %p321, %p322
      %p324 = scmp.ne.s32.totalorder %s313, %s314
      %p325 = scmp.eq.s32.totalorder %s27, 0
      %p326 = por %p324, %p325
      %p327 = scmp.ne.s32.totalorder %s313, %s314
      %p328 = scmp.eq.s32.totalorder %s28, 1
      %p329 = por %p327, %p328
      %p331 = scmp.ne.s32.totalorder %s314, %s330
      %p332 = scmp.eq.s32.totalorder %s28, 0
      %p333 = por %p331, %p332
      %p334 = scmp.le.s32.totalorder 1, %s22
      %p335 = scmp.lt.s32.totalorder %s22, 3
      %p336 = pnand %p334, %p335
      %p337 = pneg %p336
      // Predicated region
      $region9: #{transformer_multi_image_pooling.1} parent=5 // pred_check
        _
      $region10: #{transformer_multi_image_pooling.1} parent=5 // pred_check_branch
        %339 = sbr.rel (%p336) target = $region12
      $region11: #{transformer_multi_image_pooling.1} parent=5 // pred_region
        %s340 = ssub.s32 %s22, 1
        // Predicated region
        $region13: #{transformer_multi_image_pooling.1} parent=11 // pred_check
          %p341 = pneg %p69
        $region14: #{transformer_multi_image_pooling.1} parent=11 // pred_check_branch
          %343 = sbr.rel (%p341) target = $region16
        $region15: #{transformer_multi_image_pooling.1} parent=11 // pred_region
          _
        $region16: #{transformer_multi_image_pooling.1} parent=11 // pred_fallthru
          _
        // Predicated region
        $region17: #{transformer_multi_image_pooling.1} parent=11 // pred_check
          %p344 = pneg %p90
        $region18: #{transformer_multi_image_pooling.1} parent=11 // pred_check_branch
          %346 = sbr.rel (%p344) target = $region20
        $region19: #{transformer_multi_image_pooling.1} parent=11 // pred_region
          _
        $region20: #{transformer_multi_image_pooling.1} parent=11 // pred_fallthru
          _
        // Predicated region
        $region21: #{transformer_multi_image_pooling.1} parent=11 // pred_check
          %p347 = pneg %p111
        $region22: #{transformer_multi_image_pooling.1} parent=11 // pred_check_branch
          %349 = sbr.rel (%p347) target = $region24
        $region23: #{transformer_multi_image_pooling.1} parent=11 // pred_region
          _
        $region24: #{transformer_multi_image_pooling.1} parent=11 // pred_fallthru
          _
        // Predicated region
        $region25: #{transformer_multi_image_pooling.1} parent=11 // pred_check
          %p350 = pneg %p132
        $region26: #{transformer_multi_image_pooling.1} parent=11 // pred_check_branch
          %352 = sbr.rel (%p350) target = $region28
        $region27: #{transformer_multi_image_pooling.1} parent=11 // pred_region
          _
        $region28: #{transformer_multi_image_pooling.1} parent=11 // pred_fallthru
          _
        // Predicated region
        $region29: #{transformer_multi_image_pooling.1} parent=11 // pred_check
          %p353 = pneg %p153
        $region30: #{transformer_multi_image_pooling.1} parent=11 // pred_check_branch
          %355 = sbr.rel (%p353) target = $region32
        $region31: #{transformer_multi_image_pooling.1} parent=11 // pred_region
          _
        $region32: #{transformer_multi_image_pooling.1} parent=11 // pred_fallthru
          _
        // Predicated region
        $region33: #{transformer_multi_image_pooling.1} parent=11 // pred_check
          %p356 = pneg %p174
        $region34: #{transformer_multi_image_pooling.1} parent=11 // pred_check_branch
          %358 = sbr.rel (%p356) target = $region36
        $region35: #{transformer_multi_image_pooling.1} parent=11 // pred_region
          _
        $region36: #{transformer_multi_image_pooling.1} parent=11 // pred_fallthru
          _
        // Predicated region
        $region37: #{transformer_multi_image_pooling.1} parent=11 // pred_check
          %p359 = pneg %p195
        $region38: #{transformer_multi_image_pooling.1} parent=11 // pred_check_branch
          %361 = sbr.rel (%p359) target = $region40
        $region39: #{transformer_multi_image_pooling.1} parent=11 // pred_region
          _
        $region40: #{transformer_multi_image_pooling.1} parent=11 // pred_fallthru
          _
        // Predicated region
        $region41: #{transformer_multi_image_pooling.1} parent=11 // pred_check
          %p362 = pneg %p216
        $region42: #{transformer_multi_image_pooling.1} parent=11 // pred_check_branch
          %364 = sbr.rel (%p362) target = $region44
        $region43: #{transformer_multi_image_pooling.1} parent=11 // pred_region
          _
        $region44: #{transformer_multi_image_pooling.1} parent=11 // pred_fallthru
          _
        // Predicated region
        $region45: #{transformer_multi_image_pooling.1} parent=11 // pred_check
          %p365 = pneg %p237
        $region46: #{transformer_multi_image_pooling.1} parent=11 // pred_check_branch
          %367 = sbr.rel (%p365) target = $region48
        $region47: #{transformer_multi_image_pooling.1} parent=11 // pred_region
          _
        $region48: #{transformer_multi_image_pooling.1} parent=11 // pred_fallthru
          _
        // Predicated region
        $region49: #{transformer_multi_image_pooling.1} parent=11 // pred_check
          %p368 = pneg %p258
        $region50: #{transformer_multi_image_pooling.1} parent=11 // pred_check_branch
          %370 = sbr.rel (%p368) target = $region52
        $region51: #{transformer_multi_image_pooling.1} parent=11 // pred_region
          _
        $region52: #{transformer_multi_image_pooling.1} parent=11 // pred_fallthru
          _
        // Predicated region
        $region53: #{transformer_multi_image_pooling.1} parent=11 // pred_check
          %p371 = pneg %p279
        $region54: #{transformer_multi_image_pooling.1} parent=11 // pred_check_branch
          %373 = sbr.rel (%p371) target = $region56
        $region55: #{transformer_multi_image_pooling.1} parent=11 // pred_region
          _
        $region56: #{transformer_multi_image_pooling.1} parent=11 // pred_fallthru
          _
        // Predicated region
        $region57: #{transformer_multi_image_pooling.1} parent=11 // pred_check
          %p374 = pneg %p300
        $region58: #{transformer_multi_image_pooling.1} parent=11 // pred_check_branch
          %376 = sbr.rel (%p374) target = $region60
        $region59: #{transformer_multi_image_pooling.1} parent=11 // pred_region
          _
        $region60: #{transformer_multi_image_pooling.1} parent=11 // pred_fallthru
          _
      $region12: #{transformer_multi_image_pooling.1} parent=5 // pred_fallthru
        _
      %p377 = scmp.lt.s32.totalorder %s22, 2
      // Predicated region
      $region61: #{transformer_multi_image_pooling.1} parent=5 // pred_check
        %p378 = pneg %p377
      $region62: #{transformer_multi_image_pooling.1} parent=5 // pred_check_branch
        %380 = sbr.rel (%p378) target = $region64
      $region63: #{transformer_multi_image_pooling.1} parent=5 // pred_region
        // Predicated region
        $region65: #{transformer_multi_image_pooling.1} parent=63 // pred_check
          %p381 = pneg %p42
        $region66: #{transformer_multi_image_pooling.1} parent=63 // pred_check_branch
          %383 = sbr.rel (%p381) target = $region68
        $region67: #{transformer_multi_image_pooling.1} parent=63 // pred_region
          %s384 = sand.u32 %s32, 1
          %s385 = scalar_lea.sflag [#allocation3], %s384
          %s386 = sand.u32 %s32, 1
          %s387 = smul.addr %s386, 512
          %s388 = scalar_lea.vmem [#allocation2], %s387
          %s390 = ssub.s32 8192, 8192
          %391 = vsyncadd %s385, %s390
          %s392 = smul.addr %s22, 64
          %s393 = smul.addr %s392, 128
          %s394 = scalar_lea.hbm %s0, %s393
          %s395 = sshll.u32 %s388, 4
          %s396 = int_to_ptr.vmem [resolvable:$true] %s395
          %401 = dma.hbm_to_vmem [thread:$0]  %s394, 8192, %s396, %s385, 128, 128, 8
        $region68: #{transformer_multi_image_pooling.1} parent=63 // pred_fallthru
          _
      $region64: #{transformer_multi_image_pooling.1} parent=5 // pred_fallthru
        _
      %p402 = scmp.le.s32.totalorder 1, %s22
      %p403 = scmp.lt.s32.totalorder %s22, 3
      %p404 = pnand %p402, %p403
      %p405 = pneg %p404
      // Predicated region
      $region69: #{transformer_multi_image_pooling.1} parent=5 // pred_check
        _
      $region70: #{transformer_multi_image_pooling.1} parent=5 // pred_check_branch
        %407 = sbr.rel (%p404) target = $region72
      $region71: #{transformer_multi_image_pooling.1} parent=5 // pred_region
        %s408 = ssub.s32 %s22, 1
        %s409 = sand.u32 %s35, 1
        %s410 = scalar_lea.sflag [#allocation3], %s409
        %s411 = sand.u32 %s35, 1
        %s412 = smul.addr %s411, 512
        %s413 = scalar_lea.vmem [#allocation2], %s412
        // Predicated region
        $region73: #{transformer_multi_image_pooling.1} parent=71 // pred_check
          %p414 = pneg %p48
        $region74: #{transformer_multi_image_pooling.1} parent=71 // pred_check_branch
          %416 = sbr.rel (%p414) target = $region76
        $region75: #{transformer_multi_image_pooling.1} parent=71 // pred_region
          %417 = dma.done %s410, 8192
        $region76: #{transformer_multi_image_pooling.1} parent=71 // pred_fallthru
          _
        %s418 = sand.u32 %s35, 1
        %s419 = scalar_lea.sflag [#allocation3], %s418
        %s420 = sand.u32 %s35, 1
        %s421 = smul.addr %s420, 512
        %s422 = scalar_lea.vmem [#allocation2], %s421
        %p423 = pneg %p48
        %p424 = pneg %p45
        %p425 = pneg %p69
        %p426 = pneg %p66
        %p427 = pneg %p90
        %p428 = pneg %p87
        %p429 = pneg %p111
        %p430 = pneg %p108
        %p431 = pneg %p132
        %p432 = pneg %p129
        %p433 = pneg %p153
        %p434 = pneg %p150
        %p435 = pneg %p174
        %p436 = pneg %p171
        %p437 = pneg %p195
        %p438 = pneg %p192
        %p439 = pneg %p216
        %p440 = pneg %p213
        %p441 = pneg %p237
        %p442 = pneg %p234
        %p443 = pneg %p258
        %p444 = pneg %p255
        %p445 = pneg %p279
        %p446 = pneg %p276
        %p447 = pneg %p300
        %p448 = pneg %p297
        %p449 = pneg %p326
        %p450 = pneg %p323
        %p451 = scmp.lt.s32.totalorder %s27, 1
        %s452 = scalar_select %p451, %s27, 1
        %s453 = smul.addr %s452, 4
        %s454 = scalar_lea.vmem %s13, %s453
        %p455 = scmp.lt.s32.totalorder %s27, 1
        %s456 = scalar_select %p455, %s27, 1
        %s457 = smul.addr %s456, 4
        %s458 = scalar_lea.vmem %s13, %s457
        %v460 = vld [vmem:[%s413] sm:$0xff]
        %v461 = vld [vmem:[%s413 + $0x8] sm:$0xff]
        %v462 = vld [vmem:[%s413 + $0x10] sm:$0xff]
        %v463 = vld [vmem:[%s413 + $0x18] sm:$0xff]
        %v464 = vld [vmem:[%s413 + $0x20] sm:$0xff]
        %v465 = vld [vmem:[%s413 + $0x28] sm:$0xff]
        %v466 = vld [vmem:[%s413 + $0x30] sm:$0xff]
        %v467 = vld [vmem:[%s413 + $0x38] sm:$0xff]
        %v468 = vld [vmem:[%s413 + $0x40] sm:$0xff]
        %v469 = vld [vmem:[%s413 + $0x48] sm:$0xff]
        %v470 = vld [vmem:[%s413 + $0x50] sm:$0xff]
        %v471 = vld [vmem:[%s413 + $0x58] sm:$0xff]
        %v472 = vld [vmem:[%s413 + $0x60] sm:$0xff]
        %v473 = vld [vmem:[%s413 + $0x68] sm:$0xff]
        %v474 = vld [vmem:[%s413 + $0x70] sm:$0xff]
        %v475 = vld [vmem:[%s413 + $0x78] sm:$0xff]
        %v476 = vld [vmem:[%s413 + $0x80] sm:$0xff]
        %v477 = vld [vmem:[%s413 + $0x88] sm:$0xff]
        %v478 = vld [vmem:[%s413 + $0x90] sm:$0xff]
        %v479 = vld [vmem:[%s413 + $0x98] sm:$0xff]
        %v480 = vld [vmem:[%s413 + $0xa0] sm:$0xff]
        %v481 = vld [vmem:[%s413 + $0xa8] sm:$0xff]
        %v482 = vld [vmem:[%s413 + $0xb0] sm:$0xff]
        %v483 = vld [vmem:[%s413 + $0xb8] sm:$0xff]
        %v484 = vld [vmem:[%s413 + $0xc0] sm:$0xff]
        %v485 = vld [vmem:[%s413 + $0xc8] sm:$0xff]
        %v486 = vld [vmem:[%s413 + $0xd0] sm:$0xff]
        %v487 = vld [vmem:[%s413 + $0xd8] sm:$0xff]
        %v488 = vld [vmem:[%s413 + $0xe0] sm:$0xff]
        %v489 = vld [vmem:[%s413 + $0xe8] sm:$0xff]
        %v490 = vld [vmem:[%s413 + $0xf0] sm:$0xff]
        %v491 = vld [vmem:[%s413 + $0xf8] sm:$0xff]
        %v492 = vld [vmem:[%s413 + $0x100] sm:$0xff]
        %v493 = vld [vmem:[%s413 + $0x108] sm:$0xff]
        %v494 = vld [vmem:[%s413 + $0x110] sm:$0xff]
        %v495 = vld [vmem:[%s413 + $0x118] sm:$0xff]
        %v496 = vld [vmem:[%s413 + $0x120] sm:$0xff]
        %v497 = vld [vmem:[%s413 + $0x128] sm:$0xff]
        %v498 = vld [vmem:[%s413 + $0x130] sm:$0xff]
        %v499 = vld [vmem:[%s413 + $0x138] sm:$0xff]
        %v500 = vld [vmem:[%s413 + $0x140] sm:$0xff]
        %v501 = vld [vmem:[%s413 + $0x148] sm:$0xff]
        %v502 = vld [vmem:[%s413 + $0x150] sm:$0xff]
        %v503 = vld [vmem:[%s413 + $0x158] sm:$0xff]
        %v504 = vld [vmem:[%s413 + $0x160] sm:$0xff]
        %v505 = vld [vmem:[%s413 + $0x168] sm:$0xff]
        %v506 = vld [vmem:[%s413 + $0x170] sm:$0xff]
        %v507 = vld [vmem:[%s413 + $0x178] sm:$0xff]
        %v508 = vld [vmem:[%s413 + $0x180] sm:$0xff]
        %v509 = vld [vmem:[%s413 + $0x188] sm:$0xff]
        %v510 = vld [vmem:[%s413 + $0x190] sm:$0xff]
        %v511 = vld [vmem:[%s413 + $0x198] sm:$0xff]
        %v512 = vld [vmem:[%s413 + $0x1a0] sm:$0xff]
        %v513 = vld [vmem:[%s413 + $0x1a8] sm:$0xff]
        %v514 = vld [vmem:[%s413 + $0x1b0] sm:$0xff]
        %v515 = vld [vmem:[%s413 + $0x1b8] sm:$0xff]
        %v516 = vld [vmem:[%s413 + $0x1c0] sm:$0xff]
        %v517 = vld [vmem:[%s413 + $0x1c8] sm:$0xff]
        %v518 = vld [vmem:[%s413 + $0x1d0] sm:$0xff]
        %v519 = vld [vmem:[%s413 + $0x1d8] sm:$0xff]
        %v520 = vld [vmem:[%s413 + $0x1e0] sm:$0xff]
        %v521 = vld [vmem:[%s413 + $0x1e8] sm:$0xff]
        %v522 = vld [vmem:[%s413 + $0x1f0] sm:$0xff]
        %v523 = vld [vmem:[%s413 + $0x1f8] sm:$0xff]
        %v524 = vld [vmem:[%s1] sm:$0x1]
        %v525 = vld [vmem:[%s2] sm:$0x1]
        %vm526 = vcmask 261120
        %v527 = vsel %vm526, %v460, 0.0
        %528 = vadd.xlane.f32.xlu0 %v527
        %v529 = vpop.xlane.xlu0 %528
        %v530 = vsel %vm526, %v461, 0.0
        %531 = vadd.xlane.f32.xlu0 %v530
        %v532 = vpop.xlane.xlu0 %531
        %v533 = vsel %vm526, %v462, 0.0
        %534 = vadd.xlane.f32.xlu0 %v533
        %v535 = vpop.xlane.xlu0 %534
        %v536 = vsel %vm526, %v463, 0.0
        %537 = vadd.xlane.f32.xlu0 %v536
        %v538 = vpop.xlane.xlu0 %537
        %v539 = vsel %vm526, %v464, 0.0
        %540 = vadd.xlane.f32.xlu0 %v539
        %v541 = vpop.xlane.xlu0 %540
        %v542 = vsel %vm526, %v465, 0.0
        %543 = vadd.xlane.f32.xlu0 %v542
        %v544 = vpop.xlane.xlu0 %543
        %v545 = vsel %vm526, %v466, 0.0
        %546 = vadd.xlane.f32.xlu0 %v545
        %v547 = vpop.xlane.xlu0 %546
        %v548 = vsel %vm526, %v467, 0.0
        %549 = vadd.xlane.f32.xlu0 %v548
        %v550 = vpop.xlane.xlu0 %549
        %v551 = vsel %vm526, %v468, 0.0
        %552 = vadd.xlane.f32.xlu0 %v551
        %v553 = vpop.xlane.xlu0 %552
        %v554 = vsel %vm526, %v469, 0.0
        %555 = vadd.xlane.f32.xlu0 %v554
        %v556 = vpop.xlane.xlu0 %555
        %v557 = vsel %vm526, %v470, 0.0
        %558 = vadd.xlane.f32.xlu0 %v557
        %v559 = vpop.xlane.xlu0 %558
        %v560 = vsel %vm526, %v471, 0.0
        %561 = vadd.xlane.f32.xlu0 %v560
        %v562 = vpop.xlane.xlu0 %561
        %v563 = vsel %vm526, %v472, 0.0
        %564 = vadd.xlane.f32.xlu0 %v563
        %v565 = vpop.xlane.xlu0 %564
        %v566 = vsel %vm526, %v473, 0.0
        %567 = vadd.xlane.f32.xlu0 %v566
        %v568 = vpop.xlane.xlu0 %567
        %v569 = vsel %vm526, %v474, 0.0
        %570 = vadd.xlane.f32.xlu0 %v569
        %v571 = vpop.xlane.xlu0 %570
        %v572 = vsel %vm526, %v475, 0.0
        %573 = vadd.xlane.f32.xlu0 %v572
        %v574 = vpop.xlane.xlu0 %573
        %v575 = vsel %vm526, %v476, 0.0
        %576 = vadd.xlane.f32.xlu0 %v575
        %v577 = vpop.xlane.xlu0 %576
        %v578 = vsel %vm526, %v477, 0.0
        %579 = vadd.xlane.f32.xlu0 %v578
        %v580 = vpop.xlane.xlu0 %579
        %v581 = vsel %vm526, %v478, 0.0
        %582 = vadd.xlane.f32.xlu0 %v581
        %v583 = vpop.xlane.xlu0 %582
        %v584 = vsel %vm526, %v479, 0.0
        %585 = vadd.xlane.f32.xlu0 %v584
        %v586 = vpop.xlane.xlu0 %585
        %v587 = vsel %vm526, %v480, 0.0
        %588 = vadd.xlane.f32.xlu0 %v587
        %v589 = vpop.xlane.xlu0 %588
        %v590 = vsel %vm526, %v481, 0.0
        %591 = vadd.xlane.f32.xlu0 %v590
        %v592 = vpop.xlane.xlu0 %591
        %v593 = vsel %vm526, %v482, 0.0
        %594 = vadd.xlane.f32.xlu0 %v593
        %v595 = vpop.xlane.xlu0 %594
        %v596 = vsel %vm526, %v483, 0.0
        %597 = vadd.xlane.f32.xlu0 %v596
        %v598 = vpop.xlane.xlu0 %597
        %v599 = vsel %vm526, %v484, 0.0
        %600 = vadd.xlane.f32.xlu0 %v599
        %v601 = vpop.xlane.xlu0 %600
        %v602 = vsel %vm526, %v485, 0.0
        %603 = vadd.xlane.f32.xlu0 %v602
        %v604 = vpop.xlane.xlu0 %603
        %v605 = vsel %vm526, %v486, 0.0
        %606 = vadd.xlane.f32.xlu0 %v605
        %v607 = vpop.xlane.xlu0 %606
        %v608 = vsel %vm526, %v487, 0.0
        %609 = vadd.xlane.f32.xlu0 %v608
        %v610 = vpop.xlane.xlu0 %609
        %v611 = vsel %vm526, %v488, 0.0
        %612 = vadd.xlane.f32.xlu0 %v611
        %v613 = vpop.xlane.xlu0 %612
        %v614 = vsel %vm526, %v489, 0.0
        %615 = vadd.xlane.f32.xlu0 %v614
        %v616 = vpop.xlane.xlu0 %615
        %v617 = vsel %vm526, %v490, 0.0
        %618 = vadd.xlane.f32.xlu0 %v617
        %v619 = vpop.xlane.xlu0 %618
        %v620 = vsel %vm526, %v491, 0.0
        %621 = vadd.xlane.f32.xlu0 %v620
        %v622 = vpop.xlane.xlu0 %621
        %v623 = vsel %vm526, %v492, 0.0
        %624 = vadd.xlane.f32.xlu0 %v623
        %v625 = vpop.xlane.xlu0 %624
        %v626 = vsel %vm526, %v493, 0.0
        %627 = vadd.xlane.f32.xlu0 %v626
        %v628 = vpop.xlane.xlu0 %627
        %v629 = vsel %vm526, %v494, 0.0
        %630 = vadd.xlane.f32.xlu0 %v629
        %v631 = vpop.xlane.xlu0 %630
        %v632 = vsel %vm526, %v495, 0.0
        %633 = vadd.xlane.f32.xlu0 %v632
        %v634 = vpop.xlane.xlu0 %633
        %v635 = vsel %vm526, %v496, 0.0
        %636 = vadd.xlane.f32.xlu0 %v635
        %v637 = vpop.xlane.xlu0 %636
        %v638 = vsel %vm526, %v497, 0.0
        %639 = vadd.xlane.f32.xlu0 %v638
        %v640 = vpop.xlane.xlu0 %639
        %v641 = vsel %vm526, %v498, 0.0
        %642 = vadd.xlane.f32.xlu0 %v641
        %v643 = vpop.xlane.xlu0 %642
        %v644 = vsel %vm526, %v499, 0.0
        %645 = vadd.xlane.f32.xlu0 %v644
        %v646 = vpop.xlane.xlu0 %645
        %v647 = vsel %vm526, %v500, 0.0
        %648 = vadd.xlane.f32.xlu0 %v647
        %v649 = vpop.xlane.xlu0 %648
        %v650 = vsel %vm526, %v501, 0.0
        %651 = vadd.xlane.f32.xlu0 %v650
        %v652 = vpop.xlane.xlu0 %651
        %v653 = vsel %vm526, %v502, 0.0
        %654 = vadd.xlane.f32.xlu0 %v653
        %v655 = vpop.xlane.xlu0 %654
        %v656 = vsel %vm526, %v503, 0.0
        %657 = vadd.xlane.f32.xlu0 %v656
        %v658 = vpop.xlane.xlu0 %657
        %v659 = vsel %vm526, %v504, 0.0
        %660 = vadd.xlane.f32.xlu0 %v659
        %v661 = vpop.xlane.xlu0 %660
        %v662 = vsel %vm526, %v505, 0.0
        %663 = vadd.xlane.f32.xlu0 %v662
        %v664 = vpop.xlane.xlu0 %663
        %v665 = vsel %vm526, %v506, 0.0
        %666 = vadd.xlane.f32.xlu0 %v665
        %v667 = vpop.xlane.xlu0 %666
        %v668 = vsel %vm526, %v507, 0.0
        %669 = vadd.xlane.f32.xlu0 %v668
        %v670 = vpop.xlane.xlu0 %669
        %v671 = vsel %vm526, %v508, 0.0
        %672 = vadd.xlane.f32.xlu0 %v671
        %v673 = vpop.xlane.xlu0 %672
        %v674 = vsel %vm526, %v509, 0.0
        %675 = vadd.xlane.f32.xlu0 %v674
        %v676 = vpop.xlane.xlu0 %675
        %v677 = vsel %vm526, %v510, 0.0
        %678 = vadd.xlane.f32.xlu0 %v677
        %v679 = vpop.xlane.xlu0 %678
        %v680 = vsel %vm526, %v511, 0.0
        %681 = vadd.xlane.f32.xlu0 %v680
        %v682 = vpop.xlane.xlu0 %681
        %v683 = vsel %vm526, %v512, 0.0
        %684 = vadd.xlane.f32.xlu0 %v683
        %v685 = vpop.xlane.xlu0 %684
        %v686 = vsel %vm526, %v513, 0.0
        %687 = vadd.xlane.f32.xlu0 %v686
        %v688 = vpop.xlane.xlu0 %687
        %v689 = vsel %vm526, %v514, 0.0
        %690 = vadd.xlane.f32.xlu0 %v689
        %v691 = vpop.xlane.xlu0 %690
        %v692 = vsel %vm526, %v515, 0.0
        %693 = vadd.xlane.f32.xlu0 %v692
        %v694 = vpop.xlane.xlu0 %693
        %v695 = vsel %vm526, %v516, 0.0
        %696 = vadd.xlane.f32.xlu0 %v695
        %v697 = vpop.xlane.xlu0 %696
        %v698 = vsel %vm526, %v517, 0.0
        %699 = vadd.xlane.f32.xlu0 %v698
        %v700 = vpop.xlane.xlu0 %699
        %v701 = vsel %vm526, %v518, 0.0
        %702 = vadd.xlane.f32.xlu0 %v701
        %v703 = vpop.xlane.xlu0 %702
        %v704 = vsel %vm526, %v519, 0.0
        %705 = vadd.xlane.f32.xlu0 %v704
        %v706 = vpop.xlane.xlu0 %705
        %v707 = vsel %vm526, %v520, 0.0
        %708 = vadd.xlane.f32.xlu0 %v707
        %v709 = vpop.xlane.xlu0 %708
        %v710 = vsel %vm526, %v521, 0.0
        %711 = vadd.xlane.f32.xlu0 %v710
        %v712 = vpop.xlane.xlu0 %711
        %v713 = vsel %vm526, %v522, 0.0
        %714 = vadd.xlane.f32.xlu0 %v713
        %v715 = vpop.xlane.xlu0 %714
        %v716 = vsel %vm526, %v523, 0.0
        %717 = vadd.xlane.f32.xlu0 %v716
        %v718 = vpop.xlane.xlu0 %717
        %v719 = vrcp.pop 32.0
        %v720 = vmul.f32 %v529, %v719
        %v721 = vmul.f32 %v532, %v719
        %v722 = vmul.f32 %v535, %v719
        %v723 = vmul.f32 %v538, %v719
        %v724 = vmul.f32 %v541, %v719
        %v725 = vmul.f32 %v544, %v719
        %v726 = vmul.f32 %v547, %v719
        %v727 = vmul.f32 %v550, %v719
        %v728 = vmul.f32 %v553, %v719
        %v729 = vmul.f32 %v556, %v719
        %v730 = vmul.f32 %v559, %v719
        %v731 = vmul.f32 %v562, %v719
        %v732 = vmul.f32 %v565, %v719
        %v733 = vmul.f32 %v568, %v719
        %v734 = vmul.f32 %v571, %v719
        %v735 = vmul.f32 %v574, %v719
        %v736 = vmul.f32 %v577, %v719
        %v737 = vmul.f32 %v580, %v719
        %v738 = vmul.f32 %v583, %v719
        %v739 = vmul.f32 %v586, %v719
        %v740 = vmul.f32 %v589, %v719
        %v741 = vmul.f32 %v592, %v719
        %v742 = vmul.f32 %v595, %v719
        %v743 = vmul.f32 %v598, %v719
        %v744 = vmul.f32 %v601, %v719
        %v745 = vmul.f32 %v604, %v719
        %v746 = vmul.f32 %v607, %v719
        %v747 = vmul.f32 %v610, %v719
        %v748 = vmul.f32 %v613, %v719
        %v749 = vmul.f32 %v616, %v719
        %v750 = vmul.f32 %v619, %v719
        %v751 = vmul.f32 %v622, %v719
        %v752 = vmul.f32 %v625, %v719
        %v753 = vmul.f32 %v628, %v719
        %v754 = vmul.f32 %v631, %v719
        %v755 = vmul.f32 %v634, %v719
        %v756 = vmul.f32 %v637, %v719
        %v757 = vmul.f32 %v640, %v719
        %v758 = vmul.f32 %v643, %v719
        %v759 = vmul.f32 %v646, %v719
        %v760 = vmul.f32 %v649, %v719
        %v761 = vmul.f32 %v652, %v719
        %v762 = vmul.f32 %v655, %v719
        %v763 = vmul.f32 %v658, %v719
        %v764 = vmul.f32 %v661, %v719
        %v765 = vmul.f32 %v664, %v719
        %v766 = vmul.f32 %v667, %v719
        %v767 = vmul.f32 %v670, %v719
        %v768 = vmul.f32 %v673, %v719
        %v769 = vmul.f32 %v676, %v719
        %v770 = vmul.f32 %v679, %v719
        %v771 = vmul.f32 %v682, %v719
        %v772 = vmul.f32 %v685, %v719
        %v773 = vmul.f32 %v688, %v719
        %v774 = vmul.f32 %v691, %v719
        %v775 = vmul.f32 %v694, %v719
        %v776 = vmul.f32 %v697, %v719
        %v777 = vmul.f32 %v700, %v719
        %v778 = vmul.f32 %v703, %v719
        %v779 = vmul.f32 %v706, %v719
        %v780 = vmul.f32 %v709, %v719
        %v781 = vmul.f32 %v712, %v719
        %v782 = vmul.f32 %v715, %v719
        %v783 = vmul.f32 %v718, %v719
        %v784 = vsub.f32 %v460, %v720
        %v785 = vsub.f32 %v461, %v721
        %v786 = vsub.f32 %v462, %v722
        %v787 = vsub.f32 %v463, %v723
        %v788 = vsub.f32 %v464, %v724
        %v789 = vsub.f32 %v465, %v725
        %v790 = vsub.f32 %v466, %v726
        %v791 = vsub.f32 %v467, %v727
        %v792 = vsub.f32 %v468, %v728
        %v793 = vsub.f32 %v469, %v729
        %v794 = vsub.f32 %v470, %v730
        %v795 = vsub.f32 %v471, %v731
        %v796 = vsub.f32 %v472, %v732
        %v797 = vsub.f32 %v473, %v733
        %v798 = vsub.f32 %v474, %v734
        %v799 = vsub.f32 %v475, %v735
        %v800 = vsub.f32 %v476, %v736
        %v801 = vsub.f32 %v477, %v737
        %v802 = vsub.f32 %v478, %v738
        %v803 = vsub.f32 %v479, %v739
        %v804 = vsub.f32 %v480, %v740
        %v805 = vsub.f32 %v481, %v741
        %v806 = vsub.f32 %v482, %v742
        %v807 = vsub.f32 %v483, %v743
        %v808 = vsub.f32 %v484, %v744
        %v809 = vsub.f32 %v485, %v745
        %v810 = vsub.f32 %v486, %v746
        %v811 = vsub.f32 %v487, %v747
        %v812 = vsub.f32 %v488, %v748
        %v813 = vsub.f32 %v489, %v749
        %v814 = vsub.f32 %v490, %v750
        %v815 = vsub.f32 %v491, %v751
        %v816 = vsub.f32 %v492, %v752
        %v817 = vsub.f32 %v493, %v753
        %v818 = vsub.f32 %v494, %v754
        %v819 = vsub.f32 %v495, %v755
        %v820 = vsub.f32 %v496, %v756
        %v821 = vsub.f32 %v497, %v757
        %v822 = vsub.f32 %v498, %v758
        %v823 = vsub.f32 %v499, %v759
        %v824 = vsub.f32 %v500, %v760
        %v825 = vsub.f32 %v501, %v761
        %v826 = vsub.f32 %v502, %v762
        %v827 = vsub.f32 %v503, %v763
        %v828 = vsub.f32 %v504, %v764
        %v829 = vsub.f32 %v505, %v765
        %v830 = vsub.f32 %v506, %v766
        %v831 = vsub.f32 %v507, %v767
        %v832 = vsub.f32 %v508, %v768
        %v833 = vsub.f32 %v509, %v769
        %v834 = vsub.f32 %v510, %v770
        %v835 = vsub.f32 %v511, %v771
        %v836 = vsub.f32 %v512, %v772
        %v837 = vsub.f32 %v513, %v773
        %v838 = vsub.f32 %v514, %v774
        %v839 = vsub.f32 %v515, %v775
        %v840 = vsub.f32 %v516, %v776
        %v841 = vsub.f32 %v517, %v777
        %v842 = vsub.f32 %v518, %v778
        %v843 = vsub.f32 %v519, %v779
        %v844 = vsub.f32 %v520, %v780
        %v845 = vsub.f32 %v521, %v781
        %v846 = vsub.f32 %v522, %v782
        %v847 = vsub.f32 %v523, %v783
        %v848 = vmul.f32 %v784, %v784
        %v849 = vmul.f32 %v785, %v785
        %v850 = vmul.f32 %v786, %v786
        %v851 = vmul.f32 %v787, %v787
        %v852 = vmul.f32 %v788, %v788
        %v853 = vmul.f32 %v789, %v789
        %v854 = vmul.f32 %v790, %v790
        %v855 = vmul.f32 %v791, %v791
        %v856 = vmul.f32 %v792, %v792
        %v857 = vmul.f32 %v793, %v793
        %v858 = vmul.f32 %v794, %v794
        %v859 = vmul.f32 %v795, %v795
        %v860 = vmul.f32 %v796, %v796
        %v861 = vmul.f32 %v797, %v797
        %v862 = vmul.f32 %v798, %v798
        %v863 = vmul.f32 %v799, %v799
        %v864 = vmul.f32 %v800, %v800
        %v865 = vmul.f32 %v801, %v801
        %v866 = vmul.f32 %v802, %v802
        %v867 = vmul.f32 %v803, %v803
        %v868 = vmul.f32 %v804, %v804
        %v869 = vmul.f32 %v805, %v805
        %v870 = vmul.f32 %v806, %v806
        %v871 = vmul.f32 %v807, %v807
        %v872 = vmul.f32 %v808, %v808
        %v873 = vmul.f32 %v809, %v809
        %v874 = vmul.f32 %v810, %v810
        %v875 = vmul.f32 %v811, %v811
        %v876 = vmul.f32 %v812, %v812
        %v877 = vmul.f32 %v813, %v813
        %v878 = vmul.f32 %v814, %v814
        %v879 = vmul.f32 %v815, %v815
        %v880 = vmul.f32 %v816, %v816
        %v881 = vmul.f32 %v817, %v817
        %v882 = vmul.f32 %v818, %v818
        %v883 = vmul.f32 %v819, %v819
        %v884 = vmul.f32 %v820, %v820
        %v885 = vmul.f32 %v821, %v821
        %v886 = vmul.f32 %v822, %v822
        %v887 = vmul.f32 %v823, %v823
        %v888 = vmul.f32 %v824, %v824
        %v889 = vmul.f32 %v825, %v825
        %v890 = vmul.f32 %v826, %v826
        %v891 = vmul.f32 %v827, %v827
        %v892 = vmul.f32 %v828, %v828
        %v893 = vmul.f32 %v829, %v829
        %v894 = vmul.f32 %v830, %v830
        %v895 = vmul.f32 %v831, %v831
        %v896 = vmul.f32 %v832, %v832
        %v897 = vmul.f32 %v833, %v833
        %v898 = vmul.f32 %v834, %v834
        %v899 = vmul.f32 %v835, %v835
        %v900 = vmul.f32 %v836, %v836
        %v901 = vmul.f32 %v837, %v837
        %v902 = vmul.f32 %v838, %v838
        %v903 = vmul.f32 %v839, %v839
        %v904 = vmul.f32 %v840, %v840
        %v905 = vmul.f32 %v841, %v841
        %v906 = vmul.f32 %v842, %v842
        %v907 = vmul.f32 %v843, %v843
        %v908 = vmul.f32 %v844, %v844
        %v909 = vmul.f32 %v845, %v845
        %v910 = vmul.f32 %v846, %v846
        %v911 = vmul.f32 %v847, %v847
        %v912 = vsel %vm526, %v848, 0.0
        %913 = vadd.xlane.f32.xlu0 %v912
        %v914 = vpop.xlane.xlu0 %913
        %v915 = vsel %vm526, %v849, 0.0
        %916 = vadd.xlane.f32.xlu0 %v915
        %v917 = vpop.xlane.xlu0 %916
        %v918 = vsel %vm526, %v850, 0.0
        %919 = vadd.xlane.f32.xlu0 %v918
        %v920 = vpop.xlane.xlu0 %919
        %v921 = vsel %vm526, %v851, 0.0
        %922 = vadd.xlane.f32.xlu0 %v921
        %v923 = vpop.xlane.xlu0 %922
        %v924 = vsel %vm526, %v852, 0.0
        %925 = vadd.xlane.f32.xlu0 %v924
        %v926 = vpop.xlane.xlu0 %925
        %v927 = vsel %vm526, %v853, 0.0
        %928 = vadd.xlane.f32.xlu0 %v927
        %v929 = vpop.xlane.xlu0 %928
        %v930 = vsel %vm526, %v854, 0.0
        %931 = vadd.xlane.f32.xlu0 %v930
        %v932 = vpop.xlane.xlu0 %931
        %v933 = vsel %vm526, %v855, 0.0
        %934 = vadd.xlane.f32.xlu0 %v933
        %v935 = vpop.xlane.xlu0 %934
        %v936 = vsel %vm526, %v856, 0.0
        %937 = vadd.xlane.f32.xlu0 %v936
        %v938 = vpop.xlane.xlu0 %937
        %v939 = vsel %vm526, %v857, 0.0
        %940 = vadd.xlane.f32.xlu0 %v939
        %v941 = vpop.xlane.xlu0 %940
        %v942 = vsel %vm526, %v858, 0.0
        %943 = vadd.xlane.f32.xlu0 %v942
        %v944 = vpop.xlane.xlu0 %943
        %v945 = vsel %vm526, %v859, 0.0
        %946 = vadd.xlane.f32.xlu0 %v945
        %v947 = vpop.xlane.xlu0 %946
        %v948 = vsel %vm526, %v860, 0.0
        %949 = vadd.xlane.f32.xlu0 %v948
        %v950 = vpop.xlane.xlu0 %949
        %v951 = vsel %vm526, %v861, 0.0
        %952 = vadd.xlane.f32.xlu0 %v951
        %v953 = vpop.xlane.xlu0 %952
        %v954 = vsel %vm526, %v862, 0.0
        %955 = vadd.xlane.f32.xlu0 %v954
        %v956 = vpop.xlane.xlu0 %955
        %v957 = vsel %vm526, %v863, 0.0
        %958 = vadd.xlane.f32.xlu0 %v957
        %v959 = vpop.xlane.xlu0 %958
        %v960 = vsel %vm526, %v864, 0.0
        %961 = vadd.xlane.f32.xlu0 %v960
        %v962 = vpop.xlane.xlu0 %961
        %v963 = vsel %vm526, %v865, 0.0
        %964 = vadd.xlane.f32.xlu0 %v963
        %v965 = vpop.xlane.xlu0 %964
        %v966 = vsel %vm526, %v866, 0.0
        %967 = vadd.xlane.f32.xlu0 %v966
        %v968 = vpop.xlane.xlu0 %967
        %v969 = vsel %vm526, %v867, 0.0
        %970 = vadd.xlane.f32.xlu0 %v969
        %v971 = vpop.xlane.xlu0 %970
        %v972 = vsel %vm526, %v868, 0.0
        %973 = vadd.xlane.f32.xlu0 %v972
        %v974 = vpop.xlane.xlu0 %973
        %v975 = vsel %vm526, %v869, 0.0
        %976 = vadd.xlane.f32.xlu0 %v975
        %v977 = vpop.xlane.xlu0 %976
        %v978 = vsel %vm526, %v870, 0.0
        %979 = vadd.xlane.f32.xlu0 %v978
        %v980 = vpop.xlane.xlu0 %979
        %v981 = vsel %vm526, %v871, 0.0
        %982 = vadd.xlane.f32.xlu0 %v981
        %v983 = vpop.xlane.xlu0 %982
        %v984 = vsel %vm526, %v872, 0.0
        %985 = vadd.xlane.f32.xlu0 %v984
        %v986 = vpop.xlane.xlu0 %985
        %v987 = vsel %vm526, %v873, 0.0
        %988 = vadd.xlane.f32.xlu0 %v987
        %v989 = vpop.xlane.xlu0 %988
        %v990 = vsel %vm526, %v874, 0.0
        %991 = vadd.xlane.f32.xlu0 %v990
        %v992 = vpop.xlane.xlu0 %991
        %v993 = vsel %vm526, %v875, 0.0
        %994 = vadd.xlane.f32.xlu0 %v993
        %v995 = vpop.xlane.xlu0 %994
        %v996 = vsel %vm526, %v876, 0.0
        %997 = vadd.xlane.f32.xlu0 %v996
        %v998 = vpop.xlane.xlu0 %997
        %v999 = vsel %vm526, %v877, 0.0
        %1000 = vadd.xlane.f32.xlu0 %v999
        %v1001 = vpop.xlane.xlu0 %1000
        %v1002 = vsel %vm526, %v878, 0.0
        %1003 = vadd.xlane.f32.xlu0 %v1002
        %v1004 = vpop.xlane.xlu0 %1003
        %v1005 = vsel %vm526, %v879, 0.0
        %1006 = vadd.xlane.f32.xlu0 %v1005
        %v1007 = vpop.xlane.xlu0 %1006
        %v1008 = vsel %vm526, %v880, 0.0
        %1009 = vadd.xlane.f32.xlu0 %v1008
        %v1010 = vpop.xlane.xlu0 %1009
        %v1011 = vsel %vm526, %v881, 0.0
        %1012 = vadd.xlane.f32.xlu0 %v1011
        %v1013 = vpop.xlane.xlu0 %1012
        %v1014 = vsel %vm526, %v882, 0.0
        %1015 = vadd.xlane.f32.xlu0 %v1014
        %v1016 = vpop.xlane.xlu0 %1015
        %v1017 = vsel %vm526, %v883, 0.0
        %1018 = vadd.xlane.f32.xlu0 %v1017
        %v1019 = vpop.xlane.xlu0 %1018
        %v1020 = vsel %vm526, %v884, 0.0
        %1021 = vadd.xlane.f32.xlu0 %v1020
        %v1022 = vpop.xlane.xlu0 %1021
        %v1023 = vsel %vm526, %v885, 0.0
        %1024 = vadd.xlane.f32.xlu0 %v1023
        %v1025 = vpop.xlane.xlu0 %1024
        %v1026 = vsel %vm526, %v886, 0.0
        %1027 = vadd.xlane.f32.xlu0 %v1026
        %v1028 = vpop.xlane.xlu0 %1027
        %v1029 = vsel %vm526, %v887, 0.0
        %1030 = vadd.xlane.f32.xlu0 %v1029
        %v1031 = vpop.xlane.xlu0 %1030
        %v1032 = vsel %vm526, %v888, 0.0
        %1033 = vadd.xlane.f32.xlu0 %v1032
        %v1034 = vpop.xlane.xlu0 %1033
        %v1035 = vsel %vm526, %v889, 0.0
        %1036 = vadd.xlane.f32.xlu0 %v1035
        %v1037 = vpop.xlane.xlu0 %1036
        %v1038 = vsel %vm526, %v890, 0.0
        %1039 = vadd.xlane.f32.xlu0 %v1038
        %v1040 = vpop.xlane.xlu0 %1039
        %v1041 = vsel %vm526, %v891, 0.0
        %1042 = vadd.xlane.f32.xlu0 %v1041
        %v1043 = vpop.xlane.xlu0 %1042
        %v1044 = vsel %vm526, %v892, 0.0
        %1045 = vadd.xlane.f32.xlu0 %v1044
        %v1046 = vpop.xlane.xlu0 %1045
        %v1047 = vsel %vm526, %v893, 0.0
        %1048 = vadd.xlane.f32.xlu0 %v1047
        %v1049 = vpop.xlane.xlu0 %1048
        %v1050 = vsel %vm526, %v894, 0.0
        %1051 = vadd.xlane.f32.xlu0 %v1050
        %v1052 = vpop.xlane.xlu0 %1051
        %v1053 = vsel %vm526, %v895, 0.0
        %1054 = vadd.xlane.f32.xlu0 %v1053
        %v1055 = vpop.xlane.xlu0 %1054
        %v1056 = vsel %vm526, %v896, 0.0
        %1057 = vadd.xlane.f32.xlu0 %v1056
        %v1058 = vpop.xlane.xlu0 %1057
        %v1059 = vsel %vm526, %v897, 0.0
        %1060 = vadd.xlane.f32.xlu0 %v1059
        %v1061 = vpop.xlane.xlu0 %1060
        %v1062 = vsel %vm526, %v898, 0.0
        %1063 = vadd.xlane.f32.xlu0 %v1062
        %v1064 = vpop.xlane.xlu0 %1063
        %v1065 = vsel %vm526, %v899, 0.0
        %1066 = vadd.xlane.f32.xlu0 %v1065
        %v1067 = vpop.xlane.xlu0 %1066
        %v1068 = vsel %vm526, %v900, 0.0
        %1069 = vadd.xlane.f32.xlu0 %v1068
        %v1070 = vpop.xlane.xlu0 %1069
        %v1071 = vsel %vm526, %v901, 0.0
        %1072 = vadd.xlane.f32.xlu0 %v1071
        %v1073 = vpop.xlane.xlu0 %1072
        %v1074 = vsel %vm526, %v902, 0.0
        %1075 = vadd.xlane.f32.xlu0 %v1074
        %v1076 = vpop.xlane.xlu0 %1075
        %v1077 = vsel %vm526, %v903, 0.0
        %1078 = vadd.xlane.f32.xlu0 %v1077
        %v1079 = vpop.xlane.xlu0 %1078
        %v1080 = vsel %vm526, %v904, 0.0
        %1081 = vadd.xlane.f32.xlu0 %v1080
        %v1082 = vpop.xlane.xlu0 %1081
        %v1083 = vsel %vm526, %v905, 0.0
        %1084 = vadd.xlane.f32.xlu0 %v1083
        %v1085 = vpop.xlane.xlu0 %1084
        %v1086 = vsel %vm526, %v906, 0.0
        %1087 = vadd.xlane.f32.xlu0 %v1086
        %v1088 = vpop.xlane.xlu0 %1087
        %v1089 = vsel %vm526, %v907, 0.0
        %1090 = vadd.xlane.f32.xlu0 %v1089
        %v1091 = vpop.xlane.xlu0 %1090
        %v1092 = vsel %vm526, %v908, 0.0
        %1093 = vadd.xlane.f32.xlu0 %v1092
        %v1094 = vpop.xlane.xlu0 %1093
        %v1095 = vsel %vm526, %v909, 0.0
        %1096 = vadd.xlane.f32.xlu0 %v1095
        %v1097 = vpop.xlane.xlu0 %1096
        %v1098 = vsel %vm526, %v910, 0.0
        %1099 = vadd.xlane.f32.xlu0 %v1098
        %v1100 = vpop.xlane.xlu0 %1099
        %v1101 = vsel %vm526, %v911, 0.0
        %1102 = vadd.xlane.f32.xlu0 %v1101
        %v1103 = vpop.xlane.xlu0 %1102
        %v1104 = vmul.f32 %v914, %v719
        %v1105 = vmul.f32 %v917, %v719
        %v1106 = vmul.f32 %v920, %v719
        %v1107 = vmul.f32 %v923, %v719
        %v1108 = vmul.f32 %v926, %v719
        %v1109 = vmul.f32 %v929, %v719
        %v1110 = vmul.f32 %v932, %v719
        %v1111 = vmul.f32 %v935, %v719
        %v1112 = vmul.f32 %v938, %v719
        %v1113 = vmul.f32 %v941, %v719
        %v1114 = vmul.f32 %v944, %v719
        %v1115 = vmul.f32 %v947, %v719
        %v1116 = vmul.f32 %v950, %v719
        %v1117 = vmul.f32 %v953, %v719
        %v1118 = vmul.f32 %v956, %v719
        %v1119 = vmul.f32 %v959, %v719
        %v1120 = vmul.f32 %v962, %v719
        %v1121 = vmul.f32 %v965, %v719
        %v1122 = vmul.f32 %v968, %v719
        %v1123 = vmul.f32 %v971, %v719
        %v1124 = vmul.f32 %v974, %v719
        %v1125 = vmul.f32 %v977, %v719
        %v1126 = vmul.f32 %v980, %v719
        %v1127 = vmul.f32 %v983, %v719
        %v1128 = vmul.f32 %v986, %v719
        %v1129 = vmul.f32 %v989, %v719
        %v1130 = vmul.f32 %v992, %v719
        %v1131 = vmul.f32 %v995, %v719
        %v1132 = vmul.f32 %v998, %v719
        %v1133 = vmul.f32 %v1001, %v719
        %v1134 = vmul.f32 %v1004, %v719
        %v1135 = vmul.f32 %v1007, %v719
        %v1136 = vmul.f32 %v1010, %v719
        %v1137 = vmul.f32 %v1013, %v719
        %v1138 = vmul.f32 %v1016, %v719
        %v1139 = vmul.f32 %v1019, %v719
        %v1140 = vmul.f32 %v1022, %v719
        %v1141 = vmul.f32 %v1025, %v719
        %v1142 = vmul.f32 %v1028, %v719
        %v1143 = vmul.f32 %v1031, %v719
        %v1144 = vmul.f32 %v1034, %v719
        %v1145 = vmul.f32 %v1037, %v719
        %v1146 = vmul.f32 %v1040, %v719
        %v1147 = vmul.f32 %v1043, %v719
        %v1148 = vmul.f32 %v1046, %v719
        %v1149 = vmul.f32 %v1049, %v719
        %v1150 = vmul.f32 %v1052, %v719
        %v1151 = vmul.f32 %v1055, %v719
        %v1152 = vmul.f32 %v1058, %v719
        %v1153 = vmul.f32 %v1061, %v719
        %v1154 = vmul.f32 %v1064, %v719
        %v1155 = vmul.f32 %v1067, %v719
        %v1156 = vmul.f32 %v1070, %v719
        %v1157 = vmul.f32 %v1073, %v719
        %v1158 = vmul.f32 %v1076, %v719
        %v1159 = vmul.f32 %v1079, %v719
        %v1160 = vmul.f32 %v1082, %v719
        %v1161 = vmul.f32 %v1085, %v719
        %v1162 = vmul.f32 %v1088, %v719
        %v1163 = vmul.f32 %v1091, %v719
        %v1164 = vmul.f32 %v1094, %v719
        %v1165 = vmul.f32 %v1097, %v719
        %v1166 = vmul.f32 %v1100, %v719
        %v1167 = vmul.f32 %v1103, %v719
        %v1168 = vadd.f32 %v1104, 1e-05
        %v1169 = vadd.f32 %v1105, 1e-05
        %v1170 = vadd.f32 %v1106, 1e-05
        %v1171 = vadd.f32 %v1107, 1e-05
        %v1172 = vadd.f32 %v1108, 1e-05
        %v1173 = vadd.f32 %v1109, 1e-05
        %v1174 = vadd.f32 %v1110, 1e-05
        %v1175 = vadd.f32 %v1111, 1e-05
        %v1176 = vadd.f32 %v1112, 1e-05
        %v1177 = vadd.f32 %v1113, 1e-05
        %v1178 = vadd.f32 %v1114, 1e-05
        %v1179 = vadd.f32 %v1115, 1e-05
        %v1180 = vadd.f32 %v1116, 1e-05
        %v1181 = vadd.f32 %v1117, 1e-05
        %v1182 = vadd.f32 %v1118, 1e-05
        %v1183 = vadd.f32 %v1119, 1e-05
        %v1184 = vadd.f32 %v1120, 1e-05
        %v1185 = vadd.f32 %v1121, 1e-05
        %v1186 = vadd.f32 %v1122, 1e-05
        %v1187 = vadd.f32 %v1123, 1e-05
        %v1188 = vadd.f32 %v1124, 1e-05
        %v1189 = vadd.f32 %v1125, 1e-05
        %v1190 = vadd.f32 %v1126, 1e-05
        %v1191 = vadd.f32 %v1127, 1e-05
        %v1192 = vadd.f32 %v1128, 1e-05
        %v1193 = vadd.f32 %v1129, 1e-05
        %v1194 = vadd.f32 %v1130, 1e-05
        %v1195 = vadd.f32 %v1131, 1e-05
        %v1196 = vadd.f32 %v1132, 1e-05
        %v1197 = vadd.f32 %v1133, 1e-05
        %v1198 = vadd.f32 %v1134, 1e-05
        %v1199 = vadd.f32 %v1135, 1e-05
        %v1200 = vadd.f32 %v1136, 1e-05
        %v1201 = vadd.f32 %v1137, 1e-05
        %v1202 = vadd.f32 %v1138, 1e-05
        %v1203 = vadd.f32 %v1139, 1e-05
        %v1204 = vadd.f32 %v1140, 1e-05
        %v1205 = vadd.f32 %v1141, 1e-05
        %v1206 = vadd.f32 %v1142, 1e-05
        %v1207 = vadd.f32 %v1143, 1e-05
        %v1208 = vadd.f32 %v1144, 1e-05
        %v1209 = vadd.f32 %v1145, 1e-05
        %v1210 = vadd.f32 %v1146, 1e-05
        %v1211 = vadd.f32 %v1147, 1e-05
        %v1212 = vadd.f32 %v1148, 1e-05
        %v1213 = vadd.f32 %v1149, 1e-05
        %v1214 = vadd.f32 %v1150, 1e-05
        %v1215 = vadd.f32 %v1151, 1e-05
        %v1216 = vadd.f32 %v1152, 1e-05
        %v1217 = vadd.f32 %v1153, 1e-05
        %v1218 = vadd.f32 %v1154, 1e-05
        %v1219 = vadd.f32 %v1155, 1e-05
        %v1220 = vadd.f32 %v1156, 1e-05
        %v1221 = vadd.f32 %v1157, 1e-05
        %v1222 = vadd.f32 %v1158, 1e-05
        %v1223 = vadd.f32 %v1159, 1e-05
        %v1224 = vadd.f32 %v1160, 1e-05
        %v1225 = vadd.f32 %v1161, 1e-05
        %v1226 = vadd.f32 %v1162, 1e-05
        %v1227 = vadd.f32 %v1163, 1e-05
        %v1228 = vadd.f32 %v1164, 1e-05
        %v1229 = vadd.f32 %v1165, 1e-05
        %v1230 = vadd.f32 %v1166, 1e-05
        %v1231 = vadd.f32 %v1167, 1e-05
        %v1232 = vrsqrt.pop %v1168
        %v1233 = vrsqrt.pop %v1169
        %v1234 = vrsqrt.pop %v1170
        %v1235 = vrsqrt.pop %v1171
        %v1236 = vrsqrt.pop %v1172
        %v1237 = vrsqrt.pop %v1173
        %v1238 = vrsqrt.pop %v1174
        %v1239 = vrsqrt.pop %v1175
        %v1240 = vrsqrt.pop %v1176
        %v1241 = vrsqrt.pop %v1177
        %v1242 = vrsqrt.pop %v1178
        %v1243 = vrsqrt.pop %v1179
        %v1244 = vrsqrt.pop %v1180
        %v1245 = vrsqrt.pop %v1181
        %v1246 = vrsqrt.pop %v1182
        %v1247 = vrsqrt.pop %v1183
        %v1248 = vrsqrt.pop %v1184
        %v1249 = vrsqrt.pop %v1185
        %v1250 = vrsqrt.pop %v1186
        %v1251 = vrsqrt.pop %v1187
        %v1252 = vrsqrt.pop %v1188
        %v1253 = vrsqrt.pop %v1189
        %v1254 = vrsqrt.pop %v1190
        %v1255 = vrsqrt.pop %v1191
        %v1256 = vrsqrt.pop %v1192
        %v1257 = vrsqrt.pop %v1193
        %v1258 = vrsqrt.pop %v1194
        %v1259 = vrsqrt.pop %v1195
        %v1260 = vrsqrt.pop %v1196
        %v1261 = vrsqrt.pop %v1197
        %v1262 = vrsqrt.pop %v1198
        %v1263 = vrsqrt.pop %v1199
        %v1264 = vrsqrt.pop %v1200
        %v1265 = vrsqrt.pop %v1201
        %v1266 = vrsqrt.pop %v1202
        %v1267 = vrsqrt.pop %v1203
        %v1268 = vrsqrt.pop %v1204
        %v1269 = vrsqrt.pop %v1205
        %v1270 = vrsqrt.pop %v1206
        %v1271 = vrsqrt.pop %v1207
        %v1272 = vrsqrt.pop %v1208
        %v1273 = vrsqrt.pop %v1209
        %v1274 = vrsqrt.pop %v1210
        %v1275 = vrsqrt.pop %v1211
        %v1276 = vrsqrt.pop %v1212
        %v1277 = vrsqrt.pop %v1213
        %v1278 = vrsqrt.pop %v1214
        %v1279 = vrsqrt.pop %v1215
        %v1280 = vrsqrt.pop %v1216
        %v1281 = vrsqrt.pop %v1217
        %v1282 = vrsqrt.pop %v1218
        %v1283 = vrsqrt.pop %v1219
        %v1284 = vrsqrt.pop %v1220
        %v1285 = vrsqrt.pop %v1221
        %v1286 = vrsqrt.pop %v1222
        %v1287 = vrsqrt.pop %v1223
        %v1288 = vrsqrt.pop %v1224
        %v1289 = vrsqrt.pop %v1225
        %v1290 = vrsqrt.pop %v1226
        %v1291 = vrsqrt.pop %v1227
        %v1292 = vrsqrt.pop %v1228
        %v1293 = vrsqrt.pop %v1229
        %v1294 = vrsqrt.pop %v1230
        %v1295 = vrsqrt.pop %v1231
        %v1296 = vmul.f32 %v784, %v1232
        %v1297 = vmul.f32 %v785, %v1233
        %v1298 = vmul.f32 %v786, %v1234
        %v1299 = vmul.f32 %v787, %v1235
        %v1300 = vmul.f32 %v788, %v1236
        %v1301 = vmul.f32 %v789, %v1237
        %v1302 = vmul.f32 %v790, %v1238
        %v1303 = vmul.f32 %v791, %v1239
        %v1304 = vmul.f32 %v792, %v1240
        %v1305 = vmul.f32 %v793, %v1241
        %v1306 = vmul.f32 %v794, %v1242
        %v1307 = vmul.f32 %v795, %v1243
        %v1308 = vmul.f32 %v796, %v1244
        %v1309 = vmul.f32 %v797, %v1245
        %v1310 = vmul.f32 %v798, %v1246
        %v1311 = vmul.f32 %v799, %v1247
        %v1312 = vmul.f32 %v800, %v1248
        %v1313 = vmul.f32 %v801, %v1249
        %v1314 = vmul.f32 %v802, %v1250
        %v1315 = vmul.f32 %v803, %v1251
        %v1316 = vmul.f32 %v804, %v1252
        %v1317 = vmul.f32 %v805, %v1253
        %v1318 = vmul.f32 %v806, %v1254
        %v1319 = vmul.f32 %v807, %v1255
        %v1320 = vmul.f32 %v808, %v1256
        %v1321 = vmul.f32 %v809, %v1257
        %v1322 = vmul.f32 %v810, %v1258
        %v1323 = vmul.f32 %v811, %v1259
        %v1324 = vmul.f32 %v812, %v1260
        %v1325 = vmul.f32 %v813, %v1261
        %v1326 = vmul.f32 %v814, %v1262
        %v1327 = vmul.f32 %v815, %v1263
        %v1328 = vmul.f32 %v816, %v1264
        %v1329 = vmul.f32 %v817, %v1265
        %v1330 = vmul.f32 %v818, %v1266
        %v1331 = vmul.f32 %v819, %v1267
        %v1332 = vmul.f32 %v820, %v1268
        %v1333 = vmul.f32 %v821, %v1269
        %v1334 = vmul.f32 %v822, %v1270
        %v1335 = vmul.f32 %v823, %v1271
        %v1336 = vmul.f32 %v824, %v1272
        %v1337 = vmul.f32 %v825, %v1273
        %v1338 = vmul.f32 %v826, %v1274
        %v1339 = vmul.f32 %v827, %v1275
        %v1340 = vmul.f32 %v828, %v1276
        %v1341 = vmul.f32 %v829, %v1277
        %v1342 = vmul.f32 %v830, %v1278
        %v1343 = vmul.f32 %v831, %v1279
        %v1344 = vmul.f32 %v832, %v1280
        %v1345 = vmul.f32 %v833, %v1281
        %v1346 = vmul.f32 %v834, %v1282
        %v1347 = vmul.f32 %v835, %v1283
        %v1348 = vmul.f32 %v836, %v1284
        %v1349 = vmul.f32 %v837, %v1285
        %v1350 = vmul.f32 %v838, %v1286
        %v1351 = vmul.f32 %v839, %v1287
        %v1352 = vmul.f32 %v840, %v1288
        %v1353 = vmul.f32 %v841, %v1289
        %v1354 = vmul.f32 %v842, %v1290
        %v1355 = vmul.f32 %v843, %v1291
        %v1356 = vmul.f32 %v844, %v1292
        %v1357 = vmul.f32 %v845, %v1293
        %v1358 = vmul.f32 %v846, %v1294
        %v1359 = vmul.f32 %v847, %v1295
        %v1361 = vlaneseq
        %v1362 = vshrl.u32 %v1361, 7
        %v1363 = vsub.s32 0, %v1362
        %v1364 = vrot.slane %v524, %v1363
        %v1366 = vmul.f32 %v1296, %v1364
        %v1367 = vmul.f32 %v1297, %v1364
        %v1368 = vmul.f32 %v1298, %v1364
        %v1369 = vmul.f32 %v1299, %v1364
        %v1370 = vmul.f32 %v1300, %v1364
        %v1371 = vmul.f32 %v1301, %v1364
        %v1372 = vmul.f32 %v1302, %v1364
        %v1373 = vmul.f32 %v1303, %v1364
        %v1374 = vmul.f32 %v1304, %v1364
        %v1375 = vmul.f32 %v1305, %v1364
        %v1376 = vmul.f32 %v1306, %v1364
        %v1377 = vmul.f32 %v1307, %v1364
        %v1378 = vmul.f32 %v1308, %v1364
        %v1379 = vmul.f32 %v1309, %v1364
        %v1380 = vmul.f32 %v1310, %v1364
        %v1381 = vmul.f32 %v1311, %v1364
        %v1382 = vmul.f32 %v1312, %v1364
        %v1383 = vmul.f32 %v1313, %v1364
        %v1384 = vmul.f32 %v1314, %v1364
        %v1385 = vmul.f32 %v1315, %v1364
        %v1386 = vmul.f32 %v1316, %v1364
        %v1387 = vmul.f32 %v1317, %v1364
        %v1388 = vmul.f32 %v1318, %v1364
        %v1389 = vmul.f32 %v1319, %v1364
        %v1390 = vmul.f32 %v1320, %v1364
        %v1391 = vmul.f32 %v1321, %v1364
        %v1392 = vmul.f32 %v1322, %v1364
        %v1393 = vmul.f32 %v1323, %v1364
        %v1394 = vmul.f32 %v1324, %v1364
        %v1395 = vmul.f32 %v1325, %v1364
        %v1396 = vmul.f32 %v1326, %v1364
        %v1397 = vmul.f32 %v1327, %v1364
        %v1398 = vmul.f32 %v1328, %v1364
        %v1399 = vmul.f32 %v1329, %v1364
        %v1400 = vmul.f32 %v1330, %v1364
        %v1401 = vmul.f32 %v1331, %v1364
        %v1402 = vmul.f32 %v1332, %v1364
        %v1403 = vmul.f32 %v1333, %v1364
        %v1404 = vmul.f32 %v1334, %v1364
        %v1405 = vmul.f32 %v1335, %v1364
        %v1406 = vmul.f32 %v1336, %v1364
        %v1407 = vmul.f32 %v1337, %v1364
        %v1408 = vmul.f32 %v1338, %v1364
        %v1409 = vmul.f32 %v1339, %v1364
        %v1410 = vmul.f32 %v1340, %v1364
        %v1411 = vmul.f32 %v1341, %v1364
        %v1412 = vmul.f32 %v1342, %v1364
        %v1413 = vmul.f32 %v1343, %v1364
        %v1414 = vmul.f32 %v1344, %v1364
        %v1415 = vmul.f32 %v1345, %v1364
        %v1416 = vmul.f32 %v1346, %v1364
        %v1417 = vmul.f32 %v1347, %v1364
        %v1418 = vmul.f32 %v1348, %v1364
        %v1419 = vmul.f32 %v1349, %v1364
        %v1420 = vmul.f32 %v1350, %v1364
        %v1421 = vmul.f32 %v1351, %v1364
        %v1422 = vmul.f32 %v1352, %v1364
        %v1423 = vmul.f32 %v1353, %v1364
        %v1424 = vmul.f32 %v1354, %v1364
        %v1425 = vmul.f32 %v1355, %v1364
        %v1426 = vmul.f32 %v1356, %v1364
        %v1427 = vmul.f32 %v1357, %v1364
        %v1428 = vmul.f32 %v1358, %v1364
        %v1429 = vmul.f32 %v1359, %v1364
        %v1431 = vlaneseq
        %v1432 = vshrl.u32 %v1431, 7
        %v1433 = vsub.s32 0, %v1432
        %v1434 = vrot.slane %v525, %v1433
        %v1436 = vadd.f32 %v1366, %v1434
        %v1437 = vadd.f32 %v1367, %v1434
        %v1438 = vadd.f32 %v1368, %v1434
        %v1439 = vadd.f32 %v1369, %v1434
        %v1440 = vadd.f32 %v1370, %v1434
        %v1441 = vadd.f32 %v1371, %v1434
        %v1442 = vadd.f32 %v1372, %v1434
        %v1443 = vadd.f32 %v1373, %v1434
        %v1444 = vadd.f32 %v1374, %v1434
        %v1445 = vadd.f32 %v1375, %v1434
        %v1446 = vadd.f32 %v1376, %v1434
        %v1447 = vadd.f32 %v1377, %v1434
        %v1448 = vadd.f32 %v1378, %v1434
        %v1449 = vadd.f32 %v1379, %v1434
        %v1450 = vadd.f32 %v1380, %v1434
        %v1451 = vadd.f32 %v1381, %v1434
        %v1452 = vadd.f32 %v1382, %v1434
        %v1453 = vadd.f32 %v1383, %v1434
        %v1454 = vadd.f32 %v1384, %v1434
        %v1455 = vadd.f32 %v1385, %v1434
        %v1456 = vadd.f32 %v1386, %v1434
        %v1457 = vadd.f32 %v1387, %v1434
        %v1458 = vadd.f32 %v1388, %v1434
        %v1459 = vadd.f32 %v1389, %v1434
        %v1460 = vadd.f32 %v1390, %v1434
        %v1461 = vadd.f32 %v1391, %v1434
        %v1462 = vadd.f32 %v1392, %v1434
        %v1463 = vadd.f32 %v1393, %v1434
        %v1464 = vadd.f32 %v1394, %v1434
        %v1465 = vadd.f32 %v1395, %v1434
        %v1466 = vadd.f32 %v1396, %v1434
        %v1467 = vadd.f32 %v1397, %v1434
        %v1468 = vadd.f32 %v1398, %v1434
        %v1469 = vadd.f32 %v1399, %v1434
        %v1470 = vadd.f32 %v1400, %v1434
        %v1471 = vadd.f32 %v1401, %v1434
        %v1472 = vadd.f32 %v1402, %v1434
        %v1473 = vadd.f32 %v1403, %v1434
        %v1474 = vadd.f32 %v1404, %v1434
        %v1475 = vadd.f32 %v1405, %v1434
        %v1476 = vadd.f32 %v1406, %v1434
        %v1477 = vadd.f32 %v1407, %v1434
        %v1478 = vadd.f32 %v1408, %v1434
        %v1479 = vadd.f32 %v1409, %v1434
        %v1480 = vadd.f32 %v1410, %v1434
        %v1481 = vadd.f32 %v1411, %v1434
        %v1482 = vadd.f32 %v1412, %v1434
        %v1483 = vadd.f32 %v1413, %v1434
        %v1484 = vadd.f32 %v1414, %v1434
        %v1485 = vadd.f32 %v1415, %v1434
        %v1486 = vadd.f32 %v1416, %v1434
        %v1487 = vadd.f32 %v1417, %v1434
        %v1488 = vadd.f32 %v1418, %v1434
        %v1489 = vadd.f32 %v1419, %v1434
        %v1490 = vadd.f32 %v1420, %v1434
        %v1491 = vadd.f32 %v1421, %v1434
        %v1492 = vadd.f32 %v1422, %v1434
        %v1493 = vadd.f32 %v1423, %v1434
        %v1494 = vadd.f32 %v1424, %v1434
        %v1495 = vadd.f32 %v1425, %v1434
        %v1496 = vadd.f32 %v1426, %v1434
        %v1497 = vadd.f32 %v1427, %v1434
        %v1498 = vadd.f32 %v1428, %v1434
        %v1499 = vadd.f32 %v1429, %v1434
        %v1500 = vpack.c.bf16 %v1437, %v1436
        %v1501 = vpack.c.bf16 %v1439, %v1438
        %v1502 = vpack.c.bf16 %v1441, %v1440
        %v1503 = vpack.c.bf16 %v1443, %v1442
        %v1504 = vpack.c.bf16 %v1445, %v1444
        %v1505 = vpack.c.bf16 %v1447, %v1446
        %v1506 = vpack.c.bf16 %v1449, %v1448
        %v1507 = vpack.c.bf16 %v1451, %v1450
        %v1508 = vpack.c.bf16 %v1453, %v1452
        %v1509 = vpack.c.bf16 %v1455, %v1454
        %v1510 = vpack.c.bf16 %v1457, %v1456
        %v1511 = vpack.c.bf16 %v1459, %v1458
        %v1512 = vpack.c.bf16 %v1461, %v1460
        %v1513 = vpack.c.bf16 %v1463, %v1462
        %v1514 = vpack.c.bf16 %v1465, %v1464
        %v1515 = vpack.c.bf16 %v1467, %v1466
        %v1516 = vpack.c.bf16 %v1469, %v1468
        %v1517 = vpack.c.bf16 %v1471, %v1470
        %v1518 = vpack.c.bf16 %v1473, %v1472
        %v1519 = vpack.c.bf16 %v1475, %v1474
        %v1520 = vpack.c.bf16 %v1477, %v1476
        %v1521 = vpack.c.bf16 %v1479, %v1478
        %v1522 = vpack.c.bf16 %v1481, %v1480
        %v1523 = vpack.c.bf16 %v1483, %v1482
        %v1524 = vpack.c.bf16 %v1485, %v1484
        %v1525 = vpack.c.bf16 %v1487, %v1486
        %v1526 = vpack.c.bf16 %v1489, %v1488
        %v1527 = vpack.c.bf16 %v1491, %v1490
        %v1528 = vpack.c.bf16 %v1493, %v1492
        %v1529 = vpack.c.bf16 %v1495, %v1494
        %v1530 = vpack.c.bf16 %v1497, %v1496
        %v1531 = vpack.c.bf16 %v1499, %v1498
        %v1532 = vld [vmem:[%s3] sm:$0xf]
        %v1533 = vld [vmem:[%s3 + $0x4] sm:$0xf]
        %v1534 = vld [vmem:[%s3 + $0x8] sm:$0xf]
        %v1535 = vld [vmem:[%s3 + $0xc] sm:$0xf]
        %v1540 = vunpack.c.l.b16 %v1532
        %v1541 = vunpack.c.l.b16 %v1533
        %v1542 = vunpack.c.l.b16 %v1534
        %v1543 = vunpack.c.l.b16 %v1535
        %v1544 = vpack.c.b16 %v1541, %v1540
        %v1545 = vpack.c.b16 %v1543, %v1542
        %v1549 = vsel %vm526, %v1500, 0
        %v1552 = vsel %vm526, %v1501, 0
        %v1555 = vsel %vm526, %v1502, 0
        %v1558 = vsel %vm526, %v1503, 0
        %v1561 = vsel %vm526, %v1504, 0
        %v1564 = vsel %vm526, %v1505, 0
        %v1567 = vsel %vm526, %v1506, 0
        %v1570 = vsel %vm526, %v1507, 0
        %v1573 = vsel %vm526, %v1508, 0
        %v1576 = vsel %vm526, %v1509, 0
        %v1579 = vsel %vm526, %v1510, 0
        %v1582 = vsel %vm526, %v1511, 0
        %v1585 = vsel %vm526, %v1512, 0
        %v1588 = vsel %vm526, %v1513, 0
        %v1591 = vsel %vm526, %v1514, 0
        %v1594 = vsel %vm526, %v1515, 0
        %v1597 = vsel %vm526, %v1516, 0
        %v1600 = vsel %vm526, %v1517, 0
        %v1603 = vsel %vm526, %v1518, 0
        %v1606 = vsel %vm526, %v1519, 0
        %v1609 = vsel %vm526, %v1520, 0
        %v1612 = vsel %vm526, %v1521, 0
        %v1615 = vsel %vm526, %v1522, 0
        %v1618 = vsel %vm526, %v1523, 0
        %v1621 = vsel %vm526, %v1524, 0
        %v1624 = vsel %vm526, %v1525, 0
        %v1627 = vsel %vm526, %v1526, 0
        %v1630 = vsel %vm526, %v1527, 0
        %v1633 = vsel %vm526, %v1528, 0
        %v1636 = vsel %vm526, %v1529, 0
        %v1639 = vsel %vm526, %v1530, 0
        %v1642 = vsel %vm526, %v1531, 0
        %1644 = vmatprep.subr.bf16.mxu0 0
        %1645 = vmatpush1.bf16.msra.mxu0 0
        %1646 = vmatprep.subr.bf16.mxu0 0
        %1647 = vmatpush1.bf16.msra.mxu0 0
        %1648 = vmatprep.subr.bf16.mxu0 0
        %1649 = vmatpush1.bf16.msra.mxu0 0
        %1650 = vmatprep.subr.bf16.mxu0 0
        %1651 = vmatpush1.bf16.msra.mxu0 0
        %1652 = vmatprep.subr.bf16.mxu0 0
        %1653 = vmatpush1.bf16.msra.mxu0 0
        %1654 = vmatprep.subr.bf16.mxu0 0
        %1655 = vmatpush1.bf16.msra.mxu0 0
        %1656 = vmatprep.subr.bf16.mxu0 0
        %1657 = vmatpush1.bf16.msra.mxu0 %v1545
        %1658 = vmatprep.subr.bf16.mxu0 0
        %1659 = vmatpush1.bf16.msra.mxu0 %v1544
        %1660 = vmatprep.subr.bf16.mxu0 0
        %1661 = vmatpush2.bf16.msra.mxu0 0
        %1662 = vmatprep.subr.bf16.mxu0 0
        %1663 = vmatpush2.bf16.msra.mxu0 0
        %1664 = vmatprep.subr.bf16.mxu0 0
        %1665 = vmatpush2.bf16.msra.mxu0 0
        %1666 = vmatprep.subr.bf16.mxu0 0
        %1667 = vmatpush2.bf16.msra.mxu0 0
        %1668 = vmatprep.subr.bf16.mxu0 0
        %1669 = vmatpush2.bf16.msra.mxu0 0
        %1670 = vmatprep.subr.bf16.mxu0 0
        %1671 = vmatpush2.bf16.msra.mxu0 0
        %1672 = vmatprep.subr.bf16.mxu0 0
        %1673 = vmatpush2.bf16.msra.mxu0 0
        %1674 = vmatprep.subr.bf16.mxu0 0
        %1675 = vmatpush2.bf16.msra.mxu0 0
        %1676 = vmatprep.mubr.bf16.mxu0 0
        %1677 = vmatmul.mubr.bf16.gmra.mxu0 %v1549
        %v1678 = vpop.f32.mrf.mxu0
        %v1679 = vadd.f32 0.0, %v1678
        %v1680 = vpop.f32.mrf.mxu0
        %v1681 = vpop.f32.mrf.mxu0
        %v1682 = vadd.f32 0.0, %v1681
        %v1683 = vpop.f32.mrf.mxu0
        %1684 = vmatprep.mubr.bf16.mxu0 0
        %1685 = vmatmul.mubr.bf16.gmra.mxu0 %v1552
        %v1686 = vpop.f32.mrf.mxu0
        %v1687 = vadd.f32 0.0, %v1686
        %v1688 = vpop.f32.mrf.mxu0
        %v1689 = vpop.f32.mrf.mxu0
        %v1690 = vadd.f32 0.0, %v1689
        %v1691 = vpop.f32.mrf.mxu0
        %1692 = vmatprep.mubr.bf16.mxu0 0
        %1693 = vmatmul.mubr.bf16.gmra.mxu0 %v1555
        %v1694 = vpop.f32.mrf.mxu0
        %v1695 = vadd.f32 0.0, %v1694
        %v1696 = vpop.f32.mrf.mxu0
        %v1697 = vpop.f32.mrf.mxu0
        %v1698 = vadd.f32 0.0, %v1697
        %v1699 = vpop.f32.mrf.mxu0
        %1700 = vmatprep.mubr.bf16.mxu0 0
        %1701 = vmatmul.mubr.bf16.gmra.mxu0 %v1558
        %v1702 = vpop.f32.mrf.mxu0
        %v1703 = vadd.f32 0.0, %v1702
        %v1704 = vpop.f32.mrf.mxu0
        %v1705 = vpop.f32.mrf.mxu0
        %v1706 = vadd.f32 0.0, %v1705
        %v1707 = vpop.f32.mrf.mxu0
        %1708 = vmatprep.mubr.bf16.mxu0 0
        %1709 = vmatmul.mubr.bf16.gmra.mxu0 %v1561
        %v1710 = vpop.f32.mrf.mxu0
        %v1711 = vadd.f32 0.0, %v1710
        %v1712 = vpop.f32.mrf.mxu0
        %v1713 = vpop.f32.mrf.mxu0
        %v1714 = vadd.f32 0.0, %v1713
        %v1715 = vpop.f32.mrf.mxu0
        %1716 = vmatprep.mubr.bf16.mxu0 0
        %1717 = vmatmul.mubr.bf16.gmra.mxu0 %v1564
        %v1718 = vpop.f32.mrf.mxu0
        %v1719 = vadd.f32 0.0, %v1718
        %v1720 = vpop.f32.mrf.mxu0
        %v1721 = vpop.f32.mrf.mxu0
        %v1722 = vadd.f32 0.0, %v1721
        %v1723 = vpop.f32.mrf.mxu0
        %1724 = vmatprep.mubr.bf16.mxu0 0
        %1725 = vmatmul.mubr.bf16.gmra.mxu0 %v1567
        %v1726 = vpop.f32.mrf.mxu0
        %v1727 = vadd.f32 0.0, %v1726
        %v1728 = vpop.f32.mrf.mxu0
        %v1729 = vpop.f32.mrf.mxu0
        %v1730 = vadd.f32 0.0, %v1729
        %v1731 = vpop.f32.mrf.mxu0
        %1732 = vmatprep.mubr.bf16.mxu0 0
        %1733 = vmatmul.mubr.bf16.gmra.mxu0 %v1570
        %v1734 = vpop.f32.mrf.mxu0
        %v1735 = vadd.f32 0.0, %v1734
        %v1736 = vpop.f32.mrf.mxu0
        %v1737 = vpop.f32.mrf.mxu0
        %v1738 = vadd.f32 0.0, %v1737
        %v1739 = vpop.f32.mrf.mxu0
        %1740 = vmatprep.mubr.bf16.mxu0 0
        %1741 = vmatmul.mubr.bf16.gmra.mxu0 %v1573
        %v1742 = vpop.f32.mrf.mxu0
        %v1743 = vadd.f32 0.0, %v1742
        %v1744 = vpop.f32.mrf.mxu0
        %v1745 = vpop.f32.mrf.mxu0
        %v1746 = vadd.f32 0.0, %v1745
        %v1747 = vpop.f32.mrf.mxu0
        %1748 = vmatprep.mubr.bf16.mxu0 0
        %1749 = vmatmul.mubr.bf16.gmra.mxu0 %v1576
        %v1750 = vpop.f32.mrf.mxu0
        %v1751 = vadd.f32 0.0, %v1750
        %v1752 = vpop.f32.mrf.mxu0
        %v1753 = vpop.f32.mrf.mxu0
        %v1754 = vadd.f32 0.0, %v1753
        %v1755 = vpop.f32.mrf.mxu0
        %1756 = vmatprep.mubr.bf16.mxu0 0
        %1757 = vmatmul.mubr.bf16.gmra.mxu0 %v1579
        %v1758 = vpop.f32.mrf.mxu0
        %v1759 = vadd.f32 0.0, %v1758
        %v1760 = vpop.f32.mrf.mxu0
        %v1761 = vpop.f32.mrf.mxu0
        %v1762 = vadd.f32 0.0, %v1761
        %v1763 = vpop.f32.mrf.mxu0
        %1764 = vmatprep.mubr.bf16.mxu0 0
        %1765 = vmatmul.mubr.bf16.gmra.mxu0 %v1582
        %v1766 = vpop.f32.mrf.mxu0
        %v1767 = vadd.f32 0.0, %v1766
        %v1768 = vpop.f32.mrf.mxu0
        %v1769 = vpop.f32.mrf.mxu0
        %v1770 = vadd.f32 0.0, %v1769
        %v1771 = vpop.f32.mrf.mxu0
        %1772 = vmatprep.mubr.bf16.mxu0 0
        %1773 = vmatmul.mubr.bf16.gmra.mxu0 %v1585
        %v1774 = vpop.f32.mrf.mxu0
        %v1775 = vadd.f32 0.0, %v1774
        %v1776 = vpop.f32.mrf.mxu0
        %v1777 = vpop.f32.mrf.mxu0
        %v1778 = vadd.f32 0.0, %v1777
        %v1779 = vpop.f32.mrf.mxu0
        %1780 = vmatprep.mubr.bf16.mxu0 0
        %1781 = vmatmul.mubr.bf16.gmra.mxu0 %v1588
        %v1782 = vpop.f32.mrf.mxu0
        %v1783 = vadd.f32 0.0, %v1782
        %v1784 = vpop.f32.mrf.mxu0
        %v1785 = vpop.f32.mrf.mxu0
        %v1786 = vadd.f32 0.0, %v1785
        %v1787 = vpop.f32.mrf.mxu0
        %1788 = vmatprep.mubr.bf16.mxu0 0
        %1789 = vmatmul.mubr.bf16.gmra.mxu0 %v1591
        %v1790 = vpop.f32.mrf.mxu0
        %v1791 = vadd.f32 0.0, %v1790
        %v1792 = vpop.f32.mrf.mxu0
        %v1793 = vpop.f32.mrf.mxu0
        %v1794 = vadd.f32 0.0, %v1793
        %v1795 = vpop.f32.mrf.mxu0
        %1796 = vmatprep.mubr.bf16.mxu0 0
        %1797 = vmatmul.mubr.bf16.gmra.mxu0 %v1594
        %v1798 = vpop.f32.mrf.mxu0
        %v1799 = vadd.f32 0.0, %v1798
        %v1800 = vpop.f32.mrf.mxu0
        %v1801 = vpop.f32.mrf.mxu0
        %v1802 = vadd.f32 0.0, %v1801
        %v1803 = vpop.f32.mrf.mxu0
        %1804 = vmatprep.mubr.bf16.mxu0 0
        %1805 = vmatmul.mubr.bf16.gmra.mxu0 %v1597
        %v1806 = vpop.f32.mrf.mxu0
        %v1807 = vadd.f32 0.0, %v1806
        %v1808 = vpop.f32.mrf.mxu0
        %v1809 = vpop.f32.mrf.mxu0
        %v1810 = vadd.f32 0.0, %v1809
        %v1811 = vpop.f32.mrf.mxu0
        %1812 = vmatprep.mubr.bf16.mxu0 0
        %1813 = vmatmul.mubr.bf16.gmra.mxu0 %v1600
        %v1814 = vpop.f32.mrf.mxu0
        %v1815 = vadd.f32 0.0, %v1814
        %v1816 = vpop.f32.mrf.mxu0
        %v1817 = vpop.f32.mrf.mxu0
        %v1818 = vadd.f32 0.0, %v1817
        %v1819 = vpop.f32.mrf.mxu0
        %1820 = vmatprep.mubr.bf16.mxu0 0
        %1821 = vmatmul.mubr.bf16.gmra.mxu0 %v1603
        %v1822 = vpop.f32.mrf.mxu0
        %v1823 = vadd.f32 0.0, %v1822
        %v1824 = vpop.f32.mrf.mxu0
        %v1825 = vpop.f32.mrf.mxu0
        %v1826 = vadd.f32 0.0, %v1825
        %v1827 = vpop.f32.mrf.mxu0
        %1828 = vmatprep.mubr.bf16.mxu0 0
        %1829 = vmatmul.mubr.bf16.gmra.mxu0 %v1606
        %v1830 = vpop.f32.mrf.mxu0
        %v1831 = vadd.f32 0.0, %v1830
        %v1832 = vpop.f32.mrf.mxu0
        %v1833 = vpop.f32.mrf.mxu0
        %v1834 = vadd.f32 0.0, %v1833
        %v1835 = vpop.f32.mrf.mxu0
        %1836 = vmatprep.mubr.bf16.mxu0 0
        %1837 = vmatmul.mubr.bf16.gmra.mxu0 %v1609
        %v1838 = vpop.f32.mrf.mxu0
        %v1839 = vadd.f32 0.0, %v1838
        %v1840 = vpop.f32.mrf.mxu0
        %v1841 = vpop.f32.mrf.mxu0
        %v1842 = vadd.f32 0.0, %v1841
        %v1843 = vpop.f32.mrf.mxu0
        %1844 = vmatprep.mubr.bf16.mxu0 0
        %1845 = vmatmul.mubr.bf16.gmra.mxu0 %v1612
        %v1846 = vpop.f32.mrf.mxu0
        %v1847 = vadd.f32 0.0, %v1846
        %v1848 = vpop.f32.mrf.mxu0
        %v1849 = vpop.f32.mrf.mxu0
        %v1850 = vadd.f32 0.0, %v1849
        %v1851 = vpop.f32.mrf.mxu0
        %1852 = vmatprep.mubr.bf16.mxu0 0
        %1853 = vmatmul.mubr.bf16.gmra.mxu0 %v1615
        %v1854 = vpop.f32.mrf.mxu0
        %v1855 = vadd.f32 0.0, %v1854
        %v1856 = vpop.f32.mrf.mxu0
        %v1857 = vpop.f32.mrf.mxu0
        %v1858 = vadd.f32 0.0, %v1857
        %v1859 = vpop.f32.mrf.mxu0
        %1860 = vmatprep.mubr.bf16.mxu0 0
        %1861 = vmatmul.mubr.bf16.gmra.mxu0 %v1618
        %v1862 = vpop.f32.mrf.mxu0
        %v1863 = vadd.f32 0.0, %v1862
        %v1864 = vpop.f32.mrf.mxu0
        %v1865 = vpop.f32.mrf.mxu0
        %v1866 = vadd.f32 0.0, %v1865
        %v1867 = vpop.f32.mrf.mxu0
        %1868 = vmatprep.mubr.bf16.mxu0 0
        %1869 = vmatmul.mubr.bf16.gmra.mxu0 %v1621
        %v1870 = vpop.f32.mrf.mxu0
        %v1871 = vadd.f32 0.0, %v1870
        %v1872 = vpop.f32.mrf.mxu0
        %v1873 = vpop.f32.mrf.mxu0
        %v1874 = vadd.f32 0.0, %v1873
        %v1875 = vpop.f32.mrf.mxu0
        %1876 = vmatprep.mubr.bf16.mxu0 0
        %1877 = vmatmul.mubr.bf16.gmra.mxu0 %v1624
        %v1878 = vpop.f32.mrf.mxu0
        %v1879 = vadd.f32 0.0, %v1878
        %v1880 = vpop.f32.mrf.mxu0
        %v1881 = vpop.f32.mrf.mxu0
        %v1882 = vadd.f32 0.0, %v1881
        %v1883 = vpop.f32.mrf.mxu0
        %1884 = vmatprep.mubr.bf16.mxu0 0
        %1885 = vmatmul.mubr.bf16.gmra.mxu0 %v1627
        %v1886 = vpop.f32.mrf.mxu0
        %v1887 = vadd.f32 0.0, %v1886
        %v1888 = vpop.f32.mrf.mxu0
        %v1889 = vpop.f32.mrf.mxu0
        %v1890 = vadd.f32 0.0, %v1889
        %v1891 = vpop.f32.mrf.mxu0
        %1892 = vmatprep.mubr.bf16.mxu0 0
        %1893 = vmatmul.mubr.bf16.gmra.mxu0 %v1630
        %v1894 = vpop.f32.mrf.mxu0
        %v1895 = vadd.f32 0.0, %v1894
        %v1896 = vpop.f32.mrf.mxu0
        %v1897 = vpop.f32.mrf.mxu0
        %v1898 = vadd.f32 0.0, %v1897
        %v1899 = vpop.f32.mrf.mxu0
        %1900 = vmatprep.mubr.bf16.mxu0 0
        %1901 = vmatmul.mubr.bf16.gmra.mxu0 %v1633
        %v1902 = vpop.f32.mrf.mxu0
        %v1903 = vadd.f32 0.0, %v1902
        %v1904 = vpop.f32.mrf.mxu0
        %v1905 = vpop.f32.mrf.mxu0
        %v1906 = vadd.f32 0.0, %v1905
        %v1907 = vpop.f32.mrf.mxu0
        %1908 = vmatprep.mubr.bf16.mxu0 0
        %1909 = vmatmul.mubr.bf16.gmra.mxu0 %v1636
        %v1910 = vpop.f32.mrf.mxu0
        %v1911 = vadd.f32 0.0, %v1910
        %v1912 = vpop.f32.mrf.mxu0
        %v1913 = vpop.f32.mrf.mxu0
        %v1914 = vadd.f32 0.0, %v1913
        %v1915 = vpop.f32.mrf.mxu0
        %1916 = vmatprep.mubr.bf16.mxu0 0
        %1917 = vmatmul.mubr.bf16.gmra.mxu0 %v1639
        %v1918 = vpop.f32.mrf.mxu0
        %v1919 = vadd.f32 0.0, %v1918
        %v1920 = vpop.f32.mrf.mxu0
        %v1921 = vpop.f32.mrf.mxu0
        %v1922 = vadd.f32 0.0, %v1921
        %v1923 = vpop.f32.mrf.mxu0
        %1924 = vmatprep.mubr.bf16.mxu0 0
        %1925 = vmatmul.mubr.bf16.gmra.mxu0 %v1642
        %v1926 = vpop.f32.mrf.mxu0
        %v1927 = vadd.f32 0.0, %v1926
        %v1928 = vpop.f32.mrf.mxu0
        %v1929 = vpop.f32.mrf.mxu0
        %v1930 = vadd.f32 0.0, %v1929
        %v1931 = vpop.f32.mrf.mxu0
        %1932 = vdwg.mxu0
        %v1933 = vpack.c.bf16 %v1682, %v1679
        %v1934 = vpack.c.bf16 %v1690, %v1687
        %v1935 = vpack.c.bf16 %v1698, %v1695
        %v1936 = vpack.c.bf16 %v1706, %v1703
        %v1937 = vpack.c.bf16 %v1714, %v1711
        %v1938 = vpack.c.bf16 %v1722, %v1719
        %v1939 = vpack.c.bf16 %v1730, %v1727
        %v1940 = vpack.c.bf16 %v1738, %v1735
        %v1941 = vpack.c.bf16 %v1746, %v1743
        %v1942 = vpack.c.bf16 %v1754, %v1751
        %v1943 = vpack.c.bf16 %v1762, %v1759
        %v1944 = vpack.c.bf16 %v1770, %v1767
        %v1945 = vpack.c.bf16 %v1778, %v1775
        %v1946 = vpack.c.bf16 %v1786, %v1783
        %v1947 = vpack.c.bf16 %v1794, %v1791
        %v1948 = vpack.c.bf16 %v1802, %v1799
        %v1949 = vpack.c.bf16 %v1810, %v1807
        %v1950 = vpack.c.bf16 %v1818, %v1815
        %v1951 = vpack.c.bf16 %v1826, %v1823
        %v1952 = vpack.c.bf16 %v1834, %v1831
        %v1953 = vpack.c.bf16 %v1842, %v1839
        %v1954 = vpack.c.bf16 %v1850, %v1847
        %v1955 = vpack.c.bf16 %v1858, %v1855
        %v1956 = vpack.c.bf16 %v1866, %v1863
        %v1957 = vpack.c.bf16 %v1874, %v1871
        %v1958 = vpack.c.bf16 %v1882, %v1879
        %v1959 = vpack.c.bf16 %v1890, %v1887
        %v1960 = vpack.c.bf16 %v1898, %v1895
        %v1961 = vpack.c.bf16 %v1906, %v1903
        %v1962 = vpack.c.bf16 %v1914, %v1911
        %v1963 = vpack.c.bf16 %v1922, %v1919
        %v1964 = vpack.c.bf16 %v1930, %v1927
        %1973 = vrot.lane.b32.xlu0 %v1933, 96
        %v1974 = vpop.permute.xlu0 %1973
        %1975 = vrot.lane.b32.xlu0 %v1934, 96
        %v1976 = vpop.permute.xlu0 %1975
        %1977 = vrot.lane.b32.xlu0 %v1935, 96
        %v1978 = vpop.permute.xlu0 %1977
        %1979 = vrot.lane.b32.xlu0 %v1936, 96
        %v1980 = vpop.permute.xlu0 %1979
        %1981 = vrot.lane.b32.xlu0 %v1937, 96
        %v1982 = vpop.permute.xlu0 %1981
        %1983 = vrot.lane.b32.xlu0 %v1938, 96
        %v1984 = vpop.permute.xlu0 %1983
        %1985 = vrot.lane.b32.xlu0 %v1939, 96
        %v1986 = vpop.permute.xlu0 %1985
        %1987 = vrot.lane.b32.xlu0 %v1940, 96
        %v1988 = vpop.permute.xlu0 %1987
        %v1990 = vsel %vm526, %v1933, 0
        %v1993 = vsel %vm526, %v1934, 0
        %v1996 = vsel %vm526, %v1935, 0
        %v1999 = vsel %vm526, %v1936, 0
        %v2002 = vsel %vm526, %v1937, 0
        %v2005 = vsel %vm526, %v1938, 0
        %v2008 = vsel %vm526, %v1939, 0
        %v2011 = vsel %vm526, %v1940, 0
        %v2014 = vsel %vm526, %v1974, 0
        %v2017 = vsel %vm526, %v1976, 0
        %v2020 = vsel %vm526, %v1978, 0
        %v2023 = vsel %vm526, %v1980, 0
        %v2026 = vsel %vm526, %v1982, 0
        %v2029 = vsel %vm526, %v1984, 0
        %v2032 = vsel %vm526, %v1986, 0
        %v2035 = vsel %vm526, %v1988, 0
        %2037 = vmatprep.subr.bf16.mxu0 0
        %2038 = vmatpush1.bf16.xpose.msra.mxu0 %v2035
        %2039 = vmatprep.subr.bf16.mxu0 0
        %2040 = vmatpush1.bf16.xpose.msra.mxu0 %v2032
        %2041 = vmatprep.subr.bf16.mxu0 0
        %2042 = vmatpush1.bf16.xpose.msra.mxu0 %v2029
        %2043 = vmatprep.subr.bf16.mxu0 0
        %2044 = vmatpush1.bf16.xpose.msra.mxu0 %v2026
        %2045 = vmatprep.subr.bf16.mxu0 0
        %2046 = vmatpush1.bf16.xpose.msra.mxu0 %v2023
        %2047 = vmatprep.subr.bf16.mxu0 0
        %2048 = vmatpush1.bf16.xpose.msra.mxu0 %v2020
        %2049 = vmatprep.subr.bf16.mxu0 0
        %2050 = vmatpush1.bf16.xpose.msra.mxu0 %v2017
        %2051 = vmatprep.subr.bf16.mxu0 0
        %2052 = vmatpush1.bf16.xpose.msra.mxu0 %v2014
        %2053 = vmatprep.subr.bf16.mxu0 0
        %2054 = vmatpush2.bf16.xpose.msra.mxu0 0
        %2055 = vmatprep.subr.bf16.mxu0 0
        %2056 = vmatpush2.bf16.xpose.msra.mxu0 0
        %2057 = vmatprep.subr.bf16.mxu0 0
        %2058 = vmatpush2.bf16.xpose.msra.mxu0 0
        %2059 = vmatprep.subr.bf16.mxu0 0
        %2060 = vmatpush2.bf16.xpose.msra.mxu0 0
        %2061 = vmatprep.subr.bf16.mxu0 0
        %2062 = vmatpush2.bf16.xpose.msra.mxu0 0
        %2063 = vmatprep.subr.bf16.mxu0 0
        %2064 = vmatpush2.bf16.xpose.msra.mxu0 0
        %2065 = vmatprep.subr.bf16.mxu0 0
        %2066 = vmatpush2.bf16.xpose.msra.mxu0 0
        %2067 = vmatprep.subr.bf16.mxu0 0
        %2068 = vmatpush2.bf16.xpose.msra.mxu0 0
        %2069 = vmatprep.mubr.bf16.mxu0 0
        %2070 = vmatmul.mubr.bf16.gmra.mxu0 %v1990
        %v2071 = vpop.f32.mrf.mxu0
        %v2072 = vadd.f32 0.0, %v2071
        %v2073 = vpop.f32.mrf.mxu0
        %v2074 = vpop.f32.mrf.mxu0
        %v2075 = vadd.f32 0.0, %v2074
        %v2076 = vpop.f32.mrf.mxu0
        %2077 = vmatprep.mubr.bf16.mxu0 0
        %2078 = vmatmul.mubr.bf16.gmra.mxu0 %v1993
        %v2079 = vpop.f32.mrf.mxu0
        %v2080 = vadd.f32 0.0, %v2079
        %v2081 = vpop.f32.mrf.mxu0
        %v2082 = vpop.f32.mrf.mxu0
        %v2083 = vadd.f32 0.0, %v2082
        %v2084 = vpop.f32.mrf.mxu0
        %2085 = vmatprep.mubr.bf16.mxu0 0
        %2086 = vmatmul.mubr.bf16.gmra.mxu0 %v1996
        %v2087 = vpop.f32.mrf.mxu0
        %v2088 = vadd.f32 0.0, %v2087
        %v2089 = vpop.f32.mrf.mxu0
        %v2090 = vpop.f32.mrf.mxu0
        %v2091 = vadd.f32 0.0, %v2090
        %v2092 = vpop.f32.mrf.mxu0
        %2093 = vmatprep.mubr.bf16.mxu0 0
        %2094 = vmatmul.mubr.bf16.gmra.mxu0 %v1999
        %v2095 = vpop.f32.mrf.mxu0
        %v2096 = vadd.f32 0.0, %v2095
        %v2097 = vpop.f32.mrf.mxu0
        %v2098 = vpop.f32.mrf.mxu0
        %v2099 = vadd.f32 0.0, %v2098
        %v2100 = vpop.f32.mrf.mxu0
        %2101 = vmatprep.mubr.bf16.mxu0 0
        %2102 = vmatmul.mubr.bf16.gmra.mxu0 %v2002
        %v2103 = vpop.f32.mrf.mxu0
        %v2104 = vadd.f32 0.0, %v2103
        %v2105 = vpop.f32.mrf.mxu0
        %v2106 = vpop.f32.mrf.mxu0
        %v2107 = vadd.f32 0.0, %v2106
        %v2108 = vpop.f32.mrf.mxu0
        %2109 = vmatprep.mubr.bf16.mxu0 0
        %2110 = vmatmul.mubr.bf16.gmra.mxu0 %v2005
        %v2111 = vpop.f32.mrf.mxu0
        %v2112 = vadd.f32 0.0, %v2111
        %v2113 = vpop.f32.mrf.mxu0
        %v2114 = vpop.f32.mrf.mxu0
        %v2115 = vadd.f32 0.0, %v2114
        %v2116 = vpop.f32.mrf.mxu0
        %2117 = vmatprep.mubr.bf16.mxu0 0
        %2118 = vmatmul.mubr.bf16.gmra.mxu0 %v2008
        %v2119 = vpop.f32.mrf.mxu0
        %v2120 = vadd.f32 0.0, %v2119
        %v2121 = vpop.f32.mrf.mxu0
        %v2122 = vpop.f32.mrf.mxu0
        %v2123 = vadd.f32 0.0, %v2122
        %v2124 = vpop.f32.mrf.mxu0
        %2125 = vmatprep.mubr.bf16.mxu0 0
        %2126 = vmatmul.mubr.bf16.gmra.mxu0 %v2011
        %v2127 = vpop.f32.mrf.mxu0
        %v2128 = vadd.f32 0.0, %v2127
        %v2129 = vpop.f32.mrf.mxu0
        %v2130 = vpop.f32.mrf.mxu0
        %v2131 = vadd.f32 0.0, %v2130
        %v2132 = vpop.f32.mrf.mxu0
        %2133 = vdwg.mxu0
        %2142 = vrot.lane.b32.xlu0 %v1941, 96
        %v2143 = vpop.permute.xlu0 %2142
        %2144 = vrot.lane.b32.xlu0 %v1942, 96
        %v2145 = vpop.permute.xlu0 %2144
        %2146 = vrot.lane.b32.xlu0 %v1943, 96
        %v2147 = vpop.permute.xlu0 %2146
        %2148 = vrot.lane.b32.xlu0 %v1944, 96
        %v2149 = vpop.permute.xlu0 %2148
        %2150 = vrot.lane.b32.xlu0 %v1945, 96
        %v2151 = vpop.permute.xlu0 %2150
        %2152 = vrot.lane.b32.xlu0 %v1946, 96
        %v2153 = vpop.permute.xlu0 %2152
        %2154 = vrot.lane.b32.xlu0 %v1947, 96
        %v2155 = vpop.permute.xlu0 %2154
        %2156 = vrot.lane.b32.xlu0 %v1948, 96
        %v2157 = vpop.permute.xlu0 %2156
        %v2159 = vsel %vm526, %v1941, 0
        %v2162 = vsel %vm526, %v1942, 0
        %v2165 = vsel %vm526, %v1943, 0
        %v2168 = vsel %vm526, %v1944, 0
        %v2171 = vsel %vm526, %v1945, 0
        %v2174 = vsel %vm526, %v1946, 0
        %v2177 = vsel %vm526, %v1947, 0
        %v2180 = vsel %vm526, %v1948, 0
        %v2183 = vsel %vm526, %v2143, 0
        %v2186 = vsel %vm526, %v2145, 0
        %v2189 = vsel %vm526, %v2147, 0
        %v2192 = vsel %vm526, %v2149, 0
        %v2195 = vsel %vm526, %v2151, 0
        %v2198 = vsel %vm526, %v2153, 0
        %v2201 = vsel %vm526, %v2155, 0
        %v2204 = vsel %vm526, %v2157, 0
        %2206 = vmatprep.subr.bf16.mxu0 0
        %2207 = vmatpush1.bf16.xpose.msra.mxu0 %v2204
        %2208 = vmatprep.subr.bf16.mxu0 0
        %2209 = vmatpush1.bf16.xpose.msra.mxu0 %v2201
        %2210 = vmatprep.subr.bf16.mxu0 0
        %2211 = vmatpush1.bf16.xpose.msra.mxu0 %v2198
        %2212 = vmatprep.subr.bf16.mxu0 0
        %2213 = vmatpush1.bf16.xpose.msra.mxu0 %v2195
        %2214 = vmatprep.subr.bf16.mxu0 0
        %2215 = vmatpush1.bf16.xpose.msra.mxu0 %v2192
        %2216 = vmatprep.subr.bf16.mxu0 0
        %2217 = vmatpush1.bf16.xpose.msra.mxu0 %v2189
        %2218 = vmatprep.subr.bf16.mxu0 0
        %2219 = vmatpush1.bf16.xpose.msra.mxu0 %v2186
        %2220 = vmatprep.subr.bf16.mxu0 0
        %2221 = vmatpush1.bf16.xpose.msra.mxu0 %v2183
        %2222 = vmatprep.subr.bf16.mxu0 0
        %2223 = vmatpush2.bf16.xpose.msra.mxu0 0
        %2224 = vmatprep.subr.bf16.mxu0 0
        %2225 = vmatpush2.bf16.xpose.msra.mxu0 0
        %2226 = vmatprep.subr.bf16.mxu0 0
        %2227 = vmatpush2.bf16.xpose.msra.mxu0 0
        %2228 = vmatprep.subr.bf16.mxu0 0
        %2229 = vmatpush2.bf16.xpose.msra.mxu0 0
        %2230 = vmatprep.subr.bf16.mxu0 0
        %2231 = vmatpush2.bf16.xpose.msra.mxu0 0
        %2232 = vmatprep.subr.bf16.mxu0 0
        %2233 = vmatpush2.bf16.xpose.msra.mxu0 0
        %2234 = vmatprep.subr.bf16.mxu0 0
        %2235 = vmatpush2.bf16.xpose.msra.mxu0 0
        %2236 = vmatprep.subr.bf16.mxu0 0
        %2237 = vmatpush2.bf16.xpose.msra.mxu0 0
        %2238 = vmatprep.mubr.bf16.mxu0 0
        %2239 = vmatmul.mubr.bf16.gmra.mxu0 %v2159
        %v2240 = vpop.f32.mrf.mxu0
        %v2241 = vadd.f32 0.0, %v2240
        %v2242 = vpop.f32.mrf.mxu0
        %v2243 = vpop.f32.mrf.mxu0
        %v2244 = vadd.f32 0.0, %v2243
        %v2245 = vpop.f32.mrf.mxu0
        %2246 = vmatprep.mubr.bf16.mxu0 0
        %2247 = vmatmul.mubr.bf16.gmra.mxu0 %v2162
        %v2248 = vpop.f32.mrf.mxu0
        %v2249 = vadd.f32 0.0, %v2248
        %v2250 = vpop.f32.mrf.mxu0
        %v2251 = vpop.f32.mrf.mxu0
        %v2252 = vadd.f32 0.0, %v2251
        %v2253 = vpop.f32.mrf.mxu0
        %2254 = vmatprep.mubr.bf16.mxu0 0
        %2255 = vmatmul.mubr.bf16.gmra.mxu0 %v2165
        %v2256 = vpop.f32.mrf.mxu0
        %v2257 = vadd.f32 0.0, %v2256
        %v2258 = vpop.f32.mrf.mxu0
        %v2259 = vpop.f32.mrf.mxu0
        %v2260 = vadd.f32 0.0, %v2259
        %v2261 = vpop.f32.mrf.mxu0
        %2262 = vmatprep.mubr.bf16.mxu0 0
        %2263 = vmatmul.mubr.bf16.gmra.mxu0 %v2168
        %v2264 = vpop.f32.mrf.mxu0
        %v2265 = vadd.f32 0.0, %v2264
        %v2266 = vpop.f32.mrf.mxu0
        %v2267 = vpop.f32.mrf.mxu0
        %v2268 = vadd.f32 0.0, %v2267
        %v2269 = vpop.f32.mrf.mxu0
        %2270 = vmatprep.mubr.bf16.mxu0 0
        %2271 = vmatmul.mubr.bf16.gmra.mxu0 %v2171
        %v2272 = vpop.f32.mrf.mxu0
        %v2273 = vadd.f32 0.0, %v2272
        %v2274 = vpop.f32.mrf.mxu0
        %v2275 = vpop.f32.mrf.mxu0
        %v2276 = vadd.f32 0.0, %v2275
        %v2277 = vpop.f32.mrf.mxu0
        %2278 = vmatprep.mubr.bf16.mxu0 0
        %2279 = vmatmul.mubr.bf16.gmra.mxu0 %v2174
        %v2280 = vpop.f32.mrf.mxu0
        %v2281 = vadd.f32 0.0, %v2280
        %v2282 = vpop.f32.mrf.mxu0
        %v2283 = vpop.f32.mrf.mxu0
        %v2284 = vadd.f32 0.0, %v2283
        %v2285 = vpop.f32.mrf.mxu0
        %2286 = vmatprep.mubr.bf16.mxu0 0
        %2287 = vmatmul.mubr.bf16.gmra.mxu0 %v2177
        %v2288 = vpop.f32.mrf.mxu0
        %v2289 = vadd.f32 0.0, %v2288
        %v2290 = vpop.f32.mrf.mxu0
        %v2291 = vpop.f32.mrf.mxu0
        %v2292 = vadd.f32 0.0, %v2291
        %v2293 = vpop.f32.mrf.mxu0
        %2294 = vmatprep.mubr.bf16.mxu0 0
        %2295 = vmatmul.mubr.bf16.gmra.mxu0 %v2180
        %v2296 = vpop.f32.mrf.mxu0
        %v2297 = vadd.f32 0.0, %v2296
        %v2298 = vpop.f32.mrf.mxu0
        %v2299 = vpop.f32.mrf.mxu0
        %v2300 = vadd.f32 0.0, %v2299
        %v2301 = vpop.f32.mrf.mxu0
        %2302 = vdwg.mxu0
        %2311 = vrot.lane.b32.xlu0 %v1949, 96
        %v2312 = vpop.permute.xlu0 %2311
        %2313 = vrot.lane.b32.xlu0 %v1950, 96
        %v2314 = vpop.permute.xlu0 %2313
        %2315 = vrot.lane.b32.xlu0 %v1951, 96
        %v2316 = vpop.permute.xlu0 %2315
        %2317 = vrot.lane.b32.xlu0 %v1952, 96
        %v2318 = vpop.permute.xlu0 %2317
        %2319 = vrot.lane.b32.xlu0 %v1953, 96
        %v2320 = vpop.permute.xlu0 %2319
        %2321 = vrot.lane.b32.xlu0 %v1954, 96
        %v2322 = vpop.permute.xlu0 %2321
        %2323 = vrot.lane.b32.xlu0 %v1955, 96
        %v2324 = vpop.permute.xlu0 %2323
        %2325 = vrot.lane.b32.xlu0 %v1956, 96
        %v2326 = vpop.permute.xlu0 %2325
        %v2328 = vsel %vm526, %v1949, 0
        %v2331 = vsel %vm526, %v1950, 0
        %v2334 = vsel %vm526, %v1951, 0
        %v2337 = vsel %vm526, %v1952, 0
        %v2340 = vsel %vm526, %v1953, 0
        %v2343 = vsel %vm526, %v1954, 0
        %v2346 = vsel %vm526, %v1955, 0
        %v2349 = vsel %vm526, %v1956, 0
        %v2352 = vsel %vm526, %v2312, 0
        %v2355 = vsel %vm526, %v2314, 0
        %v2358 = vsel %vm526, %v2316, 0
        %v2361 = vsel %vm526, %v2318, 0
        %v2364 = vsel %vm526, %v2320, 0
        %v2367 = vsel %vm526, %v2322, 0
        %v2370 = vsel %vm526, %v2324, 0
        %v2373 = vsel %vm526, %v2326, 0
        %2375 = vmatprep.subr.bf16.mxu0 0
        %2376 = vmatpush1.bf16.xpose.msra.mxu0 %v2373
        %2377 = vmatprep.subr.bf16.mxu0 0
        %2378 = vmatpush1.bf16.xpose.msra.mxu0 %v2370
        %2379 = vmatprep.subr.bf16.mxu0 0
        %2380 = vmatpush1.bf16.xpose.msra.mxu0 %v2367
        %2381 = vmatprep.subr.bf16.mxu0 0
        %2382 = vmatpush1.bf16.xpose.msra.mxu0 %v2364
        %2383 = vmatprep.subr.bf16.mxu0 0
        %2384 = vmatpush1.bf16.xpose.msra.mxu0 %v2361
        %2385 = vmatprep.subr.bf16.mxu0 0
        %2386 = vmatpush1.bf16.xpose.msra.mxu0 %v2358
        %2387 = vmatprep.subr.bf16.mxu0 0
        %2388 = vmatpush1.bf16.xpose.msra.mxu0 %v2355
        %2389 = vmatprep.subr.bf16.mxu0 0
        %2390 = vmatpush1.bf16.xpose.msra.mxu0 %v2352
        %2391 = vmatprep.subr.bf16.mxu0 0
        %2392 = vmatpush2.bf16.xpose.msra.mxu0 0
        %2393 = vmatprep.subr.bf16.mxu0 0
        %2394 = vmatpush2.bf16.xpose.msra.mxu0 0
        %2395 = vmatprep.subr.bf16.mxu0 0
        %2396 = vmatpush2.bf16.xpose.msra.mxu0 0
        %2397 = vmatprep.subr.bf16.mxu0 0
        %2398 = vmatpush2.bf16.xpose.msra.mxu0 0
        %2399 = vmatprep.subr.bf16.mxu0 0
        %2400 = vmatpush2.bf16.xpose.msra.mxu0 0
        %2401 = vmatprep.subr.bf16.mxu0 0
        %2402 = vmatpush2.bf16.xpose.msra.mxu0 0
        %2403 = vmatprep.subr.bf16.mxu0 0
        %2404 = vmatpush2.bf16.xpose.msra.mxu0 0
        %2405 = vmatprep.subr.bf16.mxu0 0
        %2406 = vmatpush2.bf16.xpose.msra.mxu0 0
        %2407 = vmatprep.mubr.bf16.mxu0 0
        %2408 = vmatmul.mubr.bf16.gmra.mxu0 %v2328
        %v2409 = vpop.f32.mrf.mxu0
        %v2410 = vadd.f32 0.0, %v2409
        %v2411 = vpop.f32.mrf.mxu0
        %v2412 = vpop.f32.mrf.mxu0
        %v2413 = vadd.f32 0.0, %v2412
        %v2414 = vpop.f32.mrf.mxu0
        %2415 = vmatprep.mubr.bf16.mxu0 0
        %2416 = vmatmul.mubr.bf16.gmra.mxu0 %v2331
        %v2417 = vpop.f32.mrf.mxu0
        %v2418 = vadd.f32 0.0, %v2417
        %v2419 = vpop.f32.mrf.mxu0
        %v2420 = vpop.f32.mrf.mxu0
        %v2421 = vadd.f32 0.0, %v2420
        %v2422 = vpop.f32.mrf.mxu0
        %2423 = vmatprep.mubr.bf16.mxu0 0
        %2424 = vmatmul.mubr.bf16.gmra.mxu0 %v2334
        %v2425 = vpop.f32.mrf.mxu0
        %v2426 = vadd.f32 0.0, %v2425
        %v2427 = vpop.f32.mrf.mxu0
        %v2428 = vpop.f32.mrf.mxu0
        %v2429 = vadd.f32 0.0, %v2428
        %v2430 = vpop.f32.mrf.mxu0
        %2431 = vmatprep.mubr.bf16.mxu0 0
        %2432 = vmatmul.mubr.bf16.gmra.mxu0 %v2337
        %v2433 = vpop.f32.mrf.mxu0
        %v2434 = vadd.f32 0.0, %v2433
        %v2435 = vpop.f32.mrf.mxu0
        %v2436 = vpop.f32.mrf.mxu0
        %v2437 = vadd.f32 0.0, %v2436
        %v2438 = vpop.f32.mrf.mxu0
        %2439 = vmatprep.mubr.bf16.mxu0 0
        %2440 = vmatmul.mubr.bf16.gmra.mxu0 %v2340
        %v2441 = vpop.f32.mrf.mxu0
        %v2442 = vadd.f32 0.0, %v2441
        %v2443 = vpop.f32.mrf.mxu0
        %v2444 = vpop.f32.mrf.mxu0
        %v2445 = vadd.f32 0.0, %v2444
        %v2446 = vpop.f32.mrf.mxu0
        %2447 = vmatprep.mubr.bf16.mxu0 0
        %2448 = vmatmul.mubr.bf16.gmra.mxu0 %v2343
        %v2449 = vpop.f32.mrf.mxu0
        %v2450 = vadd.f32 0.0, %v2449
        %v2451 = vpop.f32.mrf.mxu0
        %v2452 = vpop.f32.mrf.mxu0
        %v2453 = vadd.f32 0.0, %v2452
        %v2454 = vpop.f32.mrf.mxu0
        %2455 = vmatprep.mubr.bf16.mxu0 0
        %2456 = vmatmul.mubr.bf16.gmra.mxu0 %v2346
        %v2457 = vpop.f32.mrf.mxu0
        %v2458 = vadd.f32 0.0, %v2457
        %v2459 = vpop.f32.mrf.mxu0
        %v2460 = vpop.f32.mrf.mxu0
        %v2461 = vadd.f32 0.0, %v2460
        %v2462 = vpop.f32.mrf.mxu0
        %2463 = vmatprep.mubr.bf16.mxu0 0
        %2464 = vmatmul.mubr.bf16.gmra.mxu0 %v2349
        %v2465 = vpop.f32.mrf.mxu0
        %v2466 = vadd.f32 0.0, %v2465
        %v2467 = vpop.f32.mrf.mxu0
        %v2468 = vpop.f32.mrf.mxu0
        %v2469 = vadd.f32 0.0, %v2468
        %v2470 = vpop.f32.mrf.mxu0
        %2471 = vdwg.mxu0
        %2480 = vrot.lane.b32.xlu0 %v1957, 96
        %v2481 = vpop.permute.xlu0 %2480
        %2482 = vrot.lane.b32.xlu0 %v1958, 96
        %v2483 = vpop.permute.xlu0 %2482
        %2484 = vrot.lane.b32.xlu0 %v1959, 96
        %v2485 = vpop.permute.xlu0 %2484
        %2486 = vrot.lane.b32.xlu0 %v1960, 96
        %v2487 = vpop.permute.xlu0 %2486
        %2488 = vrot.lane.b32.xlu0 %v1961, 96
        %v2489 = vpop.permute.xlu0 %2488
        %2490 = vrot.lane.b32.xlu0 %v1962, 96
        %v2491 = vpop.permute.xlu0 %2490
        %2492 = vrot.lane.b32.xlu0 %v1963, 96
        %v2493 = vpop.permute.xlu0 %2492
        %2494 = vrot.lane.b32.xlu0 %v1964, 96
        %v2495 = vpop.permute.xlu0 %2494
        %v2497 = vsel %vm526, %v1957, 0
        %v2500 = vsel %vm526, %v1958, 0
        %v2503 = vsel %vm526, %v1959, 0
        %v2506 = vsel %vm526, %v1960, 0
        %v2509 = vsel %vm526, %v1961, 0
        %v2512 = vsel %vm526, %v1962, 0
        %v2515 = vsel %vm526, %v1963, 0
        %v2518 = vsel %vm526, %v1964, 0
        %v2521 = vsel %vm526, %v2481, 0
        %v2524 = vsel %vm526, %v2483, 0
        %v2527 = vsel %vm526, %v2485, 0
        %v2530 = vsel %vm526, %v2487, 0
        %v2533 = vsel %vm526, %v2489, 0
        %v2536 = vsel %vm526, %v2491, 0
        %v2539 = vsel %vm526, %v2493, 0
        %v2542 = vsel %vm526, %v2495, 0
        %2544 = vmatprep.subr.bf16.mxu0 0
        %2545 = vmatpush1.bf16.xpose.msra.mxu0 %v2542
        %2546 = vmatprep.subr.bf16.mxu0 0
        %2547 = vmatpush1.bf16.xpose.msra.mxu0 %v2539
        %2548 = vmatprep.subr.bf16.mxu0 0
        %2549 = vmatpush1.bf16.xpose.msra.mxu0 %v2536
        %2550 = vmatprep.subr.bf16.mxu0 0
        %2551 = vmatpush1.bf16.xpose.msra.mxu0 %v2533
        %2552 = vmatprep.subr.bf16.mxu0 0
        %2553 = vmatpush1.bf16.xpose.msra.mxu0 %v2530
        %2554 = vmatprep.subr.bf16.mxu0 0
        %2555 = vmatpush1.bf16.xpose.msra.mxu0 %v2527
        %2556 = vmatprep.subr.bf16.mxu0 0
        %2557 = vmatpush1.bf16.xpose.msra.mxu0 %v2524
        %2558 = vmatprep.subr.bf16.mxu0 0
        %2559 = vmatpush1.bf16.xpose.msra.mxu0 %v2521
        %2560 = vmatprep.subr.bf16.mxu0 0
        %2561 = vmatpush2.bf16.xpose.msra.mxu0 0
        %2562 = vmatprep.subr.bf16.mxu0 0
        %2563 = vmatpush2.bf16.xpose.msra.mxu0 0
        %2564 = vmatprep.subr.bf16.mxu0 0
        %2565 = vmatpush2.bf16.xpose.msra.mxu0 0
        %2566 = vmatprep.subr.bf16.mxu0 0
        %2567 = vmatpush2.bf16.xpose.msra.mxu0 0
        %2568 = vmatprep.subr.bf16.mxu0 0
        %2569 = vmatpush2.bf16.xpose.msra.mxu0 0
        %2570 = vmatprep.subr.bf16.mxu0 0
        %2571 = vmatpush2.bf16.xpose.msra.mxu0 0
        %2572 = vmatprep.subr.bf16.mxu0 0
        %2573 = vmatpush2.bf16.xpose.msra.mxu0 0
        %2574 = vmatprep.subr.bf16.mxu0 0
        %2575 = vmatpush2.bf16.xpose.msra.mxu0 0
        %2576 = vmatprep.mubr.bf16.mxu0 0
        %2577 = vmatmul.mubr.bf16.gmra.mxu0 %v2497
        %v2578 = vpop.f32.mrf.mxu0
        %v2579 = vadd.f32 0.0, %v2578
        %v2580 = vpop.f32.mrf.mxu0
        %v2581 = vpop.f32.mrf.mxu0
        %v2582 = vadd.f32 0.0, %v2581
        %v2583 = vpop.f32.mrf.mxu0
        %2584 = vmatprep.mubr.bf16.mxu0 0
        %2585 = vmatmul.mubr.bf16.gmra.mxu0 %v2500
        %v2586 = vpop.f32.mrf.mxu0
        %v2587 = vadd.f32 0.0, %v2586
        %v2588 = vpop.f32.mrf.mxu0
        %v2589 = vpop.f32.mrf.mxu0
        %v2590 = vadd.f32 0.0, %v2589
        %v2591 = vpop.f32.mrf.mxu0
        %2592 = vmatprep.mubr.bf16.mxu0 0
        %2593 = vmatmul.mubr.bf16.gmra.mxu0 %v2503
        %v2594 = vpop.f32.mrf.mxu0
        %v2595 = vadd.f32 0.0, %v2594
        %v2596 = vpop.f32.mrf.mxu0
        %v2597 = vpop.f32.mrf.mxu0
        %v2598 = vadd.f32 0.0, %v2597
        %v2599 = vpop.f32.mrf.mxu0
        %2600 = vmatprep.mubr.bf16.mxu0 0
        %2601 = vmatmul.mubr.bf16.gmra.mxu0 %v2506
        %v2602 = vpop.f32.mrf.mxu0
        %v2603 = vadd.f32 0.0, %v2602
        %v2604 = vpop.f32.mrf.mxu0
        %v2605 = vpop.f32.mrf.mxu0
        %v2606 = vadd.f32 0.0, %v2605
        %v2607 = vpop.f32.mrf.mxu0
        %2608 = vmatprep.mubr.bf16.mxu0 0
        %2609 = vmatmul.mubr.bf16.gmra.mxu0 %v2509
        %v2610 = vpop.f32.mrf.mxu0
        %v2611 = vadd.f32 0.0, %v2610
        %v2612 = vpop.f32.mrf.mxu0
        %v2613 = vpop.f32.mrf.mxu0
        %v2614 = vadd.f32 0.0, %v2613
        %v2615 = vpop.f32.mrf.mxu0
        %2616 = vmatprep.mubr.bf16.mxu0 0
        %2617 = vmatmul.mubr.bf16.gmra.mxu0 %v2512
        %v2618 = vpop.f32.mrf.mxu0
        %v2619 = vadd.f32 0.0, %v2618
        %v2620 = vpop.f32.mrf.mxu0
        %v2621 = vpop.f32.mrf.mxu0
        %v2622 = vadd.f32 0.0, %v2621
        %v2623 = vpop.f32.mrf.mxu0
        %2624 = vmatprep.mubr.bf16.mxu0 0
        %2625 = vmatmul.mubr.bf16.gmra.mxu0 %v2515
        %v2626 = vpop.f32.mrf.mxu0
        %v2627 = vadd.f32 0.0, %v2626
        %v2628 = vpop.f32.mrf.mxu0
        %v2629 = vpop.f32.mrf.mxu0
        %v2630 = vadd.f32 0.0, %v2629
        %v2631 = vpop.f32.mrf.mxu0
        %2632 = vmatprep.mubr.bf16.mxu0 0
        %2633 = vmatmul.mubr.bf16.gmra.mxu0 %v2518
        %v2634 = vpop.f32.mrf.mxu0
        %v2635 = vadd.f32 0.0, %v2634
        %v2636 = vpop.f32.mrf.mxu0
        %v2637 = vpop.f32.mrf.mxu0
        %v2638 = vadd.f32 0.0, %v2637
        %v2639 = vpop.f32.mrf.mxu0
        %2640 = vdwg.mxu0
        %v2641 = vmul.f32 %v2072, 0.17677669
        %v2642 = vmul.f32 %v2075, 0.17677669
        %v2643 = vmul.f32 %v2080, 0.17677669
        %v2644 = vmul.f32 %v2083, 0.17677669
        %v2645 = vmul.f32 %v2088, 0.17677669
        %v2646 = vmul.f32 %v2091, 0.17677669
        %v2647 = vmul.f32 %v2096, 0.17677669
        %v2648 = vmul.f32 %v2099, 0.17677669
        %v2649 = vmul.f32 %v2104, 0.17677669
        %v2650 = vmul.f32 %v2107, 0.17677669
        %v2651 = vmul.f32 %v2112, 0.17677669
        %v2652 = vmul.f32 %v2115, 0.17677669
        %v2653 = vmul.f32 %v2120, 0.17677669
        %v2654 = vmul.f32 %v2123, 0.17677669
        %v2655 = vmul.f32 %v2128, 0.17677669
        %v2656 = vmul.f32 %v2131, 0.17677669
        %v2657 = vmul.f32 %v2241, 0.17677669
        %v2658 = vmul.f32 %v2244, 0.17677669
        %v2659 = vmul.f32 %v2249, 0.17677669
        %v2660 = vmul.f32 %v2252, 0.17677669
        %v2661 = vmul.f32 %v2257, 0.17677669
        %v2662 = vmul.f32 %v2260, 0.17677669
        %v2663 = vmul.f32 %v2265, 0.17677669
        %v2664 = vmul.f32 %v2268, 0.17677669
        %v2665 = vmul.f32 %v2273, 0.17677669
        %v2666 = vmul.f32 %v2276, 0.17677669
        %v2667 = vmul.f32 %v2281, 0.17677669
        %v2668 = vmul.f32 %v2284, 0.17677669
        %v2669 = vmul.f32 %v2289, 0.17677669
        %v2670 = vmul.f32 %v2292, 0.17677669
        %v2671 = vmul.f32 %v2297, 0.17677669
        %v2672 = vmul.f32 %v2300, 0.17677669
        %v2673 = vmul.f32 %v2410, 0.17677669
        %v2674 = vmul.f32 %v2413, 0.17677669
        %v2675 = vmul.f32 %v2418, 0.17677669
        %v2676 = vmul.f32 %v2421, 0.17677669
        %v2677 = vmul.f32 %v2426, 0.17677669
        %v2678 = vmul.f32 %v2429, 0.17677669
        %v2679 = vmul.f32 %v2434, 0.17677669
        %v2680 = vmul.f32 %v2437, 0.17677669
        %v2681 = vmul.f32 %v2442, 0.17677669
        %v2682 = vmul.f32 %v2445, 0.17677669
        %v2683 = vmul.f32 %v2450, 0.17677669
        %v2684 = vmul.f32 %v2453, 0.17677669
        %v2685 = vmul.f32 %v2458, 0.17677669
        %v2686 = vmul.f32 %v2461, 0.17677669
        %v2687 = vmul.f32 %v2466, 0.17677669
        %v2688 = vmul.f32 %v2469, 0.17677669
        %v2689 = vmul.f32 %v2579, 0.17677669
        %v2690 = vmul.f32 %v2582, 0.17677669
        %v2691 = vmul.f32 %v2587, 0.17677669
        %v2692 = vmul.f32 %v2590, 0.17677669
        %v2693 = vmul.f32 %v2595, 0.17677669
        %v2694 = vmul.f32 %v2598, 0.17677669
        %v2695 = vmul.f32 %v2603, 0.17677669
        %v2696 = vmul.f32 %v2606, 0.17677669
        %v2697 = vmul.f32 %v2611, 0.17677669
        %v2698 = vmul.f32 %v2614, 0.17677669
        %v2699 = vmul.f32 %v2619, 0.17677669
        %v2700 = vmul.f32 %v2622, 0.17677669
        %v2701 = vmul.f32 %v2627, 0.17677669
        %v2702 = vmul.f32 %v2630, 0.17677669
        %v2703 = vmul.f32 %v2635, 0.17677669
        %v2704 = vmul.f32 %v2638, 0.17677669
        %2705 = vmax.xlane.f32.xlu0 %v2641
        %v2706 = vpop.xlane.xlu0 %2705
        %2707 = vmax.xlane.f32.xlu0 %v2642
        %v2708 = vpop.xlane.xlu0 %2707
        %2709 = vmax.xlane.f32.xlu0 %v2643
        %v2710 = vpop.xlane.xlu0 %2709
        %2711 = vmax.xlane.f32.xlu0 %v2644
        %v2712 = vpop.xlane.xlu0 %2711
        %2713 = vmax.xlane.f32.xlu0 %v2645
        %v2714 = vpop.xlane.xlu0 %2713
        %2715 = vmax.xlane.f32.xlu0 %v2646
        %v2716 = vpop.xlane.xlu0 %2715
        %2717 = vmax.xlane.f32.xlu0 %v2647
        %v2718 = vpop.xlane.xlu0 %2717
        %2719 = vmax.xlane.f32.xlu0 %v2648
        %v2720 = vpop.xlane.xlu0 %2719
        %2721 = vmax.xlane.f32.xlu0 %v2649
        %v2722 = vpop.xlane.xlu0 %2721
        %2723 = vmax.xlane.f32.xlu0 %v2650
        %v2724 = vpop.xlane.xlu0 %2723
        %2725 = vmax.xlane.f32.xlu0 %v2651
        %v2726 = vpop.xlane.xlu0 %2725
        %2727 = vmax.xlane.f32.xlu0 %v2652
        %v2728 = vpop.xlane.xlu0 %2727
        %2729 = vmax.xlane.f32.xlu0 %v2653
        %v2730 = vpop.xlane.xlu0 %2729
        %2731 = vmax.xlane.f32.xlu0 %v2654
        %v2732 = vpop.xlane.xlu0 %2731
        %2733 = vmax.xlane.f32.xlu0 %v2655
        %v2734 = vpop.xlane.xlu0 %2733
        %2735 = vmax.xlane.f32.xlu0 %v2656
        %v2736 = vpop.xlane.xlu0 %2735
        %2737 = vmax.xlane.f32.xlu0 %v2657
        %v2738 = vpop.xlane.xlu0 %2737
        %2739 = vmax.xlane.f32.xlu0 %v2658
        %v2740 = vpop.xlane.xlu0 %2739
        %2741 = vmax.xlane.f32.xlu0 %v2659
        %v2742 = vpop.xlane.xlu0 %2741
        %2743 = vmax.xlane.f32.xlu0 %v2660
        %v2744 = vpop.xlane.xlu0 %2743
        %2745 = vmax.xlane.f32.xlu0 %v2661
        %v2746 = vpop.xlane.xlu0 %2745
        %2747 = vmax.xlane.f32.xlu0 %v2662
        %v2748 = vpop.xlane.xlu0 %2747
        %2749 = vmax.xlane.f32.xlu0 %v2663
        %v2750 = vpop.xlane.xlu0 %2749
        %2751 = vmax.xlane.f32.xlu0 %v2664
        %v2752 = vpop.xlane.xlu0 %2751
        %2753 = vmax.xlane.f32.xlu0 %v2665
        %v2754 = vpop.xlane.xlu0 %2753
        %2755 = vmax.xlane.f32.xlu0 %v2666
        %v2756 = vpop.xlane.xlu0 %2755
        %2757 = vmax.xlane.f32.xlu0 %v2667
        %v2758 = vpop.xlane.xlu0 %2757
        %2759 = vmax.xlane.f32.xlu0 %v2668
        %v2760 = vpop.xlane.xlu0 %2759
        %2761 = vmax.xlane.f32.xlu0 %v2669
        %v2762 = vpop.xlane.xlu0 %2761
        %2763 = vmax.xlane.f32.xlu0 %v2670
        %v2764 = vpop.xlane.xlu0 %2763
        %2765 = vmax.xlane.f32.xlu0 %v2671
        %v2766 = vpop.xlane.xlu0 %2765
        %2767 = vmax.xlane.f32.xlu0 %v2672
        %v2768 = vpop.xlane.xlu0 %2767
        %2769 = vmax.xlane.f32.xlu0 %v2673
        %v2770 = vpop.xlane.xlu0 %2769
        %2771 = vmax.xlane.f32.xlu0 %v2674
        %v2772 = vpop.xlane.xlu0 %2771
        %2773 = vmax.xlane.f32.xlu0 %v2675
        %v2774 = vpop.xlane.xlu0 %2773
        %2775 = vmax.xlane.f32.xlu0 %v2676
        %v2776 = vpop.xlane.xlu0 %2775
        %2777 = vmax.xlane.f32.xlu0 %v2677
        %v2778 = vpop.xlane.xlu0 %2777
        %2779 = vmax.xlane.f32.xlu0 %v2678
        %v2780 = vpop.xlane.xlu0 %2779
        %2781 = vmax.xlane.f32.xlu0 %v2679
        %v2782 = vpop.xlane.xlu0 %2781
        %2783 = vmax.xlane.f32.xlu0 %v2680
        %v2784 = vpop.xlane.xlu0 %2783
        %2785 = vmax.xlane.f32.xlu0 %v2681
        %v2786 = vpop.xlane.xlu0 %2785
        %2787 = vmax.xlane.f32.xlu0 %v2682
        %v2788 = vpop.xlane.xlu0 %2787
        %2789 = vmax.xlane.f32.xlu0 %v2683
        %v2790 = vpop.xlane.xlu0 %2789
        %2791 = vmax.xlane.f32.xlu0 %v2684
        %v2792 = vpop.xlane.xlu0 %2791
        %2793 = vmax.xlane.f32.xlu0 %v2685
        %v2794 = vpop.xlane.xlu0 %2793
        %2795 = vmax.xlane.f32.xlu0 %v2686
        %v2796 = vpop.xlane.xlu0 %2795
        %2797 = vmax.xlane.f32.xlu0 %v2687
        %v2798 = vpop.xlane.xlu0 %2797
        %2799 = vmax.xlane.f32.xlu0 %v2688
        %v2800 = vpop.xlane.xlu0 %2799
        %2801 = vmax.xlane.f32.xlu0 %v2689
        %v2802 = vpop.xlane.xlu0 %2801
        %2803 = vmax.xlane.f32.xlu0 %v2690
        %v2804 = vpop.xlane.xlu0 %2803
        %2805 = vmax.xlane.f32.xlu0 %v2691
        %v2806 = vpop.xlane.xlu0 %2805
        %2807 = vmax.xlane.f32.xlu0 %v2692
        %v2808 = vpop.xlane.xlu0 %2807
        %2809 = vmax.xlane.f32.xlu0 %v2693
        %v2810 = vpop.xlane.xlu0 %2809
        %2811 = vmax.xlane.f32.xlu0 %v2694
        %v2812 = vpop.xlane.xlu0 %2811
        %2813 = vmax.xlane.f32.xlu0 %v2695
        %v2814 = vpop.xlane.xlu0 %2813
        %2815 = vmax.xlane.f32.xlu0 %v2696
        %v2816 = vpop.xlane.xlu0 %2815
        %2817 = vmax.xlane.f32.xlu0 %v2697
        %v2818 = vpop.xlane.xlu0 %2817
        %2819 = vmax.xlane.f32.xlu0 %v2698
        %v2820 = vpop.xlane.xlu0 %2819
        %2821 = vmax.xlane.f32.xlu0 %v2699
        %v2822 = vpop.xlane.xlu0 %2821
        %2823 = vmax.xlane.f32.xlu0 %v2700
        %v2824 = vpop.xlane.xlu0 %2823
        %2825 = vmax.xlane.f32.xlu0 %v2701
        %v2826 = vpop.xlane.xlu0 %2825
        %2827 = vmax.xlane.f32.xlu0 %v2702
        %v2828 = vpop.xlane.xlu0 %2827
        %2829 = vmax.xlane.f32.xlu0 %v2703
        %v2830 = vpop.xlane.xlu0 %2829
        %2831 = vmax.xlane.f32.xlu0 %v2704
        %v2832 = vpop.xlane.xlu0 %2831
        %v2833 = vsub.f32 %v2641, %v2706
        %v2834 = vsub.f32 %v2642, %v2708
        %v2835 = vsub.f32 %v2643, %v2710
        %v2836 = vsub.f32 %v2644, %v2712
        %v2837 = vsub.f32 %v2645, %v2714
        %v2838 = vsub.f32 %v2646, %v2716
        %v2839 = vsub.f32 %v2647, %v2718
        %v2840 = vsub.f32 %v2648, %v2720
        %v2841 = vsub.f32 %v2649, %v2722
        %v2842 = vsub.f32 %v2650, %v2724
        %v2843 = vsub.f32 %v2651, %v2726
        %v2844 = vsub.f32 %v2652, %v2728
        %v2845 = vsub.f32 %v2653, %v2730
        %v2846 = vsub.f32 %v2654, %v2732
        %v2847 = vsub.f32 %v2655, %v2734
        %v2848 = vsub.f32 %v2656, %v2736
        %v2849 = vsub.f32 %v2657, %v2738
        %v2850 = vsub.f32 %v2658, %v2740
        %v2851 = vsub.f32 %v2659, %v2742
        %v2852 = vsub.f32 %v2660, %v2744
        %v2853 = vsub.f32 %v2661, %v2746
        %v2854 = vsub.f32 %v2662, %v2748
        %v2855 = vsub.f32 %v2663, %v2750
        %v2856 = vsub.f32 %v2664, %v2752
        %v2857 = vsub.f32 %v2665, %v2754
        %v2858 = vsub.f32 %v2666, %v2756
        %v2859 = vsub.f32 %v2667, %v2758
        %v2860 = vsub.f32 %v2668, %v2760
        %v2861 = vsub.f32 %v2669, %v2762
        %v2862 = vsub.f32 %v2670, %v2764
        %v2863 = vsub.f32 %v2671, %v2766
        %v2864 = vsub.f32 %v2672, %v2768
        %v2865 = vsub.f32 %v2673, %v2770
        %v2866 = vsub.f32 %v2674, %v2772
        %v2867 = vsub.f32 %v2675, %v2774
        %v2868 = vsub.f32 %v2676, %v2776
        %v2869 = vsub.f32 %v2677, %v2778
        %v2870 = vsub.f32 %v2678, %v2780
        %v2871 = vsub.f32 %v2679, %v2782
        %v2872 = vsub.f32 %v2680, %v2784
        %v2873 = vsub.f32 %v2681, %v2786
        %v2874 = vsub.f32 %v2682, %v2788
        %v2875 = vsub.f32 %v2683, %v2790
        %v2876 = vsub.f32 %v2684, %v2792
        %v2877 = vsub.f32 %v2685, %v2794
        %v2878 = vsub.f32 %v2686, %v2796
        %v2879 = vsub.f32 %v2687, %v2798
        %v2880 = vsub.f32 %v2688, %v2800
        %v2881 = vsub.f32 %v2689, %v2802
        %v2882 = vsub.f32 %v2690, %v2804
        %v2883 = vsub.f32 %v2691, %v2806
        %v2884 = vsub.f32 %v2692, %v2808
        %v2885 = vsub.f32 %v2693, %v2810
        %v2886 = vsub.f32 %v2694, %v2812
        %v2887 = vsub.f32 %v2695, %v2814
        %v2888 = vsub.f32 %v2696, %v2816
        %v2889 = vsub.f32 %v2697, %v2818
        %v2890 = vsub.f32 %v2698, %v2820
        %v2891 = vsub.f32 %v2699, %v2822
        %v2892 = vsub.f32 %v2700, %v2824
        %v2893 = vsub.f32 %v2701, %v2826
        %v2894 = vsub.f32 %v2702, %v2828
        %v2895 = vsub.f32 %v2703, %v2830
        %v2896 = vsub.f32 %v2704, %v2832
        %v2897 = vmul.f32 %v2833, 1.442695
        %v2898 = vpow.pop %v2897
        %v2899 = vmul.f32 %v2834, 1.442695
        %v2900 = vpow.pop %v2899
        %v2901 = vmul.f32 %v2835, 1.442695
        %v2902 = vpow.pop %v2901
        %v2903 = vmul.f32 %v2836, 1.442695
        %v2904 = vpow.pop %v2903
        %v2905 = vmul.f32 %v2837, 1.442695
        %v2906 = vpow.pop %v2905
        %v2907 = vmul.f32 %v2838, 1.442695
        %v2908 = vpow.pop %v2907
        %v2909 = vmul.f32 %v2839, 1.442695
        %v2910 = vpow.pop %v2909
        %v2911 = vmul.f32 %v2840, 1.442695
        %v2912 = vpow.pop %v2911
        %v2913 = vmul.f32 %v2841, 1.442695
        %v2914 = vpow.pop %v2913
        %v2915 = vmul.f32 %v2842, 1.442695
        %v2916 = vpow.pop %v2915
        %v2917 = vmul.f32 %v2843, 1.442695
        %v2918 = vpow.pop %v2917
        %v2919 = vmul.f32 %v2844, 1.442695
        %v2920 = vpow.pop %v2919
        %v2921 = vmul.f32 %v2845, 1.442695
        %v2922 = vpow.pop %v2921
        %v2923 = vmul.f32 %v2846, 1.442695
        %v2924 = vpow.pop %v2923
        %v2925 = vmul.f32 %v2847, 1.442695
        %v2926 = vpow.pop %v2925
        %v2927 = vmul.f32 %v2848, 1.442695
        %v2928 = vpow.pop %v2927
        %v2929 = vmul.f32 %v2849, 1.442695
        %v2930 = vpow.pop %v2929
        %v2931 = vmul.f32 %v2850, 1.442695
        %v2932 = vpow.pop %v2931
        %v2933 = vmul.f32 %v2851, 1.442695
        %v2934 = vpow.pop %v2933
        %v2935 = vmul.f32 %v2852, 1.442695
        %v2936 = vpow.pop %v2935
        %v2937 = vmul.f32 %v2853, 1.442695
        %v2938 = vpow.pop %v2937
        %v2939 = vmul.f32 %v2854, 1.442695
        %v2940 = vpow.pop %v2939
        %v2941 = vmul.f32 %v2855, 1.442695
        %v2942 = vpow.pop %v2941
        %v2943 = vmul.f32 %v2856, 1.442695
        %v2944 = vpow.pop %v2943
        %v2945 = vmul.f32 %v2857, 1.442695
        %v2946 = vpow.pop %v2945
        %v2947 = vmul.f32 %v2858, 1.442695
        %v2948 = vpow.pop %v2947
        %v2949 = vmul.f32 %v2859, 1.442695
        %v2950 = vpow.pop %v2949
        %v2951 = vmul.f32 %v2860, 1.442695
        %v2952 = vpow.pop %v2951
        %v2953 = vmul.f32 %v2861, 1.442695
        %v2954 = vpow.pop %v2953
        %v2955 = vmul.f32 %v2862, 1.442695
        %v2956 = vpow.pop %v2955
        %v2957 = vmul.f32 %v2863, 1.442695
        %v2958 = vpow.pop %v2957
        %v2959 = vmul.f32 %v2864, 1.442695
        %v2960 = vpow.pop %v2959
        %v2961 = vmul.f32 %v2865, 1.442695
        %v2962 = vpow.pop %v2961
        %v2963 = vmul.f32 %v2866, 1.442695
        %v2964 = vpow.pop %v2963
        %v2965 = vmul.f32 %v2867, 1.442695
        %v2966 = vpow.pop %v2965
        %v2967 = vmul.f32 %v2868, 1.442695
        %v2968 = vpow.pop %v2967
        %v2969 = vmul.f32 %v2869, 1.442695
        %v2970 = vpow.pop %v2969
        %v2971 = vmul.f32 %v2870, 1.442695
        %v2972 = vpow.pop %v2971
        %v2973 = vmul.f32 %v2871, 1.442695
        %v2974 = vpow.pop %v2973
        %v2975 = vmul.f32 %v2872, 1.442695
        %v2976 = vpow.pop %v2975
        %v2977 = vmul.f32 %v2873, 1.442695
        %v2978 = vpow.pop %v2977
        %v2979 = vmul.f32 %v2874, 1.442695
        %v2980 = vpow.pop %v2979
        %v2981 = vmul.f32 %v2875, 1.442695
        %v2982 = vpow.pop %v2981
        %v2983 = vmul.f32 %v2876, 1.442695
        %v2984 = vpow.pop %v2983
        %v2985 = vmul.f32 %v2877, 1.442695
        %v2986 = vpow.pop %v2985
        %v2987 = vmul.f32 %v2878, 1.442695
        %v2988 = vpow.pop %v2987
        %v2989 = vmul.f32 %v2879, 1.442695
        %v2990 = vpow.pop %v2989
        %v2991 = vmul.f32 %v2880, 1.442695
        %v2992 = vpow.pop %v2991
        %v2993 = vmul.f32 %v2881, 1.442695
        %v2994 = vpow.pop %v2993
        %v2995 = vmul.f32 %v2882, 1.442695
        %v2996 = vpow.pop %v2995
        %v2997 = vmul.f32 %v2883, 1.442695
        %v2998 = vpow.pop %v2997
        %v2999 = vmul.f32 %v2884, 1.442695
        %v3000 = vpow.pop %v2999
        %v3001 = vmul.f32 %v2885, 1.442695
        %v3002 = vpow.pop %v3001
        %v3003 = vmul.f32 %v2886, 1.442695
        %v3004 = vpow.pop %v3003
        %v3005 = vmul.f32 %v2887, 1.442695
        %v3006 = vpow.pop %v3005
        %v3007 = vmul.f32 %v2888, 1.442695
        %v3008 = vpow.pop %v3007
        %v3009 = vmul.f32 %v2889, 1.442695
        %v3010 = vpow.pop %v3009
        %v3011 = vmul.f32 %v2890, 1.442695
        %v3012 = vpow.pop %v3011
        %v3013 = vmul.f32 %v2891, 1.442695
        %v3014 = vpow.pop %v3013
        %v3015 = vmul.f32 %v2892, 1.442695
        %v3016 = vpow.pop %v3015
        %v3017 = vmul.f32 %v2893, 1.442695
        %v3018 = vpow.pop %v3017
        %v3019 = vmul.f32 %v2894, 1.442695
        %v3020 = vpow.pop %v3019
        %v3021 = vmul.f32 %v2895, 1.442695
        %v3022 = vpow.pop %v3021
        %v3023 = vmul.f32 %v2896, 1.442695
        %v3024 = vpow.pop %v3023
        %3025 = vadd.xlane.f32.xlu0 %v2898
        %v3026 = vpop.xlane.xlu0 %3025
        %3027 = vadd.xlane.f32.xlu0 %v2900
        %v3028 = vpop.xlane.xlu0 %3027
        %3029 = vadd.xlane.f32.xlu0 %v2902
        %v3030 = vpop.xlane.xlu0 %3029
        %3031 = vadd.xlane.f32.xlu0 %v2904
        %v3032 = vpop.xlane.xlu0 %3031
        %3033 = vadd.xlane.f32.xlu0 %v2906
        %v3034 = vpop.xlane.xlu0 %3033
        %3035 = vadd.xlane.f32.xlu0 %v2908
        %v3036 = vpop.xlane.xlu0 %3035
        %3037 = vadd.xlane.f32.xlu0 %v2910
        %v3038 = vpop.xlane.xlu0 %3037
        %3039 = vadd.xlane.f32.xlu0 %v2912
        %v3040 = vpop.xlane.xlu0 %3039
        %3041 = vadd.xlane.f32.xlu0 %v2914
        %v3042 = vpop.xlane.xlu0 %3041
        %3043 = vadd.xlane.f32.xlu0 %v2916
        %v3044 = vpop.xlane.xlu0 %3043
        %3045 = vadd.xlane.f32.xlu0 %v2918
        %v3046 = vpop.xlane.xlu0 %3045
        %3047 = vadd.xlane.f32.xlu0 %v2920
        %v3048 = vpop.xlane.xlu0 %3047
        %3049 = vadd.xlane.f32.xlu0 %v2922
        %v3050 = vpop.xlane.xlu0 %3049
        %3051 = vadd.xlane.f32.xlu0 %v2924
        %v3052 = vpop.xlane.xlu0 %3051
        %3053 = vadd.xlane.f32.xlu0 %v2926
        %v3054 = vpop.xlane.xlu0 %3053
        %3055 = vadd.xlane.f32.xlu0 %v2928
        %v3056 = vpop.xlane.xlu0 %3055
        %3057 = vadd.xlane.f32.xlu0 %v2930
        %v3058 = vpop.xlane.xlu0 %3057
        %3059 = vadd.xlane.f32.xlu0 %v2932
        %v3060 = vpop.xlane.xlu0 %3059
        %3061 = vadd.xlane.f32.xlu0 %v2934
        %v3062 = vpop.xlane.xlu0 %3061
        %3063 = vadd.xlane.f32.xlu0 %v2936
        %v3064 = vpop.xlane.xlu0 %3063
        %3065 = vadd.xlane.f32.xlu0 %v2938
        %v3066 = vpop.xlane.xlu0 %3065
        %3067 = vadd.xlane.f32.xlu0 %v2940
        %v3068 = vpop.xlane.xlu0 %3067
        %3069 = vadd.xlane.f32.xlu0 %v2942
        %v3070 = vpop.xlane.xlu0 %3069
        %3071 = vadd.xlane.f32.xlu0 %v2944
        %v3072 = vpop.xlane.xlu0 %3071
        %3073 = vadd.xlane.f32.xlu0 %v2946
        %v3074 = vpop.xlane.xlu0 %3073
        %3075 = vadd.xlane.f32.xlu0 %v2948
        %v3076 = vpop.xlane.xlu0 %3075
        %3077 = vadd.xlane.f32.xlu0 %v2950
        %v3078 = vpop.xlane.xlu0 %3077
        %3079 = vadd.xlane.f32.xlu0 %v2952
        %v3080 = vpop.xlane.xlu0 %3079
        %3081 = vadd.xlane.f32.xlu0 %v2954
        %v3082 = vpop.xlane.xlu0 %3081
        %3083 = vadd.xlane.f32.xlu0 %v2956
        %v3084 = vpop.xlane.xlu0 %3083
        %3085 = vadd.xlane.f32.xlu0 %v2958
        %v3086 = vpop.xlane.xlu0 %3085
        %3087 = vadd.xlane.f32.xlu0 %v2960
        %v3088 = vpop.xlane.xlu0 %3087
        %3089 = vadd.xlane.f32.xlu0 %v2962
        %v3090 = vpop.xlane.xlu0 %3089
        %3091 = vadd.xlane.f32.xlu0 %v2964
        %v3092 = vpop.xlane.xlu0 %3091
        %3093 = vadd.xlane.f32.xlu0 %v2966
        %v3094 = vpop.xlane.xlu0 %3093
        %3095 = vadd.xlane.f32.xlu0 %v2968
        %v3096 = vpop.xlane.xlu0 %3095
        %3097 = vadd.xlane.f32.xlu0 %v2970
        %v3098 = vpop.xlane.xlu0 %3097
        %3099 = vadd.xlane.f32.xlu0 %v2972
        %v3100 = vpop.xlane.xlu0 %3099
        %3101 = vadd.xlane.f32.xlu0 %v2974
        %v3102 = vpop.xlane.xlu0 %3101
        %3103 = vadd.xlane.f32.xlu0 %v2976
        %v3104 = vpop.xlane.xlu0 %3103
        %3105 = vadd.xlane.f32.xlu0 %v2978
        %v3106 = vpop.xlane.xlu0 %3105
        %3107 = vadd.xlane.f32.xlu0 %v2980
        %v3108 = vpop.xlane.xlu0 %3107
        %3109 = vadd.xlane.f32.xlu0 %v2982
        %v3110 = vpop.xlane.xlu0 %3109
        %3111 = vadd.xlane.f32.xlu0 %v2984
        %v3112 = vpop.xlane.xlu0 %3111
        %3113 = vadd.xlane.f32.xlu0 %v2986
        %v3114 = vpop.xlane.xlu0 %3113
        %3115 = vadd.xlane.f32.xlu0 %v2988
        %v3116 = vpop.xlane.xlu0 %3115
        %3117 = vadd.xlane.f32.xlu0 %v2990
        %v3118 = vpop.xlane.xlu0 %3117
        %3119 = vadd.xlane.f32.xlu0 %v2992
        %v3120 = vpop.xlane.xlu0 %3119
        %3121 = vadd.xlane.f32.xlu0 %v2994
        %v3122 = vpop.xlane.xlu0 %3121
        %3123 = vadd.xlane.f32.xlu0 %v2996
        %v3124 = vpop.xlane.xlu0 %3123
        %3125 = vadd.xlane.f32.xlu0 %v2998
        %v3126 = vpop.xlane.xlu0 %3125
        %3127 = vadd.xlane.f32.xlu0 %v3000
        %v3128 = vpop.xlane.xlu0 %3127
        %3129 = vadd.xlane.f32.xlu0 %v3002
        %v3130 = vpop.xlane.xlu0 %3129
        %3131 = vadd.xlane.f32.xlu0 %v3004
        %v3132 = vpop.xlane.xlu0 %3131
        %3133 = vadd.xlane.f32.xlu0 %v3006
        %v3134 = vpop.xlane.xlu0 %3133
        %3135 = vadd.xlane.f32.xlu0 %v3008
        %v3136 = vpop.xlane.xlu0 %3135
        %3137 = vadd.xlane.f32.xlu0 %v3010
        %v3138 = vpop.xlane.xlu0 %3137
        %3139 = vadd.xlane.f32.xlu0 %v3012
        %v3140 = vpop.xlane.xlu0 %3139
        %3141 = vadd.xlane.f32.xlu0 %v3014
        %v3142 = vpop.xlane.xlu0 %3141
        %3143 = vadd.xlane.f32.xlu0 %v3016
        %v3144 = vpop.xlane.xlu0 %3143
        %3145 = vadd.xlane.f32.xlu0 %v3018
        %v3146 = vpop.xlane.xlu0 %3145
        %3147 = vadd.xlane.f32.xlu0 %v3020
        %v3148 = vpop.xlane.xlu0 %3147
        %3149 = vadd.xlane.f32.xlu0 %v3022
        %v3150 = vpop.xlane.xlu0 %3149
        %3151 = vadd.xlane.f32.xlu0 %v3024
        %v3152 = vpop.xlane.xlu0 %3151
        %v3153 = vrcp.pop %v3026
        %v3154 = vrcp.pop %v3028
        %v3155 = vrcp.pop %v3030
        %v3156 = vrcp.pop %v3032
        %v3157 = vrcp.pop %v3034
        %v3158 = vrcp.pop %v3036
        %v3159 = vrcp.pop %v3038
        %v3160 = vrcp.pop %v3040
        %v3161 = vrcp.pop %v3042
        %v3162 = vrcp.pop %v3044
        %v3163 = vrcp.pop %v3046
        %v3164 = vrcp.pop %v3048
        %v3165 = vrcp.pop %v3050
        %v3166 = vrcp.pop %v3052
        %v3167 = vrcp.pop %v3054
        %v3168 = vrcp.pop %v3056
        %v3169 = vrcp.pop %v3058
        %v3170 = vrcp.pop %v3060
        %v3171 = vrcp.pop %v3062
        %v3172 = vrcp.pop %v3064
        %v3173 = vrcp.pop %v3066
        %v3174 = vrcp.pop %v3068
        %v3175 = vrcp.pop %v3070
        %v3176 = vrcp.pop %v3072
        %v3177 = vrcp.pop %v3074
        %v3178 = vrcp.pop %v3076
        %v3179 = vrcp.pop %v3078
        %v3180 = vrcp.pop %v3080
        %v3181 = vrcp.pop %v3082
        %v3182 = vrcp.pop %v3084
        %v3183 = vrcp.pop %v3086
        %v3184 = vrcp.pop %v3088
        %v3185 = vrcp.pop %v3090
        %v3186 = vrcp.pop %v3092
        %v3187 = vrcp.pop %v3094
        %v3188 = vrcp.pop %v3096
        %v3189 = vrcp.pop %v3098
        %v3190 = vrcp.pop %v3100
        %v3191 = vrcp.pop %v3102
        %v3192 = vrcp.pop %v3104
        %v3193 = vrcp.pop %v3106
        %v3194 = vrcp.pop %v3108
        %v3195 = vrcp.pop %v3110
        %v3196 = vrcp.pop %v3112
        %v3197 = vrcp.pop %v3114
        %v3198 = vrcp.pop %v3116
        %v3199 = vrcp.pop %v3118
        %v3200 = vrcp.pop %v3120
        %v3201 = vrcp.pop %v3122
        %v3202 = vrcp.pop %v3124
        %v3203 = vrcp.pop %v3126
        %v3204 = vrcp.pop %v3128
        %v3205 = vrcp.pop %v3130
        %v3206 = vrcp.pop %v3132
        %v3207 = vrcp.pop %v3134
        %v3208 = vrcp.pop %v3136
        %v3209 = vrcp.pop %v3138
        %v3210 = vrcp.pop %v3140
        %v3211 = vrcp.pop %v3142
        %v3212 = vrcp.pop %v3144
        %v3213 = vrcp.pop %v3146
        %v3214 = vrcp.pop %v3148
        %v3215 = vrcp.pop %v3150
        %v3216 = vrcp.pop %v3152
        %v3217 = vmul.f32 %v2898, %v3153
        %v3218 = vmul.f32 %v2900, %v3154
        %v3219 = vmul.f32 %v2902, %v3155
        %v3220 = vmul.f32 %v2904, %v3156
        %v3221 = vmul.f32 %v2906, %v3157
        %v3222 = vmul.f32 %v2908, %v3158
        %v3223 = vmul.f32 %v2910, %v3159
        %v3224 = vmul.f32 %v2912, %v3160
        %v3225 = vmul.f32 %v2914, %v3161
        %v3226 = vmul.f32 %v2916, %v3162
        %v3227 = vmul.f32 %v2918, %v3163
        %v3228 = vmul.f32 %v2920, %v3164
        %v3229 = vmul.f32 %v2922, %v3165
        %v3230 = vmul.f32 %v2924, %v3166
        %v3231 = vmul.f32 %v2926, %v3167
        %v3232 = vmul.f32 %v2928, %v3168
        %v3233 = vmul.f32 %v2930, %v3169
        %v3234 = vmul.f32 %v2932, %v3170
        %v3235 = vmul.f32 %v2934, %v3171
        %v3236 = vmul.f32 %v2936, %v3172
        %v3237 = vmul.f32 %v2938, %v3173
        %v3238 = vmul.f32 %v2940, %v3174
        %v3239 = vmul.f32 %v2942, %v3175
        %v3240 = vmul.f32 %v2944, %v3176
        %v3241 = vmul.f32 %v2946, %v3177
        %v3242 = vmul.f32 %v2948, %v3178
        %v3243 = vmul.f32 %v2950, %v3179
        %v3244 = vmul.f32 %v2952, %v3180
        %v3245 = vmul.f32 %v2954, %v3181
        %v3246 = vmul.f32 %v2956, %v3182
        %v3247 = vmul.f32 %v2958, %v3183
        %v3248 = vmul.f32 %v2960, %v3184
        %v3249 = vmul.f32 %v2962, %v3185
        %v3250 = vmul.f32 %v2964, %v3186
        %v3251 = vmul.f32 %v2966, %v3187
        %v3252 = vmul.f32 %v2968, %v3188
        %v3253 = vmul.f32 %v2970, %v3189
        %v3254 = vmul.f32 %v2972, %v3190
        %v3255 = vmul.f32 %v2974, %v3191
        %v3256 = vmul.f32 %v2976, %v3192
        %v3257 = vmul.f32 %v2978, %v3193
        %v3258 = vmul.f32 %v2980, %v3194
        %v3259 = vmul.f32 %v2982, %v3195
        %v3260 = vmul.f32 %v2984, %v3196
        %v3261 = vmul.f32 %v2986, %v3197
        %v3262 = vmul.f32 %v2988, %v3198
        %v3263 = vmul.f32 %v2990, %v3199
        %v3264 = vmul.f32 %v2992, %v3200
        %v3265 = vmul.f32 %v2994, %v3201
        %v3266 = vmul.f32 %v2996, %v3202
        %v3267 = vmul.f32 %v2998, %v3203
        %v3268 = vmul.f32 %v3000, %v3204
        %v3269 = vmul.f32 %v3002, %v3205
        %v3270 = vmul.f32 %v3004, %v3206
        %v3271 = vmul.f32 %v3006, %v3207
        %v3272 = vmul.f32 %v3008, %v3208
        %v3273 = vmul.f32 %v3010, %v3209
        %v3274 = vmul.f32 %v3012, %v3210
        %v3275 = vmul.f32 %v3014, %v3211
        %v3276 = vmul.f32 %v3016, %v3212
        %v3277 = vmul.f32 %v3018, %v3213
        %v3278 = vmul.f32 %v3020, %v3214
        %v3279 = vmul.f32 %v3022, %v3215
        %v3280 = vmul.f32 %v3024, %v3216
        %v3281 = vpack.c.bf16 %v3218, %v3217
        %v3282 = vpack.c.bf16 %v3220, %v3219
        %v3283 = vpack.c.bf16 %v3222, %v3221
        %v3284 = vpack.c.bf16 %v3224, %v3223
        %v3285 = vpack.c.bf16 %v3226, %v3225
        %v3286 = vpack.c.bf16 %v3228, %v3227
        %v3287 = vpack.c.bf16 %v3230, %v3229
        %v3288 = vpack.c.bf16 %v3232, %v3231
        %v3289 = vpack.c.bf16 %v3234, %v3233
        %v3290 = vpack.c.bf16 %v3236, %v3235
        %v3291 = vpack.c.bf16 %v3238, %v3237
        %v3292 = vpack.c.bf16 %v3240, %v3239
        %v3293 = vpack.c.bf16 %v3242, %v3241
        %v3294 = vpack.c.bf16 %v3244, %v3243
        %v3295 = vpack.c.bf16 %v3246, %v3245
        %v3296 = vpack.c.bf16 %v3248, %v3247
        %v3297 = vpack.c.bf16 %v3250, %v3249
        %v3298 = vpack.c.bf16 %v3252, %v3251
        %v3299 = vpack.c.bf16 %v3254, %v3253
        %v3300 = vpack.c.bf16 %v3256, %v3255
        %v3301 = vpack.c.bf16 %v3258, %v3257
        %v3302 = vpack.c.bf16 %v3260, %v3259
        %v3303 = vpack.c.bf16 %v3262, %v3261
        %v3304 = vpack.c.bf16 %v3264, %v3263
        %v3305 = vpack.c.bf16 %v3266, %v3265
        %v3306 = vpack.c.bf16 %v3268, %v3267
        %v3307 = vpack.c.bf16 %v3270, %v3269
        %v3308 = vpack.c.bf16 %v3272, %v3271
        %v3309 = vpack.c.bf16 %v3274, %v3273
        %v3310 = vpack.c.bf16 %v3276, %v3275
        %v3311 = vpack.c.bf16 %v3278, %v3277
        %v3312 = vpack.c.bf16 %v3280, %v3279
        %3313 = vrot.lane.b32.xlu0 %v1933, 64
        %v3314 = vpop.permute.xlu0 %3313
        %3315 = vrot.lane.b32.xlu0 %v1934, 64
        %v3316 = vpop.permute.xlu0 %3315
        %3317 = vrot.lane.b32.xlu0 %v1935, 64
        %v3318 = vpop.permute.xlu0 %3317
        %3319 = vrot.lane.b32.xlu0 %v1936, 64
        %v3320 = vpop.permute.xlu0 %3319
        %3321 = vrot.lane.b32.xlu0 %v1937, 64
        %v3322 = vpop.permute.xlu0 %3321
        %3323 = vrot.lane.b32.xlu0 %v1938, 64
        %v3324 = vpop.permute.xlu0 %3323
        %3325 = vrot.lane.b32.xlu0 %v1939, 64
        %v3326 = vpop.permute.xlu0 %3325
        %3327 = vrot.lane.b32.xlu0 %v1940, 64
        %v3328 = vpop.permute.xlu0 %3327
        %3337 = vmatprep.subr.bf16.mxu0 0
        %3338 = vmatpush1.bf16.msra.mxu0 %v3328
        %3339 = vmatprep.subr.bf16.mxu0 0
        %3340 = vmatpush1.bf16.msra.mxu0 %v3326
        %3341 = vmatprep.subr.bf16.mxu0 0
        %3342 = vmatpush1.bf16.msra.mxu0 %v3324
        %3343 = vmatprep.subr.bf16.mxu0 0
        %3344 = vmatpush1.bf16.msra.mxu0 %v3322
        %3345 = vmatprep.subr.bf16.mxu0 0
        %3346 = vmatpush1.bf16.msra.mxu0 %v3320
        %3347 = vmatprep.subr.bf16.mxu0 0
        %3348 = vmatpush1.bf16.msra.mxu0 %v3318
        %3349 = vmatprep.subr.bf16.mxu0 0
        %3350 = vmatpush1.bf16.msra.mxu0 %v3316
        %3351 = vmatprep.subr.bf16.mxu0 0
        %3352 = vmatpush1.bf16.msra.mxu0 %v3314
        %3353 = vmatprep.subr.bf16.mxu0 0
        %3354 = vmatpush2.bf16.msra.mxu0 0
        %3355 = vmatprep.subr.bf16.mxu0 0
        %3356 = vmatpush2.bf16.msra.mxu0 0
        %3357 = vmatprep.subr.bf16.mxu0 0
        %3358 = vmatpush2.bf16.msra.mxu0 0
        %3359 = vmatprep.subr.bf16.mxu0 0
        %3360 = vmatpush2.bf16.msra.mxu0 0
        %3361 = vmatprep.subr.bf16.mxu0 0
        %3362 = vmatpush2.bf16.msra.mxu0 0
        %3363 = vmatprep.subr.bf16.mxu0 0
        %3364 = vmatpush2.bf16.msra.mxu0 0
        %3365 = vmatprep.subr.bf16.mxu0 0
        %3366 = vmatpush2.bf16.msra.mxu0 0
        %3367 = vmatprep.subr.bf16.mxu0 0
        %3368 = vmatpush2.bf16.msra.mxu0 0
        %3369 = vmatprep.mubr.bf16.mxu0 0
        %3370 = vmatmul.mubr.bf16.gmra.mxu0 %v3281
        %v3371 = vpop.f32.mrf.mxu0
        %v3372 = vadd.f32 0.0, %v3371
        %v3373 = vpop.f32.mrf.mxu0
        %v3374 = vpop.f32.mrf.mxu0
        %v3375 = vadd.f32 0.0, %v3374
        %v3376 = vpop.f32.mrf.mxu0
        %3377 = vmatprep.mubr.bf16.mxu0 0
        %3378 = vmatmul.mubr.bf16.gmra.mxu0 %v3282
        %v3379 = vpop.f32.mrf.mxu0
        %v3380 = vadd.f32 0.0, %v3379
        %v3381 = vpop.f32.mrf.mxu0
        %v3382 = vpop.f32.mrf.mxu0
        %v3383 = vadd.f32 0.0, %v3382
        %v3384 = vpop.f32.mrf.mxu0
        %3385 = vmatprep.mubr.bf16.mxu0 0
        %3386 = vmatmul.mubr.bf16.gmra.mxu0 %v3283
        %v3387 = vpop.f32.mrf.mxu0
        %v3388 = vadd.f32 0.0, %v3387
        %v3389 = vpop.f32.mrf.mxu0
        %v3390 = vpop.f32.mrf.mxu0
        %v3391 = vadd.f32 0.0, %v3390
        %v3392 = vpop.f32.mrf.mxu0
        %3393 = vmatprep.mubr.bf16.mxu0 0
        %3394 = vmatmul.mubr.bf16.gmra.mxu0 %v3284
        %v3395 = vpop.f32.mrf.mxu0
        %v3396 = vadd.f32 0.0, %v3395
        %v3397 = vpop.f32.mrf.mxu0
        %v3398 = vpop.f32.mrf.mxu0
        %v3399 = vadd.f32 0.0, %v3398
        %v3400 = vpop.f32.mrf.mxu0
        %3401 = vmatprep.mubr.bf16.mxu0 0
        %3402 = vmatmul.mubr.bf16.gmra.mxu0 %v3285
        %v3403 = vpop.f32.mrf.mxu0
        %v3404 = vadd.f32 0.0, %v3403
        %v3405 = vpop.f32.mrf.mxu0
        %v3406 = vpop.f32.mrf.mxu0
        %v3407 = vadd.f32 0.0, %v3406
        %v3408 = vpop.f32.mrf.mxu0
        %3409 = vmatprep.mubr.bf16.mxu0 0
        %3410 = vmatmul.mubr.bf16.gmra.mxu0 %v3286
        %v3411 = vpop.f32.mrf.mxu0
        %v3412 = vadd.f32 0.0, %v3411
        %v3413 = vpop.f32.mrf.mxu0
        %v3414 = vpop.f32.mrf.mxu0
        %v3415 = vadd.f32 0.0, %v3414
        %v3416 = vpop.f32.mrf.mxu0
        %3417 = vmatprep.mubr.bf16.mxu0 0
        %3418 = vmatmul.mubr.bf16.gmra.mxu0 %v3287
        %v3419 = vpop.f32.mrf.mxu0
        %v3420 = vadd.f32 0.0, %v3419
        %v3421 = vpop.f32.mrf.mxu0
        %v3422 = vpop.f32.mrf.mxu0
        %v3423 = vadd.f32 0.0, %v3422
        %v3424 = vpop.f32.mrf.mxu0
        %3425 = vmatprep.mubr.bf16.mxu0 0
        %3426 = vmatmul.mubr.bf16.gmra.mxu0 %v3288
        %v3427 = vpop.f32.mrf.mxu0
        %v3428 = vadd.f32 0.0, %v3427
        %v3429 = vpop.f32.mrf.mxu0
        %v3430 = vpop.f32.mrf.mxu0
        %v3431 = vadd.f32 0.0, %v3430
        %v3432 = vpop.f32.mrf.mxu0
        %3433 = vdwg.mxu0
        %3434 = vrot.lane.b32.xlu0 %v1941, 64
        %v3435 = vpop.permute.xlu0 %3434
        %3436 = vrot.lane.b32.xlu0 %v1942, 64
        %v3437 = vpop.permute.xlu0 %3436
        %3438 = vrot.lane.b32.xlu0 %v1943, 64
        %v3439 = vpop.permute.xlu0 %3438
        %3440 = vrot.lane.b32.xlu0 %v1944, 64
        %v3441 = vpop.permute.xlu0 %3440
        %3442 = vrot.lane.b32.xlu0 %v1945, 64
        %v3443 = vpop.permute.xlu0 %3442
        %3444 = vrot.lane.b32.xlu0 %v1946, 64
        %v3445 = vpop.permute.xlu0 %3444
        %3446 = vrot.lane.b32.xlu0 %v1947, 64
        %v3447 = vpop.permute.xlu0 %3446
        %3448 = vrot.lane.b32.xlu0 %v1948, 64
        %v3449 = vpop.permute.xlu0 %3448
        %3458 = vmatprep.subr.bf16.mxu0 0
        %3459 = vmatpush1.bf16.msra.mxu0 %v3449
        %3460 = vmatprep.subr.bf16.mxu0 0
        %3461 = vmatpush1.bf16.msra.mxu0 %v3447
        %3462 = vmatprep.subr.bf16.mxu0 0
        %3463 = vmatpush1.bf16.msra.mxu0 %v3445
        %3464 = vmatprep.subr.bf16.mxu0 0
        %3465 = vmatpush1.bf16.msra.mxu0 %v3443
        %3466 = vmatprep.subr.bf16.mxu0 0
        %3467 = vmatpush1.bf16.msra.mxu0 %v3441
        %3468 = vmatprep.subr.bf16.mxu0 0
        %3469 = vmatpush1.bf16.msra.mxu0 %v3439
        %3470 = vmatprep.subr.bf16.mxu0 0
        %3471 = vmatpush1.bf16.msra.mxu0 %v3437
        %3472 = vmatprep.subr.bf16.mxu0 0
        %3473 = vmatpush1.bf16.msra.mxu0 %v3435
        %3474 = vmatprep.subr.bf16.mxu0 0
        %3475 = vmatpush2.bf16.msra.mxu0 0
        %3476 = vmatprep.subr.bf16.mxu0 0
        %3477 = vmatpush2.bf16.msra.mxu0 0
        %3478 = vmatprep.subr.bf16.mxu0 0
        %3479 = vmatpush2.bf16.msra.mxu0 0
        %3480 = vmatprep.subr.bf16.mxu0 0
        %3481 = vmatpush2.bf16.msra.mxu0 0
        %3482 = vmatprep.subr.bf16.mxu0 0
        %3483 = vmatpush2.bf16.msra.mxu0 0
        %3484 = vmatprep.subr.bf16.mxu0 0
        %3485 = vmatpush2.bf16.msra.mxu0 0
        %3486 = vmatprep.subr.bf16.mxu0 0
        %3487 = vmatpush2.bf16.msra.mxu0 0
        %3488 = vmatprep.subr.bf16.mxu0 0
        %3489 = vmatpush2.bf16.msra.mxu0 0
        %3490 = vmatprep.mubr.bf16.mxu0 0
        %3491 = vmatmul.mubr.bf16.gmra.mxu0 %v3289
        %v3492 = vpop.f32.mrf.mxu0
        %v3493 = vadd.f32 0.0, %v3492
        %v3494 = vpop.f32.mrf.mxu0
        %v3495 = vpop.f32.mrf.mxu0
        %v3496 = vadd.f32 0.0, %v3495
        %v3497 = vpop.f32.mrf.mxu0
        %3498 = vmatprep.mubr.bf16.mxu0 0
        %3499 = vmatmul.mubr.bf16.gmra.mxu0 %v3290
        %v3500 = vpop.f32.mrf.mxu0
        %v3501 = vadd.f32 0.0, %v3500
        %v3502 = vpop.f32.mrf.mxu0
        %v3503 = vpop.f32.mrf.mxu0
        %v3504 = vadd.f32 0.0, %v3503
        %v3505 = vpop.f32.mrf.mxu0
        %3506 = vmatprep.mubr.bf16.mxu0 0
        %3507 = vmatmul.mubr.bf16.gmra.mxu0 %v3291
        %v3508 = vpop.f32.mrf.mxu0
        %v3509 = vadd.f32 0.0, %v3508
        %v3510 = vpop.f32.mrf.mxu0
        %v3511 = vpop.f32.mrf.mxu0
        %v3512 = vadd.f32 0.0, %v3511
        %v3513 = vpop.f32.mrf.mxu0
        %3514 = vmatprep.mubr.bf16.mxu0 0
        %3515 = vmatmul.mubr.bf16.gmra.mxu0 %v3292
        %v3516 = vpop.f32.mrf.mxu0
        %v3517 = vadd.f32 0.0, %v3516
        %v3518 = vpop.f32.mrf.mxu0
        %v3519 = vpop.f32.mrf.mxu0
        %v3520 = vadd.f32 0.0, %v3519
        %v3521 = vpop.f32.mrf.mxu0
        %3522 = vmatprep.mubr.bf16.mxu0 0
        %3523 = vmatmul.mubr.bf16.gmra.mxu0 %v3293
        %v3524 = vpop.f32.mrf.mxu0
        %v3525 = vadd.f32 0.0, %v3524
        %v3526 = vpop.f32.mrf.mxu0
        %v3527 = vpop.f32.mrf.mxu0
        %v3528 = vadd.f32 0.0, %v3527
        %v3529 = vpop.f32.mrf.mxu0
        %3530 = vmatprep.mubr.bf16.mxu0 0
        %3531 = vmatmul.mubr.bf16.gmra.mxu0 %v3294
        %v3532 = vpop.f32.mrf.mxu0
        %v3533 = vadd.f32 0.0, %v3532
        %v3534 = vpop.f32.mrf.mxu0
        %v3535 = vpop.f32.mrf.mxu0
        %v3536 = vadd.f32 0.0, %v3535
        %v3537 = vpop.f32.mrf.mxu0
        %3538 = vmatprep.mubr.bf16.mxu0 0
        %3539 = vmatmul.mubr.bf16.gmra.mxu0 %v3295
        %v3540 = vpop.f32.mrf.mxu0
        %v3541 = vadd.f32 0.0, %v3540
        %v3542 = vpop.f32.mrf.mxu0
        %v3543 = vpop.f32.mrf.mxu0
        %v3544 = vadd.f32 0.0, %v3543
        %v3545 = vpop.f32.mrf.mxu0
        %3546 = vmatprep.mubr.bf16.mxu0 0
        %3547 = vmatmul.mubr.bf16.gmra.mxu0 %v3296
        %v3548 = vpop.f32.mrf.mxu0
        %v3549 = vadd.f32 0.0, %v3548
        %v3550 = vpop.f32.mrf.mxu0
        %v3551 = vpop.f32.mrf.mxu0
        %v3552 = vadd.f32 0.0, %v3551
        %v3553 = vpop.f32.mrf.mxu0
        %3554 = vdwg.mxu0
        %3555 = vrot.lane.b32.xlu0 %v1949, 64
        %v3556 = vpop.permute.xlu0 %3555
        %3557 = vrot.lane.b32.xlu0 %v1950, 64
        %v3558 = vpop.permute.xlu0 %3557
        %3559 = vrot.lane.b32.xlu0 %v1951, 64
        %v3560 = vpop.permute.xlu0 %3559
        %3561 = vrot.lane.b32.xlu0 %v1952, 64
        %v3562 = vpop.permute.xlu0 %3561
        %3563 = vrot.lane.b32.xlu0 %v1953, 64
        %v3564 = vpop.permute.xlu0 %3563
        %3565 = vrot.lane.b32.xlu0 %v1954, 64
        %v3566 = vpop.permute.xlu0 %3565
        %3567 = vrot.lane.b32.xlu0 %v1955, 64
        %v3568 = vpop.permute.xlu0 %3567
        %3569 = vrot.lane.b32.xlu0 %v1956, 64
        %v3570 = vpop.permute.xlu0 %3569
        %3579 = vmatprep.subr.bf16.mxu0 0
        %3580 = vmatpush1.bf16.msra.mxu0 %v3570
        %3581 = vmatprep.subr.bf16.mxu0 0
        %3582 = vmatpush1.bf16.msra.mxu0 %v3568
        %3583 = vmatprep.subr.bf16.mxu0 0
        %3584 = vmatpush1.bf16.msra.mxu0 %v3566
        %3585 = vmatprep.subr.bf16.mxu0 0
        %3586 = vmatpush1.bf16.msra.mxu0 %v3564
        %3587 = vmatprep.subr.bf16.mxu0 0
        %3588 = vmatpush1.bf16.msra.mxu0 %v3562
        %3589 = vmatprep.subr.bf16.mxu0 0
        %3590 = vmatpush1.bf16.msra.mxu0 %v3560
        %3591 = vmatprep.subr.bf16.mxu0 0
        %3592 = vmatpush1.bf16.msra.mxu0 %v3558
        %3593 = vmatprep.subr.bf16.mxu0 0
        %3594 = vmatpush1.bf16.msra.mxu0 %v3556
        %3595 = vmatprep.subr.bf16.mxu0 0
        %3596 = vmatpush2.bf16.msra.mxu0 0
        %3597 = vmatprep.subr.bf16.mxu0 0
        %3598 = vmatpush2.bf16.msra.mxu0 0
        %3599 = vmatprep.subr.bf16.mxu0 0
        %3600 = vmatpush2.bf16.msra.mxu0 0
        %3601 = vmatprep.subr.bf16.mxu0 0
        %3602 = vmatpush2.bf16.msra.mxu0 0
        %3603 = vmatprep.subr.bf16.mxu0 0
        %3604 = vmatpush2.bf16.msra.mxu0 0
        %3605 = vmatprep.subr.bf16.mxu0 0
        %3606 = vmatpush2.bf16.msra.mxu0 0
        %3607 = vmatprep.subr.bf16.mxu0 0
        %3608 = vmatpush2.bf16.msra.mxu0 0
        %3609 = vmatprep.subr.bf16.mxu0 0
        %3610 = vmatpush2.bf16.msra.mxu0 0
        %3611 = vmatprep.mubr.bf16.mxu0 0
        %3612 = vmatmul.mubr.bf16.gmra.mxu0 %v3297
        %v3613 = vpop.f32.mrf.mxu0
        %v3614 = vadd.f32 0.0, %v3613
        %v3615 = vpop.f32.mrf.mxu0
        %v3616 = vpop.f32.mrf.mxu0
        %v3617 = vadd.f32 0.0, %v3616
        %v3618 = vpop.f32.mrf.mxu0
        %3619 = vmatprep.mubr.bf16.mxu0 0
        %3620 = vmatmul.mubr.bf16.gmra.mxu0 %v3298
        %v3621 = vpop.f32.mrf.mxu0
        %v3622 = vadd.f32 0.0, %v3621
        %v3623 = vpop.f32.mrf.mxu0
        %v3624 = vpop.f32.mrf.mxu0
        %v3625 = vadd.f32 0.0, %v3624
        %v3626 = vpop.f32.mrf.mxu0
        %3627 = vmatprep.mubr.bf16.mxu0 0
        %3628 = vmatmul.mubr.bf16.gmra.mxu0 %v3299
        %v3629 = vpop.f32.mrf.mxu0
        %v3630 = vadd.f32 0.0, %v3629
        %v3631 = vpop.f32.mrf.mxu0
        %v3632 = vpop.f32.mrf.mxu0
        %v3633 = vadd.f32 0.0, %v3632
        %v3634 = vpop.f32.mrf.mxu0
        %3635 = vmatprep.mubr.bf16.mxu0 0
        %3636 = vmatmul.mubr.bf16.gmra.mxu0 %v3300
        %v3637 = vpop.f32.mrf.mxu0
        %v3638 = vadd.f32 0.0, %v3637
        %v3639 = vpop.f32.mrf.mxu0
        %v3640 = vpop.f32.mrf.mxu0
        %v3641 = vadd.f32 0.0, %v3640
        %v3642 = vpop.f32.mrf.mxu0
        %3643 = vmatprep.mubr.bf16.mxu0 0
        %3644 = vmatmul.mubr.bf16.gmra.mxu0 %v3301
        %v3645 = vpop.f32.mrf.mxu0
        %v3646 = vadd.f32 0.0, %v3645
        %v3647 = vpop.f32.mrf.mxu0
        %v3648 = vpop.f32.mrf.mxu0
        %v3649 = vadd.f32 0.0, %v3648
        %v3650 = vpop.f32.mrf.mxu0
        %3651 = vmatprep.mubr.bf16.mxu0 0
        %3652 = vmatmul.mubr.bf16.gmra.mxu0 %v3302
        %v3653 = vpop.f32.mrf.mxu0
        %v3654 = vadd.f32 0.0, %v3653
        %v3655 = vpop.f32.mrf.mxu0
        %v3656 = vpop.f32.mrf.mxu0
        %v3657 = vadd.f32 0.0, %v3656
        %v3658 = vpop.f32.mrf.mxu0
        %3659 = vmatprep.mubr.bf16.mxu0 0
        %3660 = vmatmul.mubr.bf16.gmra.mxu0 %v3303
        %v3661 = vpop.f32.mrf.mxu0
        %v3662 = vadd.f32 0.0, %v3661
        %v3663 = vpop.f32.mrf.mxu0
        %v3664 = vpop.f32.mrf.mxu0
        %v3665 = vadd.f32 0.0, %v3664
        %v3666 = vpop.f32.mrf.mxu0
        %3667 = vmatprep.mubr.bf16.mxu0 0
        %3668 = vmatmul.mubr.bf16.gmra.mxu0 %v3304
        %v3669 = vpop.f32.mrf.mxu0
        %v3670 = vadd.f32 0.0, %v3669
        %v3671 = vpop.f32.mrf.mxu0
        %v3672 = vpop.f32.mrf.mxu0
        %v3673 = vadd.f32 0.0, %v3672
        %v3674 = vpop.f32.mrf.mxu0
        %3675 = vdwg.mxu0
        %3676 = vrot.lane.b32.xlu0 %v1957, 64
        %v3677 = vpop.permute.xlu0 %3676
        %3678 = vrot.lane.b32.xlu0 %v1958, 64
        %v3679 = vpop.permute.xlu0 %3678
        %3680 = vrot.lane.b32.xlu0 %v1959, 64
        %v3681 = vpop.permute.xlu0 %3680
        %3682 = vrot.lane.b32.xlu0 %v1960, 64
        %v3683 = vpop.permute.xlu0 %3682
        %3684 = vrot.lane.b32.xlu0 %v1961, 64
        %v3685 = vpop.permute.xlu0 %3684
        %3686 = vrot.lane.b32.xlu0 %v1962, 64
        %v3687 = vpop.permute.xlu0 %3686
        %3688 = vrot.lane.b32.xlu0 %v1963, 64
        %v3689 = vpop.permute.xlu0 %3688
        %3690 = vrot.lane.b32.xlu0 %v1964, 64
        %v3691 = vpop.permute.xlu0 %3690
        %3700 = vmatprep.subr.bf16.mxu0 0
        %3701 = vmatpush1.bf16.msra.mxu0 %v3691
        %3702 = vmatprep.subr.bf16.mxu0 0
        %3703 = vmatpush1.bf16.msra.mxu0 %v3689
        %3704 = vmatprep.subr.bf16.mxu0 0
        %3705 = vmatpush1.bf16.msra.mxu0 %v3687
        %3706 = vmatprep.subr.bf16.mxu0 0
        %3707 = vmatpush1.bf16.msra.mxu0 %v3685
        %3708 = vmatprep.subr.bf16.mxu0 0
        %3709 = vmatpush1.bf16.msra.mxu0 %v3683
        %3710 = vmatprep.subr.bf16.mxu0 0
        %3711 = vmatpush1.bf16.msra.mxu0 %v3681
        %3712 = vmatprep.subr.bf16.mxu0 0
        %3713 = vmatpush1.bf16.msra.mxu0 %v3679
        %3714 = vmatprep.subr.bf16.mxu0 0
        %3715 = vmatpush1.bf16.msra.mxu0 %v3677
        %3716 = vmatprep.subr.bf16.mxu0 0
        %3717 = vmatpush2.bf16.msra.mxu0 0
        %3718 = vmatprep.subr.bf16.mxu0 0
        %3719 = vmatpush2.bf16.msra.mxu0 0
        %3720 = vmatprep.subr.bf16.mxu0 0
        %3721 = vmatpush2.bf16.msra.mxu0 0
        %3722 = vmatprep.subr.bf16.mxu0 0
        %3723 = vmatpush2.bf16.msra.mxu0 0
        %3724 = vmatprep.subr.bf16.mxu0 0
        %3725 = vmatpush2.bf16.msra.mxu0 0
        %3726 = vmatprep.subr.bf16.mxu0 0
        %3727 = vmatpush2.bf16.msra.mxu0 0
        %3728 = vmatprep.subr.bf16.mxu0 0
        %3729 = vmatpush2.bf16.msra.mxu0 0
        %3730 = vmatprep.subr.bf16.mxu0 0
        %3731 = vmatpush2.bf16.msra.mxu0 0
        %3732 = vmatprep.mubr.bf16.mxu0 0
        %3733 = vmatmul.mubr.bf16.gmra.mxu0 %v3305
        %v3734 = vpop.f32.mrf.mxu0
        %v3735 = vadd.f32 0.0, %v3734
        %v3736 = vpop.f32.mrf.mxu0
        %v3737 = vpop.f32.mrf.mxu0
        %v3738 = vadd.f32 0.0, %v3737
        %v3739 = vpop.f32.mrf.mxu0
        %3740 = vmatprep.mubr.bf16.mxu0 0
        %3741 = vmatmul.mubr.bf16.gmra.mxu0 %v3306
        %v3742 = vpop.f32.mrf.mxu0
        %v3743 = vadd.f32 0.0, %v3742
        %v3744 = vpop.f32.mrf.mxu0
        %v3745 = vpop.f32.mrf.mxu0
        %v3746 = vadd.f32 0.0, %v3745
        %v3747 = vpop.f32.mrf.mxu0
        %3748 = vmatprep.mubr.bf16.mxu0 0
        %3749 = vmatmul.mubr.bf16.gmra.mxu0 %v3307
        %v3750 = vpop.f32.mrf.mxu0
        %v3751 = vadd.f32 0.0, %v3750
        %v3752 = vpop.f32.mrf.mxu0
        %v3753 = vpop.f32.mrf.mxu0
        %v3754 = vadd.f32 0.0, %v3753
        %v3755 = vpop.f32.mrf.mxu0
        %3756 = vmatprep.mubr.bf16.mxu0 0
        %3757 = vmatmul.mubr.bf16.gmra.mxu0 %v3308
        %v3758 = vpop.f32.mrf.mxu0
        %v3759 = vadd.f32 0.0, %v3758
        %v3760 = vpop.f32.mrf.mxu0
        %v3761 = vpop.f32.mrf.mxu0
        %v3762 = vadd.f32 0.0, %v3761
        %v3763 = vpop.f32.mrf.mxu0
        %3764 = vmatprep.mubr.bf16.mxu0 0
        %3765 = vmatmul.mubr.bf16.gmra.mxu0 %v3309
        %v3766 = vpop.f32.mrf.mxu0
        %v3767 = vadd.f32 0.0, %v3766
        %v3768 = vpop.f32.mrf.mxu0
        %v3769 = vpop.f32.mrf.mxu0
        %v3770 = vadd.f32 0.0, %v3769
        %v3771 = vpop.f32.mrf.mxu0
        %3772 = vmatprep.mubr.bf16.mxu0 0
        %3773 = vmatmul.mubr.bf16.gmra.mxu0 %v3310
        %v3774 = vpop.f32.mrf.mxu0
        %v3775 = vadd.f32 0.0, %v3774
        %v3776 = vpop.f32.mrf.mxu0
        %v3777 = vpop.f32.mrf.mxu0
        %v3778 = vadd.f32 0.0, %v3777
        %v3779 = vpop.f32.mrf.mxu0
        %3780 = vmatprep.mubr.bf16.mxu0 0
        %3781 = vmatmul.mubr.bf16.gmra.mxu0 %v3311
        %v3782 = vpop.f32.mrf.mxu0
        %v3783 = vadd.f32 0.0, %v3782
        %v3784 = vpop.f32.mrf.mxu0
        %v3785 = vpop.f32.mrf.mxu0
        %v3786 = vadd.f32 0.0, %v3785
        %v3787 = vpop.f32.mrf.mxu0
        %3788 = vmatprep.mubr.bf16.mxu0 0
        %3789 = vmatmul.mubr.bf16.gmra.mxu0 %v3312
        %v3790 = vpop.f32.mrf.mxu0
        %v3791 = vadd.f32 0.0, %v3790
        %v3792 = vpop.f32.mrf.mxu0
        %v3793 = vpop.f32.mrf.mxu0
        %v3794 = vadd.f32 0.0, %v3793
        %v3795 = vpop.f32.mrf.mxu0
        %3796 = vdwg.mxu0
        %v3797 = vpack.c.bf16 %v3375, %v3372
        %v3798 = vpack.c.bf16 %v3383, %v3380
        %v3799 = vpack.c.bf16 %v3391, %v3388
        %v3800 = vpack.c.bf16 %v3399, %v3396
        %v3801 = vpack.c.bf16 %v3407, %v3404
        %v3802 = vpack.c.bf16 %v3415, %v3412
        %v3803 = vpack.c.bf16 %v3423, %v3420
        %v3804 = vpack.c.bf16 %v3431, %v3428
        %v3805 = vpack.c.bf16 %v3496, %v3493
        %v3806 = vpack.c.bf16 %v3504, %v3501
        %v3807 = vpack.c.bf16 %v3512, %v3509
        %v3808 = vpack.c.bf16 %v3520, %v3517
        %v3809 = vpack.c.bf16 %v3528, %v3525
        %v3810 = vpack.c.bf16 %v3536, %v3533
        %v3811 = vpack.c.bf16 %v3544, %v3541
        %v3812 = vpack.c.bf16 %v3552, %v3549
        %v3813 = vpack.c.bf16 %v3617, %v3614
        %v3814 = vpack.c.bf16 %v3625, %v3622
        %v3815 = vpack.c.bf16 %v3633, %v3630
        %v3816 = vpack.c.bf16 %v3641, %v3638
        %v3817 = vpack.c.bf16 %v3649, %v3646
        %v3818 = vpack.c.bf16 %v3657, %v3654
        %v3819 = vpack.c.bf16 %v3665, %v3662
        %v3820 = vpack.c.bf16 %v3673, %v3670
        %v3821 = vpack.c.bf16 %v3738, %v3735
        %v3822 = vpack.c.bf16 %v3746, %v3743
        %v3823 = vpack.c.bf16 %v3754, %v3751
        %v3824 = vpack.c.bf16 %v3762, %v3759
        %v3825 = vpack.c.bf16 %v3770, %v3767
        %v3826 = vpack.c.bf16 %v3778, %v3775
        %v3827 = vpack.c.bf16 %v3786, %v3783
        %v3828 = vpack.c.bf16 %v3794, %v3791
        %v3829 = vld [vmem:[%s4] sm:$0xf]
        %v3830 = vld [vmem:[%s4 + $0x4] sm:$0xf]
        %v3831 = vld [vmem:[%s4 + $0x8] sm:$0xf]
        %v3832 = vld [vmem:[%s4 + $0xc] sm:$0xf]
        %v3833 = vld [vmem:[%s5] sm:$0x1]
        %v3835 = vlaneseq
        %v3836 = vshrl.u32 %v3835, 7
        %v3837 = vsub.s32 0, %v3836
        %v3838 = vrot.slane %v3833, %v3837
        %v3844 = vunpack.c.l.b16 %v3829
        %v3845 = vunpack.c.l.b16 %v3830
        %v3846 = vunpack.c.l.b16 %v3831
        %v3847 = vunpack.c.l.b16 %v3832
        %v3848 = vpack.c.b16 %v3845, %v3844
        %v3849 = vpack.c.b16 %v3847, %v3846
        %v3853 = vsel %vm526, %v3797, 0
        %v3856 = vsel %vm526, %v3798, 0
        %v3859 = vsel %vm526, %v3799, 0
        %v3862 = vsel %vm526, %v3800, 0
        %v3865 = vsel %vm526, %v3801, 0
        %v3868 = vsel %vm526, %v3802, 0
        %v3871 = vsel %vm526, %v3803, 0
        %v3874 = vsel %vm526, %v3804, 0
        %v3877 = vsel %vm526, %v3805, 0
        %v3880 = vsel %vm526, %v3806, 0
        %v3883 = vsel %vm526, %v3807, 0
        %v3886 = vsel %vm526, %v3808, 0
        %v3889 = vsel %vm526, %v3809, 0
        %v3892 = vsel %vm526, %v3810, 0
        %v3895 = vsel %vm526, %v3811, 0
        %v3898 = vsel %vm526, %v3812, 0
        %v3901 = vsel %vm526, %v3813, 0
        %v3904 = vsel %vm526, %v3814, 0
        %v3907 = vsel %vm526, %v3815, 0
        %v3910 = vsel %vm526, %v3816, 0
        %v3913 = vsel %vm526, %v3817, 0
        %v3916 = vsel %vm526, %v3818, 0
        %v3919 = vsel %vm526, %v3819, 0
        %v3922 = vsel %vm526, %v3820, 0
        %v3925 = vsel %vm526, %v3821, 0
        %v3928 = vsel %vm526, %v3822, 0
        %v3931 = vsel %vm526, %v3823, 0
        %v3934 = vsel %vm526, %v3824, 0
        %v3937 = vsel %vm526, %v3825, 0
        %v3940 = vsel %vm526, %v3826, 0
        %v3943 = vsel %vm526, %v3827, 0
        %v3946 = vsel %vm526, %v3828, 0
        %3948 = vmatprep.subr.bf16.mxu0 0
        %3949 = vmatpush1.bf16.msra.mxu0 0
        %3950 = vmatprep.subr.bf16.mxu0 0
        %3951 = vmatpush1.bf16.msra.mxu0 0
        %3952 = vmatprep.subr.bf16.mxu0 0
        %3953 = vmatpush1.bf16.msra.mxu0 0
        %3954 = vmatprep.subr.bf16.mxu0 0
        %3955 = vmatpush1.bf16.msra.mxu0 0
        %3956 = vmatprep.subr.bf16.mxu0 0
        %3957 = vmatpush1.bf16.msra.mxu0 0
        %3958 = vmatprep.subr.bf16.mxu0 0
        %3959 = vmatpush1.bf16.msra.mxu0 0
        %3960 = vmatprep.subr.bf16.mxu0 0
        %3961 = vmatpush1.bf16.msra.mxu0 %v3849
        %3962 = vmatprep.subr.bf16.mxu0 0
        %3963 = vmatpush1.bf16.msra.mxu0 %v3848
        %3964 = vmatprep.subr.bf16.mxu0 0
        %3965 = vmatpush2.bf16.msra.mxu0 0
        %3966 = vmatprep.subr.bf16.mxu0 0
        %3967 = vmatpush2.bf16.msra.mxu0 0
        %3968 = vmatprep.subr.bf16.mxu0 0
        %3969 = vmatpush2.bf16.msra.mxu0 0
        %3970 = vmatprep.subr.bf16.mxu0 0
        %3971 = vmatpush2.bf16.msra.mxu0 0
        %3972 = vmatprep.subr.bf16.mxu0 0
        %3973 = vmatpush2.bf16.msra.mxu0 0
        %3974 = vmatprep.subr.bf16.mxu0 0
        %3975 = vmatpush2.bf16.msra.mxu0 0
        %3976 = vmatprep.subr.bf16.mxu0 0
        %3977 = vmatpush2.bf16.msra.mxu0 0
        %3978 = vmatprep.subr.bf16.mxu0 0
        %3979 = vmatpush2.bf16.msra.mxu0 0
        %3980 = vmatprep.mubr.bf16.mxu0 0
        %3981 = vmatmul.mubr.bf16.gmra.mxu0 %v3853
        %v3982 = vpop.f32.mrf.mxu0
        %v3983 = vadd.f32 %v3838, %v3982
        %v3984 = vpop.f32.mrf.mxu0
        %v3985 = vpop.f32.mrf.mxu0
        %v3986 = vadd.f32 %v3838, %v3985
        %v3987 = vpop.f32.mrf.mxu0
        %3988 = vmatprep.mubr.bf16.mxu0 0
        %3989 = vmatmul.mubr.bf16.gmra.mxu0 %v3856
        %v3990 = vpop.f32.mrf.mxu0
        %v3991 = vadd.f32 %v3838, %v3990
        %v3992 = vpop.f32.mrf.mxu0
        %v3993 = vpop.f32.mrf.mxu0
        %v3994 = vadd.f32 %v3838, %v3993
        %v3995 = vpop.f32.mrf.mxu0
        %3996 = vmatprep.mubr.bf16.mxu0 0
        %3997 = vmatmul.mubr.bf16.gmra.mxu0 %v3859
        %v3998 = vpop.f32.mrf.mxu0
        %v3999 = vadd.f32 %v3838, %v3998
        %v4000 = vpop.f32.mrf.mxu0
        %v4001 = vpop.f32.mrf.mxu0
        %v4002 = vadd.f32 %v3838, %v4001
        %v4003 = vpop.f32.mrf.mxu0
        %4004 = vmatprep.mubr.bf16.mxu0 0
        %4005 = vmatmul.mubr.bf16.gmra.mxu0 %v3862
        %v4006 = vpop.f32.mrf.mxu0
        %v4007 = vadd.f32 %v3838, %v4006
        %v4008 = vpop.f32.mrf.mxu0
        %v4009 = vpop.f32.mrf.mxu0
        %v4010 = vadd.f32 %v3838, %v4009
        %v4011 = vpop.f32.mrf.mxu0
        %4012 = vmatprep.mubr.bf16.mxu0 0
        %4013 = vmatmul.mubr.bf16.gmra.mxu0 %v3865
        %v4014 = vpop.f32.mrf.mxu0
        %v4015 = vadd.f32 %v3838, %v4014
        %v4016 = vpop.f32.mrf.mxu0
        %v4017 = vpop.f32.mrf.mxu0
        %v4018 = vadd.f32 %v3838, %v4017
        %v4019 = vpop.f32.mrf.mxu0
        %4020 = vmatprep.mubr.bf16.mxu0 0
        %4021 = vmatmul.mubr.bf16.gmra.mxu0 %v3868
        %v4022 = vpop.f32.mrf.mxu0
        %v4023 = vadd.f32 %v3838, %v4022
        %v4024 = vpop.f32.mrf.mxu0
        %v4025 = vpop.f32.mrf.mxu0
        %v4026 = vadd.f32 %v3838, %v4025
        %v4027 = vpop.f32.mrf.mxu0
        %4028 = vmatprep.mubr.bf16.mxu0 0
        %4029 = vmatmul.mubr.bf16.gmra.mxu0 %v3871
        %v4030 = vpop.f32.mrf.mxu0
        %v4031 = vadd.f32 %v3838, %v4030
        %v4032 = vpop.f32.mrf.mxu0
        %v4033 = vpop.f32.mrf.mxu0
        %v4034 = vadd.f32 %v3838, %v4033
        %v4035 = vpop.f32.mrf.mxu0
        %4036 = vmatprep.mubr.bf16.mxu0 0
        %4037 = vmatmul.mubr.bf16.gmra.mxu0 %v3874
        %v4038 = vpop.f32.mrf.mxu0
        %v4039 = vadd.f32 %v3838, %v4038
        %v4040 = vpop.f32.mrf.mxu0
        %v4041 = vpop.f32.mrf.mxu0
        %v4042 = vadd.f32 %v3838, %v4041
        %v4043 = vpop.f32.mrf.mxu0
        %4044 = vmatprep.mubr.bf16.mxu0 0
        %4045 = vmatmul.mubr.bf16.gmra.mxu0 %v3877
        %v4046 = vpop.f32.mrf.mxu0
        %v4047 = vadd.f32 %v3838, %v4046
        %v4048 = vpop.f32.mrf.mxu0
        %v4049 = vpop.f32.mrf.mxu0
        %v4050 = vadd.f32 %v3838, %v4049
        %v4051 = vpop.f32.mrf.mxu0
        %4052 = vmatprep.mubr.bf16.mxu0 0
        %4053 = vmatmul.mubr.bf16.gmra.mxu0 %v3880
        %v4054 = vpop.f32.mrf.mxu0
        %v4055 = vadd.f32 %v3838, %v4054
        %v4056 = vpop.f32.mrf.mxu0
        %v4057 = vpop.f32.mrf.mxu0
        %v4058 = vadd.f32 %v3838, %v4057
        %v4059 = vpop.f32.mrf.mxu0
        %4060 = vmatprep.mubr.bf16.mxu0 0
        %4061 = vmatmul.mubr.bf16.gmra.mxu0 %v3883
        %v4062 = vpop.f32.mrf.mxu0
        %v4063 = vadd.f32 %v3838, %v4062
        %v4064 = vpop.f32.mrf.mxu0
        %v4065 = vpop.f32.mrf.mxu0
        %v4066 = vadd.f32 %v3838, %v4065
        %v4067 = vpop.f32.mrf.mxu0
        %4068 = vmatprep.mubr.bf16.mxu0 0
        %4069 = vmatmul.mubr.bf16.gmra.mxu0 %v3886
        %v4070 = vpop.f32.mrf.mxu0
        %v4071 = vadd.f32 %v3838, %v4070
        %v4072 = vpop.f32.mrf.mxu0
        %v4073 = vpop.f32.mrf.mxu0
        %v4074 = vadd.f32 %v3838, %v4073
        %v4075 = vpop.f32.mrf.mxu0
        %4076 = vmatprep.mubr.bf16.mxu0 0
        %4077 = vmatmul.mubr.bf16.gmra.mxu0 %v3889
        %v4078 = vpop.f32.mrf.mxu0
        %v4079 = vadd.f32 %v3838, %v4078
        %v4080 = vpop.f32.mrf.mxu0
        %v4081 = vpop.f32.mrf.mxu0
        %v4082 = vadd.f32 %v3838, %v4081
        %v4083 = vpop.f32.mrf.mxu0
        %4084 = vmatprep.mubr.bf16.mxu0 0
        %4085 = vmatmul.mubr.bf16.gmra.mxu0 %v3892
        %v4086 = vpop.f32.mrf.mxu0
        %v4087 = vadd.f32 %v3838, %v4086
        %v4088 = vpop.f32.mrf.mxu0
        %v4089 = vpop.f32.mrf.mxu0
        %v4090 = vadd.f32 %v3838, %v4089
        %v4091 = vpop.f32.mrf.mxu0
        %4092 = vmatprep.mubr.bf16.mxu0 0
        %4093 = vmatmul.mubr.bf16.gmra.mxu0 %v3895
        %v4094 = vpop.f32.mrf.mxu0
        %v4095 = vadd.f32 %v3838, %v4094
        %v4096 = vpop.f32.mrf.mxu0
        %v4097 = vpop.f32.mrf.mxu0
        %v4098 = vadd.f32 %v3838, %v4097
        %v4099 = vpop.f32.mrf.mxu0
        %4100 = vmatprep.mubr.bf16.mxu0 0
        %4101 = vmatmul.mubr.bf16.gmra.mxu0 %v3898
        %v4102 = vpop.f32.mrf.mxu0
        %v4103 = vadd.f32 %v3838, %v4102
        %v4104 = vpop.f32.mrf.mxu0
        %v4105 = vpop.f32.mrf.mxu0
        %v4106 = vadd.f32 %v3838, %v4105
        %v4107 = vpop.f32.mrf.mxu0
        %4108 = vmatprep.mubr.bf16.mxu0 0
        %4109 = vmatmul.mubr.bf16.gmra.mxu0 %v3901
        %v4110 = vpop.f32.mrf.mxu0
        %v4111 = vadd.f32 %v3838, %v4110
        %v4112 = vpop.f32.mrf.mxu0
        %v4113 = vpop.f32.mrf.mxu0
        %v4114 = vadd.f32 %v3838, %v4113
        %v4115 = vpop.f32.mrf.mxu0
        %4116 = vmatprep.mubr.bf16.mxu0 0
        %4117 = vmatmul.mubr.bf16.gmra.mxu0 %v3904
        %v4118 = vpop.f32.mrf.mxu0
        %v4119 = vadd.f32 %v3838, %v4118
        %v4120 = vpop.f32.mrf.mxu0
        %v4121 = vpop.f32.mrf.mxu0
        %v4122 = vadd.f32 %v3838, %v4121
        %v4123 = vpop.f32.mrf.mxu0
        %4124 = vmatprep.mubr.bf16.mxu0 0
        %4125 = vmatmul.mubr.bf16.gmra.mxu0 %v3907
        %v4126 = vpop.f32.mrf.mxu0
        %v4127 = vadd.f32 %v3838, %v4126
        %v4128 = vpop.f32.mrf.mxu0
        %v4129 = vpop.f32.mrf.mxu0
        %v4130 = vadd.f32 %v3838, %v4129
        %v4131 = vpop.f32.mrf.mxu0
        %4132 = vmatprep.mubr.bf16.mxu0 0
        %4133 = vmatmul.mubr.bf16.gmra.mxu0 %v3910
        %v4134 = vpop.f32.mrf.mxu0
        %v4135 = vadd.f32 %v3838, %v4134
        %v4136 = vpop.f32.mrf.mxu0
        %v4137 = vpop.f32.mrf.mxu0
        %v4138 = vadd.f32 %v3838, %v4137
        %v4139 = vpop.f32.mrf.mxu0
        %4140 = vmatprep.mubr.bf16.mxu0 0
        %4141 = vmatmul.mubr.bf16.gmra.mxu0 %v3913
        %v4142 = vpop.f32.mrf.mxu0
        %v4143 = vadd.f32 %v3838, %v4142
        %v4144 = vpop.f32.mrf.mxu0
        %v4145 = vpop.f32.mrf.mxu0
        %v4146 = vadd.f32 %v3838, %v4145
        %v4147 = vpop.f32.mrf.mxu0
        %4148 = vmatprep.mubr.bf16.mxu0 0
        %4149 = vmatmul.mubr.bf16.gmra.mxu0 %v3916
        %v4150 = vpop.f32.mrf.mxu0
        %v4151 = vadd.f32 %v3838, %v4150
        %v4152 = vpop.f32.mrf.mxu0
        %v4153 = vpop.f32.mrf.mxu0
        %v4154 = vadd.f32 %v3838, %v4153
        %v4155 = vpop.f32.mrf.mxu0
        %4156 = vmatprep.mubr.bf16.mxu0 0
        %4157 = vmatmul.mubr.bf16.gmra.mxu0 %v3919
        %v4158 = vpop.f32.mrf.mxu0
        %v4159 = vadd.f32 %v3838, %v4158
        %v4160 = vpop.f32.mrf.mxu0
        %v4161 = vpop.f32.mrf.mxu0
        %v4162 = vadd.f32 %v3838, %v4161
        %v4163 = vpop.f32.mrf.mxu0
        %4164 = vmatprep.mubr.bf16.mxu0 0
        %4165 = vmatmul.mubr.bf16.gmra.mxu0 %v3922
        %v4166 = vpop.f32.mrf.mxu0
        %v4167 = vadd.f32 %v3838, %v4166
        %v4168 = vpop.f32.mrf.mxu0
        %v4169 = vpop.f32.mrf.mxu0
        %v4170 = vadd.f32 %v3838, %v4169
        %v4171 = vpop.f32.mrf.mxu0
        %4172 = vmatprep.mubr.bf16.mxu0 0
        %4173 = vmatmul.mubr.bf16.gmra.mxu0 %v3925
        %v4174 = vpop.f32.mrf.mxu0
        %v4175 = vadd.f32 %v3838, %v4174
        %v4176 = vpop.f32.mrf.mxu0
        %v4177 = vpop.f32.mrf.mxu0
        %v4178 = vadd.f32 %v3838, %v4177
        %v4179 = vpop.f32.mrf.mxu0
        %4180 = vmatprep.mubr.bf16.mxu0 0
        %4181 = vmatmul.mubr.bf16.gmra.mxu0 %v3928
        %v4182 = vpop.f32.mrf.mxu0
        %v4183 = vadd.f32 %v3838, %v4182
        %v4184 = vpop.f32.mrf.mxu0
        %v4185 = vpop.f32.mrf.mxu0
        %v4186 = vadd.f32 %v3838, %v4185
        %v4187 = vpop.f32.mrf.mxu0
        %4188 = vmatprep.mubr.bf16.mxu0 0
        %4189 = vmatmul.mubr.bf16.gmra.mxu0 %v3931
        %v4190 = vpop.f32.mrf.mxu0
        %v4191 = vadd.f32 %v3838, %v4190
        %v4192 = vpop.f32.mrf.mxu0
        %v4193 = vpop.f32.mrf.mxu0
        %v4194 = vadd.f32 %v3838, %v4193
        %v4195 = vpop.f32.mrf.mxu0
        %4196 = vmatprep.mubr.bf16.mxu0 0
        %4197 = vmatmul.mubr.bf16.gmra.mxu0 %v3934
        %v4198 = vpop.f32.mrf.mxu0
        %v4199 = vadd.f32 %v3838, %v4198
        %v4200 = vpop.f32.mrf.mxu0
        %v4201 = vpop.f32.mrf.mxu0
        %v4202 = vadd.f32 %v3838, %v4201
        %v4203 = vpop.f32.mrf.mxu0
        %4204 = vmatprep.mubr.bf16.mxu0 0
        %4205 = vmatmul.mubr.bf16.gmra.mxu0 %v3937
        %v4206 = vpop.f32.mrf.mxu0
        %v4207 = vadd.f32 %v3838, %v4206
        %v4208 = vpop.f32.mrf.mxu0
        %v4209 = vpop.f32.mrf.mxu0
        %v4210 = vadd.f32 %v3838, %v4209
        %v4211 = vpop.f32.mrf.mxu0
        %4212 = vmatprep.mubr.bf16.mxu0 0
        %4213 = vmatmul.mubr.bf16.gmra.mxu0 %v3940
        %v4214 = vpop.f32.mrf.mxu0
        %v4215 = vadd.f32 %v3838, %v4214
        %v4216 = vpop.f32.mrf.mxu0
        %v4217 = vpop.f32.mrf.mxu0
        %v4218 = vadd.f32 %v3838, %v4217
        %v4219 = vpop.f32.mrf.mxu0
        %4220 = vmatprep.mubr.bf16.mxu0 0
        %4221 = vmatmul.mubr.bf16.gmra.mxu0 %v3943
        %v4222 = vpop.f32.mrf.mxu0
        %v4223 = vadd.f32 %v3838, %v4222
        %v4224 = vpop.f32.mrf.mxu0
        %v4225 = vpop.f32.mrf.mxu0
        %v4226 = vadd.f32 %v3838, %v4225
        %v4227 = vpop.f32.mrf.mxu0
        %4228 = vmatprep.mubr.bf16.mxu0 0
        %4229 = vmatmul.mubr.bf16.gmra.mxu0 %v3946
        %v4230 = vpop.f32.mrf.mxu0
        %v4231 = vadd.f32 %v3838, %v4230
        %v4232 = vpop.f32.mrf.mxu0
        %v4233 = vpop.f32.mrf.mxu0
        %v4234 = vadd.f32 %v3838, %v4233
        %v4235 = vpop.f32.mrf.mxu0
        %4236 = vdwg.mxu0
        %v4237 = vadd.f32 %v460, %v3983
        %v4238 = vadd.f32 %v461, %v3986
        %v4239 = vadd.f32 %v462, %v3991
        %v4240 = vadd.f32 %v463, %v3994
        %v4241 = vadd.f32 %v464, %v3999
        %v4242 = vadd.f32 %v465, %v4002
        %v4243 = vadd.f32 %v466, %v4007
        %v4244 = vadd.f32 %v467, %v4010
        %v4245 = vadd.f32 %v468, %v4015
        %v4246 = vadd.f32 %v469, %v4018
        %v4247 = vadd.f32 %v470, %v4023
        %v4248 = vadd.f32 %v471, %v4026
        %v4249 = vadd.f32 %v472, %v4031
        %v4250 = vadd.f32 %v473, %v4034
        %v4251 = vadd.f32 %v474, %v4039
        %v4252 = vadd.f32 %v475, %v4042
        %v4253 = vadd.f32 %v476, %v4047
        %v4254 = vadd.f32 %v477, %v4050
        %v4255 = vadd.f32 %v478, %v4055
        %v4256 = vadd.f32 %v479, %v4058
        %v4257 = vadd.f32 %v480, %v4063
        %v4258 = vadd.f32 %v481, %v4066
        %v4259 = vadd.f32 %v482, %v4071
        %v4260 = vadd.f32 %v483, %v4074
        %v4261 = vadd.f32 %v484, %v4079
        %v4262 = vadd.f32 %v485, %v4082
        %v4263 = vadd.f32 %v486, %v4087
        %v4264 = vadd.f32 %v487, %v4090
        %v4265 = vadd.f32 %v488, %v4095
        %v4266 = vadd.f32 %v489, %v4098
        %v4267 = vadd.f32 %v490, %v4103
        %v4268 = vadd.f32 %v491, %v4106
        %v4269 = vadd.f32 %v492, %v4111
        %v4270 = vadd.f32 %v493, %v4114
        %v4271 = vadd.f32 %v494, %v4119
        %v4272 = vadd.f32 %v495, %v4122
        %v4273 = vadd.f32 %v496, %v4127
        %v4274 = vadd.f32 %v497, %v4130
        %v4275 = vadd.f32 %v498, %v4135
        %v4276 = vadd.f32 %v499, %v4138
        %v4277 = vadd.f32 %v500, %v4143
        %v4278 = vadd.f32 %v501, %v4146
        %v4279 = vadd.f32 %v502, %v4151
        %v4280 = vadd.f32 %v503, %v4154
        %v4281 = vadd.f32 %v504, %v4159
        %v4282 = vadd.f32 %v505, %v4162
        %v4283 = vadd.f32 %v506, %v4167
        %v4284 = vadd.f32 %v507, %v4170
        %v4285 = vadd.f32 %v508, %v4175
        %v4286 = vadd.f32 %v509, %v4178
        %v4287 = vadd.f32 %v510, %v4183
        %v4288 = vadd.f32 %v511, %v4186
        %v4289 = vadd.f32 %v512, %v4191
        %v4290 = vadd.f32 %v513, %v4194
        %v4291 = vadd.f32 %v514, %v4199
        %v4292 = vadd.f32 %v515, %v4202
        %v4293 = vadd.f32 %v516, %v4207
        %v4294 = vadd.f32 %v517, %v4210
        %v4295 = vadd.f32 %v518, %v4215
        %v4296 = vadd.f32 %v519, %v4218
        %v4297 = vadd.f32 %v520, %v4223
        %v4298 = vadd.f32 %v521, %v4226
        %v4299 = vadd.f32 %v522, %v4231
        %v4300 = vadd.f32 %v523, %v4234
        %v4301 = vld [vmem:[%s6] sm:$0x1]
        %v4302 = vld [vmem:[%s7] sm:$0x1]
        %v4303 = vsel %vm526, %v4237, 0.0
        %4304 = vadd.xlane.f32.xlu0 %v4303
        %v4305 = vpop.xlane.xlu0 %4304
        %v4306 = vsel %vm526, %v4238, 0.0
        %4307 = vadd.xlane.f32.xlu0 %v4306
        %v4308 = vpop.xlane.xlu0 %4307
        %v4309 = vsel %vm526, %v4239, 0.0
        %4310 = vadd.xlane.f32.xlu0 %v4309
        %v4311 = vpop.xlane.xlu0 %4310
        %v4312 = vsel %vm526, %v4240, 0.0
        %4313 = vadd.xlane.f32.xlu0 %v4312
        %v4314 = vpop.xlane.xlu0 %4313
        %v4315 = vsel %vm526, %v4241, 0.0
        %4316 = vadd.xlane.f32.xlu0 %v4315
        %v4317 = vpop.xlane.xlu0 %4316
        %v4318 = vsel %vm526, %v4242, 0.0
        %4319 = vadd.xlane.f32.xlu0 %v4318
        %v4320 = vpop.xlane.xlu0 %4319
        %v4321 = vsel %vm526, %v4243, 0.0
        %4322 = vadd.xlane.f32.xlu0 %v4321
        %v4323 = vpop.xlane.xlu0 %4322
        %v4324 = vsel %vm526, %v4244, 0.0
        %4325 = vadd.xlane.f32.xlu0 %v4324
        %v4326 = vpop.xlane.xlu0 %4325
        %v4327 = vsel %vm526, %v4245, 0.0
        %4328 = vadd.xlane.f32.xlu0 %v4327
        %v4329 = vpop.xlane.xlu0 %4328
        %v4330 = vsel %vm526, %v4246, 0.0
        %4331 = vadd.xlane.f32.xlu0 %v4330
        %v4332 = vpop.xlane.xlu0 %4331
        %v4333 = vsel %vm526, %v4247, 0.0
        %4334 = vadd.xlane.f32.xlu0 %v4333
        %v4335 = vpop.xlane.xlu0 %4334
        %v4336 = vsel %vm526, %v4248, 0.0
        %4337 = vadd.xlane.f32.xlu0 %v4336
        %v4338 = vpop.xlane.xlu0 %4337
        %v4339 = vsel %vm526, %v4249, 0.0
        %4340 = vadd.xlane.f32.xlu0 %v4339
        %v4341 = vpop.xlane.xlu0 %4340
        %v4342 = vsel %vm526, %v4250, 0.0
        %4343 = vadd.xlane.f32.xlu0 %v4342
        %v4344 = vpop.xlane.xlu0 %4343
        %v4345 = vsel %vm526, %v4251, 0.0
        %4346 = vadd.xlane.f32.xlu0 %v4345
        %v4347 = vpop.xlane.xlu0 %4346
        %v4348 = vsel %vm526, %v4252, 0.0
        %4349 = vadd.xlane.f32.xlu0 %v4348
        %v4350 = vpop.xlane.xlu0 %4349
        %v4351 = vsel %vm526, %v4253, 0.0
        %4352 = vadd.xlane.f32.xlu0 %v4351
        %v4353 = vpop.xlane.xlu0 %4352
        %v4354 = vsel %vm526, %v4254, 0.0
        %4355 = vadd.xlane.f32.xlu0 %v4354
        %v4356 = vpop.xlane.xlu0 %4355
        %v4357 = vsel %vm526, %v4255, 0.0
        %4358 = vadd.xlane.f32.xlu0 %v4357
        %v4359 = vpop.xlane.xlu0 %4358
        %v4360 = vsel %vm526, %v4256, 0.0
        %4361 = vadd.xlane.f32.xlu0 %v4360
        %v4362 = vpop.xlane.xlu0 %4361
        %v4363 = vsel %vm526, %v4257, 0.0
        %4364 = vadd.xlane.f32.xlu0 %v4363
        %v4365 = vpop.xlane.xlu0 %4364
        %v4366 = vsel %vm526, %v4258, 0.0
        %4367 = vadd.xlane.f32.xlu0 %v4366
        %v4368 = vpop.xlane.xlu0 %4367
        %v4369 = vsel %vm526, %v4259, 0.0
        %4370 = vadd.xlane.f32.xlu0 %v4369
        %v4371 = vpop.xlane.xlu0 %4370
        %v4372 = vsel %vm526, %v4260, 0.0
        %4373 = vadd.xlane.f32.xlu0 %v4372
        %v4374 = vpop.xlane.xlu0 %4373
        %v4375 = vsel %vm526, %v4261, 0.0
        %4376 = vadd.xlane.f32.xlu0 %v4375
        %v4377 = vpop.xlane.xlu0 %4376
        %v4378 = vsel %vm526, %v4262, 0.0
        %4379 = vadd.xlane.f32.xlu0 %v4378
        %v4380 = vpop.xlane.xlu0 %4379
        %v4381 = vsel %vm526, %v4263, 0.0
        %4382 = vadd.xlane.f32.xlu0 %v4381
        %v4383 = vpop.xlane.xlu0 %4382
        %v4384 = vsel %vm526, %v4264, 0.0
        %4385 = vadd.xlane.f32.xlu0 %v4384
        %v4386 = vpop.xlane.xlu0 %4385
        %v4387 = vsel %vm526, %v4265, 0.0
        %4388 = vadd.xlane.f32.xlu0 %v4387
        %v4389 = vpop.xlane.xlu0 %4388
        %v4390 = vsel %vm526, %v4266, 0.0
        %4391 = vadd.xlane.f32.xlu0 %v4390
        %v4392 = vpop.xlane.xlu0 %4391
        %v4393 = vsel %vm526, %v4267, 0.0
        %4394 = vadd.xlane.f32.xlu0 %v4393
        %v4395 = vpop.xlane.xlu0 %4394
        %v4396 = vsel %vm526, %v4268, 0.0
        %4397 = vadd.xlane.f32.xlu0 %v4396
        %v4398 = vpop.xlane.xlu0 %4397
        %v4399 = vsel %vm526, %v4269, 0.0
        %4400 = vadd.xlane.f32.xlu0 %v4399
        %v4401 = vpop.xlane.xlu0 %4400
        %v4402 = vsel %vm526, %v4270, 0.0
        %4403 = vadd.xlane.f32.xlu0 %v4402
        %v4404 = vpop.xlane.xlu0 %4403
        %v4405 = vsel %vm526, %v4271, 0.0
        %4406 = vadd.xlane.f32.xlu0 %v4405
        %v4407 = vpop.xlane.xlu0 %4406
        %v4408 = vsel %vm526, %v4272, 0.0
        %4409 = vadd.xlane.f32.xlu0 %v4408
        %v4410 = vpop.xlane.xlu0 %4409
        %v4411 = vsel %vm526, %v4273, 0.0
        %4412 = vadd.xlane.f32.xlu0 %v4411
        %v4413 = vpop.xlane.xlu0 %4412
        %v4414 = vsel %vm526, %v4274, 0.0
        %4415 = vadd.xlane.f32.xlu0 %v4414
        %v4416 = vpop.xlane.xlu0 %4415
        %v4417 = vsel %vm526, %v4275, 0.0
        %4418 = vadd.xlane.f32.xlu0 %v4417
        %v4419 = vpop.xlane.xlu0 %4418
        %v4420 = vsel %vm526, %v4276, 0.0
        %4421 = vadd.xlane.f32.xlu0 %v4420
        %v4422 = vpop.xlane.xlu0 %4421
        %v4423 = vsel %vm526, %v4277, 0.0
        %4424 = vadd.xlane.f32.xlu0 %v4423
        %v4425 = vpop.xlane.xlu0 %4424
        %v4426 = vsel %vm526, %v4278, 0.0
        %4427 = vadd.xlane.f32.xlu0 %v4426
        %v4428 = vpop.xlane.xlu0 %4427
        %v4429 = vsel %vm526, %v4279, 0.0
        %4430 = vadd.xlane.f32.xlu0 %v4429
        %v4431 = vpop.xlane.xlu0 %4430
        %v4432 = vsel %vm526, %v4280, 0.0
        %4433 = vadd.xlane.f32.xlu0 %v4432
        %v4434 = vpop.xlane.xlu0 %4433
        %v4435 = vsel %vm526, %v4281, 0.0
        %4436 = vadd.xlane.f32.xlu0 %v4435
        %v4437 = vpop.xlane.xlu0 %4436
        %v4438 = vsel %vm526, %v4282, 0.0
        %4439 = vadd.xlane.f32.xlu0 %v4438
        %v4440 = vpop.xlane.xlu0 %4439
        %v4441 = vsel %vm526, %v4283, 0.0
        %4442 = vadd.xlane.f32.xlu0 %v4441
        %v4443 = vpop.xlane.xlu0 %4442
        %v4444 = vsel %vm526, %v4284, 0.0
        %4445 = vadd.xlane.f32.xlu0 %v4444
        %v4446 = vpop.xlane.xlu0 %4445
        %v4447 = vsel %vm526, %v4285, 0.0
        %4448 = vadd.xlane.f32.xlu0 %v4447
        %v4449 = vpop.xlane.xlu0 %4448
        %v4450 = vsel %vm526, %v4286, 0.0
        %4451 = vadd.xlane.f32.xlu0 %v4450
        %v4452 = vpop.xlane.xlu0 %4451
        %v4453 = vsel %vm526, %v4287, 0.0
        %4454 = vadd.xlane.f32.xlu0 %v4453
        %v4455 = vpop.xlane.xlu0 %4454
        %v4456 = vsel %vm526, %v4288, 0.0
        %4457 = vadd.xlane.f32.xlu0 %v4456
        %v4458 = vpop.xlane.xlu0 %4457
        %v4459 = vsel %vm526, %v4289, 0.0
        %4460 = vadd.xlane.f32.xlu0 %v4459
        %v4461 = vpop.xlane.xlu0 %4460
        %v4462 = vsel %vm526, %v4290, 0.0
        %4463 = vadd.xlane.f32.xlu0 %v4462
        %v4464 = vpop.xlane.xlu0 %4463
        %v4465 = vsel %vm526, %v4291, 0.0
        %4466 = vadd.xlane.f32.xlu0 %v4465
        %v4467 = vpop.xlane.xlu0 %4466
        %v4468 = vsel %vm526, %v4292, 0.0
        %4469 = vadd.xlane.f32.xlu0 %v4468
        %v4470 = vpop.xlane.xlu0 %4469
        %v4471 = vsel %vm526, %v4293, 0.0
        %4472 = vadd.xlane.f32.xlu0 %v4471
        %v4473 = vpop.xlane.xlu0 %4472
        %v4474 = vsel %vm526, %v4294, 0.0
        %4475 = vadd.xlane.f32.xlu0 %v4474
        %v4476 = vpop.xlane.xlu0 %4475
        %v4477 = vsel %vm526, %v4295, 0.0
        %4478 = vadd.xlane.f32.xlu0 %v4477
        %v4479 = vpop.xlane.xlu0 %4478
        %v4480 = vsel %vm526, %v4296, 0.0
        %4481 = vadd.xlane.f32.xlu0 %v4480
        %v4482 = vpop.xlane.xlu0 %4481
        %v4483 = vsel %vm526, %v4297, 0.0
        %4484 = vadd.xlane.f32.xlu0 %v4483
        %v4485 = vpop.xlane.xlu0 %4484
        %v4486 = vsel %vm526, %v4298, 0.0
        %4487 = vadd.xlane.f32.xlu0 %v4486
        %v4488 = vpop.xlane.xlu0 %4487
        %v4489 = vsel %vm526, %v4299, 0.0
        %4490 = vadd.xlane.f32.xlu0 %v4489
        %v4491 = vpop.xlane.xlu0 %4490
        %v4492 = vsel %vm526, %v4300, 0.0
        %4493 = vadd.xlane.f32.xlu0 %v4492
        %v4494 = vpop.xlane.xlu0 %4493
        %v4495 = vmul.f32 %v4305, %v719
        %v4496 = vmul.f32 %v4308, %v719
        %v4497 = vmul.f32 %v4311, %v719
        %v4498 = vmul.f32 %v4314, %v719
        %v4499 = vmul.f32 %v4317, %v719
        %v4500 = vmul.f32 %v4320, %v719
        %v4501 = vmul.f32 %v4323, %v719
        %v4502 = vmul.f32 %v4326, %v719
        %v4503 = vmul.f32 %v4329, %v719
        %v4504 = vmul.f32 %v4332, %v719
        %v4505 = vmul.f32 %v4335, %v719
        %v4506 = vmul.f32 %v4338, %v719
        %v4507 = vmul.f32 %v4341, %v719
        %v4508 = vmul.f32 %v4344, %v719
        %v4509 = vmul.f32 %v4347, %v719
        %v4510 = vmul.f32 %v4350, %v719
        %v4511 = vmul.f32 %v4353, %v719
        %v4512 = vmul.f32 %v4356, %v719
        %v4513 = vmul.f32 %v4359, %v719
        %v4514 = vmul.f32 %v4362, %v719
        %v4515 = vmul.f32 %v4365, %v719
        %v4516 = vmul.f32 %v4368, %v719
        %v4517 = vmul.f32 %v4371, %v719
        %v4518 = vmul.f32 %v4374, %v719
        %v4519 = vmul.f32 %v4377, %v719
        %v4520 = vmul.f32 %v4380, %v719
        %v4521 = vmul.f32 %v4383, %v719
        %v4522 = vmul.f32 %v4386, %v719
        %v4523 = vmul.f32 %v4389, %v719
        %v4524 = vmul.f32 %v4392, %v719
        %v4525 = vmul.f32 %v4395, %v719
        %v4526 = vmul.f32 %v4398, %v719
        %v4527 = vmul.f32 %v4401, %v719
        %v4528 = vmul.f32 %v4404, %v719
        %v4529 = vmul.f32 %v4407, %v719
        %v4530 = vmul.f32 %v4410, %v719
        %v4531 = vmul.f32 %v4413, %v719
        %v4532 = vmul.f32 %v4416, %v719
        %v4533 = vmul.f32 %v4419, %v719
        %v4534 = vmul.f32 %v4422, %v719
        %v4535 = vmul.f32 %v4425, %v719
        %v4536 = vmul.f32 %v4428, %v719
        %v4537 = vmul.f32 %v4431, %v719
        %v4538 = vmul.f32 %v4434, %v719
        %v4539 = vmul.f32 %v4437, %v719
        %v4540 = vmul.f32 %v4440, %v719
        %v4541 = vmul.f32 %v4443, %v719
        %v4542 = vmul.f32 %v4446, %v719
        %v4543 = vmul.f32 %v4449, %v719
        %v4544 = vmul.f32 %v4452, %v719
        %v4545 = vmul.f32 %v4455, %v719
        %v4546 = vmul.f32 %v4458, %v719
        %v4547 = vmul.f32 %v4461, %v719
        %v4548 = vmul.f32 %v4464, %v719
        %v4549 = vmul.f32 %v4467, %v719
        %v4550 = vmul.f32 %v4470, %v719
        %v4551 = vmul.f32 %v4473, %v719
        %v4552 = vmul.f32 %v4476, %v719
        %v4553 = vmul.f32 %v4479, %v719
        %v4554 = vmul.f32 %v4482, %v719
        %v4555 = vmul.f32 %v4485, %v719
        %v4556 = vmul.f32 %v4488, %v719
        %v4557 = vmul.f32 %v4491, %v719
        %v4558 = vmul.f32 %v4494, %v719
        %v4559 = vsub.f32 %v4237, %v4495
        %v4560 = vsub.f32 %v4238, %v4496
        %v4561 = vsub.f32 %v4239, %v4497
        %v4562 = vsub.f32 %v4240, %v4498
        %v4563 = vsub.f32 %v4241, %v4499
        %v4564 = vsub.f32 %v4242, %v4500
        %v4565 = vsub.f32 %v4243, %v4501
        %v4566 = vsub.f32 %v4244, %v4502
        %v4567 = vsub.f32 %v4245, %v4503
        %v4568 = vsub.f32 %v4246, %v4504
        %v4569 = vsub.f32 %v4247, %v4505
        %v4570 = vsub.f32 %v4248, %v4506
        %v4571 = vsub.f32 %v4249, %v4507
        %v4572 = vsub.f32 %v4250, %v4508
        %v4573 = vsub.f32 %v4251, %v4509
        %v4574 = vsub.f32 %v4252, %v4510
        %v4575 = vsub.f32 %v4253, %v4511
        %v4576 = vsub.f32 %v4254, %v4512
        %v4577 = vsub.f32 %v4255, %v4513
        %v4578 = vsub.f32 %v4256, %v4514
        %v4579 = vsub.f32 %v4257, %v4515
        %v4580 = vsub.f32 %v4258, %v4516
        %v4581 = vsub.f32 %v4259, %v4517
        %v4582 = vsub.f32 %v4260, %v4518
        %v4583 = vsub.f32 %v4261, %v4519
        %v4584 = vsub.f32 %v4262, %v4520
        %v4585 = vsub.f32 %v4263, %v4521
        %v4586 = vsub.f32 %v4264, %v4522
        %v4587 = vsub.f32 %v4265, %v4523
        %v4588 = vsub.f32 %v4266, %v4524
        %v4589 = vsub.f32 %v4267, %v4525
        %v4590 = vsub.f32 %v4268, %v4526
        %v4591 = vsub.f32 %v4269, %v4527
        %v4592 = vsub.f32 %v4270, %v4528
        %v4593 = vsub.f32 %v4271, %v4529
        %v4594 = vsub.f32 %v4272, %v4530
        %v4595 = vsub.f32 %v4273, %v4531
        %v4596 = vsub.f32 %v4274, %v4532
        %v4597 = vsub.f32 %v4275, %v4533
        %v4598 = vsub.f32 %v4276, %v4534
        %v4599 = vsub.f32 %v4277, %v4535
        %v4600 = vsub.f32 %v4278, %v4536
        %v4601 = vsub.f32 %v4279, %v4537
        %v4602 = vsub.f32 %v4280, %v4538
        %v4603 = vsub.f32 %v4281, %v4539
        %v4604 = vsub.f32 %v4282, %v4540
        %v4605 = vsub.f32 %v4283, %v4541
        %v4606 = vsub.f32 %v4284, %v4542
        %v4607 = vsub.f32 %v4285, %v4543
        %v4608 = vsub.f32 %v4286, %v4544
        %v4609 = vsub.f32 %v4287, %v4545
        %v4610 = vsub.f32 %v4288, %v4546
        %v4611 = vsub.f32 %v4289, %v4547
        %v4612 = vsub.f32 %v4290, %v4548
        %v4613 = vsub.f32 %v4291, %v4549
        %v4614 = vsub.f32 %v4292, %v4550
        %v4615 = vsub.f32 %v4293, %v4551
        %v4616 = vsub.f32 %v4294, %v4552
        %v4617 = vsub.f32 %v4295, %v4553
        %v4618 = vsub.f32 %v4296, %v4554
        %v4619 = vsub.f32 %v4297, %v4555
        %v4620 = vsub.f32 %v4298, %v4556
        %v4621 = vsub.f32 %v4299, %v4557
        %v4622 = vsub.f32 %v4300, %v4558
        %v4623 = vmul.f32 %v4559, %v4559
        %v4624 = vmul.f32 %v4560, %v4560
        %v4625 = vmul.f32 %v4561, %v4561
        %v4626 = vmul.f32 %v4562, %v4562
        %v4627 = vmul.f32 %v4563, %v4563
        %v4628 = vmul.f32 %v4564, %v4564
        %v4629 = vmul.f32 %v4565, %v4565
        %v4630 = vmul.f32 %v4566, %v4566
        %v4631 = vmul.f32 %v4567, %v4567
        %v4632 = vmul.f32 %v4568, %v4568
        %v4633 = vmul.f32 %v4569, %v4569
        %v4634 = vmul.f32 %v4570, %v4570
        %v4635 = vmul.f32 %v4571, %v4571
        %v4636 = vmul.f32 %v4572, %v4572
        %v4637 = vmul.f32 %v4573, %v4573
        %v4638 = vmul.f32 %v4574, %v4574
        %v4639 = vmul.f32 %v4575, %v4575
        %v4640 = vmul.f32 %v4576, %v4576
        %v4641 = vmul.f32 %v4577, %v4577
        %v4642 = vmul.f32 %v4578, %v4578
        %v4643 = vmul.f32 %v4579, %v4579
        %v4644 = vmul.f32 %v4580, %v4580
        %v4645 = vmul.f32 %v4581, %v4581
        %v4646 = vmul.f32 %v4582, %v4582
        %v4647 = vmul.f32 %v4583, %v4583
        %v4648 = vmul.f32 %v4584, %v4584
        %v4649 = vmul.f32 %v4585, %v4585
        %v4650 = vmul.f32 %v4586, %v4586
        %v4651 = vmul.f32 %v4587, %v4587
        %v4652 = vmul.f32 %v4588, %v4588
        %v4653 = vmul.f32 %v4589, %v4589
        %v4654 = vmul.f32 %v4590, %v4590
        %v4655 = vmul.f32 %v4591, %v4591
        %v4656 = vmul.f32 %v4592, %v4592
        %v4657 = vmul.f32 %v4593, %v4593
        %v4658 = vmul.f32 %v4594, %v4594
        %v4659 = vmul.f32 %v4595, %v4595
        %v4660 = vmul.f32 %v4596, %v4596
        %v4661 = vmul.f32 %v4597, %v4597
        %v4662 = vmul.f32 %v4598, %v4598
        %v4663 = vmul.f32 %v4599, %v4599
        %v4664 = vmul.f32 %v4600, %v4600
        %v4665 = vmul.f32 %v4601, %v4601
        %v4666 = vmul.f32 %v4602, %v4602
        %v4667 = vmul.f32 %v4603, %v4603
        %v4668 = vmul.f32 %v4604, %v4604
        %v4669 = vmul.f32 %v4605, %v4605
        %v4670 = vmul.f32 %v4606, %v4606
        %v4671 = vmul.f32 %v4607, %v4607
        %v4672 = vmul.f32 %v4608, %v4608
        %v4673 = vmul.f32 %v4609, %v4609
        %v4674 = vmul.f32 %v4610, %v4610
        %v4675 = vmul.f32 %v4611, %v4611
        %v4676 = vmul.f32 %v4612, %v4612
        %v4677 = vmul.f32 %v4613, %v4613
        %v4678 = vmul.f32 %v4614, %v4614
        %v4679 = vmul.f32 %v4615, %v4615
        %v4680 = vmul.f32 %v4616, %v4616
        %v4681 = vmul.f32 %v4617, %v4617
        %v4682 = vmul.f32 %v4618, %v4618
        %v4683 = vmul.f32 %v4619, %v4619
        %v4684 = vmul.f32 %v4620, %v4620
        %v4685 = vmul.f32 %v4621, %v4621
        %v4686 = vmul.f32 %v4622, %v4622
        %v4687 = vsel %vm526, %v4623, 0.0
        %4688 = vadd.xlane.f32.xlu0 %v4687
        %v4689 = vpop.xlane.xlu0 %4688
        %v4690 = vsel %vm526, %v4624, 0.0
        %4691 = vadd.xlane.f32.xlu0 %v4690
        %v4692 = vpop.xlane.xlu0 %4691
        %v4693 = vsel %vm526, %v4625, 0.0
        %4694 = vadd.xlane.f32.xlu0 %v4693
        %v4695 = vpop.xlane.xlu0 %4694
        %v4696 = vsel %vm526, %v4626, 0.0
        %4697 = vadd.xlane.f32.xlu0 %v4696
        %v4698 = vpop.xlane.xlu0 %4697
        %v4699 = vsel %vm526, %v4627, 0.0
        %4700 = vadd.xlane.f32.xlu0 %v4699
        %v4701 = vpop.xlane.xlu0 %4700
        %v4702 = vsel %vm526, %v4628, 0.0
        %4703 = vadd.xlane.f32.xlu0 %v4702
        %v4704 = vpop.xlane.xlu0 %4703
        %v4705 = vsel %vm526, %v4629, 0.0
        %4706 = vadd.xlane.f32.xlu0 %v4705
        %v4707 = vpop.xlane.xlu0 %4706
        %v4708 = vsel %vm526, %v4630, 0.0
        %4709 = vadd.xlane.f32.xlu0 %v4708
        %v4710 = vpop.xlane.xlu0 %4709
        %v4711 = vsel %vm526, %v4631, 0.0
        %4712 = vadd.xlane.f32.xlu0 %v4711
        %v4713 = vpop.xlane.xlu0 %4712
        %v4714 = vsel %vm526, %v4632, 0.0
        %4715 = vadd.xlane.f32.xlu0 %v4714
        %v4716 = vpop.xlane.xlu0 %4715
        %v4717 = vsel %vm526, %v4633, 0.0
        %4718 = vadd.xlane.f32.xlu0 %v4717
        %v4719 = vpop.xlane.xlu0 %4718
        %v4720 = vsel %vm526, %v4634, 0.0
        %4721 = vadd.xlane.f32.xlu0 %v4720
        %v4722 = vpop.xlane.xlu0 %4721
        %v4723 = vsel %vm526, %v4635, 0.0
        %4724 = vadd.xlane.f32.xlu0 %v4723
        %v4725 = vpop.xlane.xlu0 %4724
        %v4726 = vsel %vm526, %v4636, 0.0
        %4727 = vadd.xlane.f32.xlu0 %v4726
        %v4728 = vpop.xlane.xlu0 %4727
        %v4729 = vsel %vm526, %v4637, 0.0
        %4730 = vadd.xlane.f32.xlu0 %v4729
        %v4731 = vpop.xlane.xlu0 %4730
        %v4732 = vsel %vm526, %v4638, 0.0
        %4733 = vadd.xlane.f32.xlu0 %v4732
        %v4734 = vpop.xlane.xlu0 %4733
        %v4735 = vsel %vm526, %v4639, 0.0
        %4736 = vadd.xlane.f32.xlu0 %v4735
        %v4737 = vpop.xlane.xlu0 %4736
        %v4738 = vsel %vm526, %v4640, 0.0
        %4739 = vadd.xlane.f32.xlu0 %v4738
        %v4740 = vpop.xlane.xlu0 %4739
        %v4741 = vsel %vm526, %v4641, 0.0
        %4742 = vadd.xlane.f32.xlu0 %v4741
        %v4743 = vpop.xlane.xlu0 %4742
        %v4744 = vsel %vm526, %v4642, 0.0
        %4745 = vadd.xlane.f32.xlu0 %v4744
        %v4746 = vpop.xlane.xlu0 %4745
        %v4747 = vsel %vm526, %v4643, 0.0
        %4748 = vadd.xlane.f32.xlu0 %v4747
        %v4749 = vpop.xlane.xlu0 %4748
        %v4750 = vsel %vm526, %v4644, 0.0
        %4751 = vadd.xlane.f32.xlu0 %v4750
        %v4752 = vpop.xlane.xlu0 %4751
        %v4753 = vsel %vm526, %v4645, 0.0
        %4754 = vadd.xlane.f32.xlu0 %v4753
        %v4755 = vpop.xlane.xlu0 %4754
        %v4756 = vsel %vm526, %v4646, 0.0
        %4757 = vadd.xlane.f32.xlu0 %v4756
        %v4758 = vpop.xlane.xlu0 %4757
        %v4759 = vsel %vm526, %v4647, 0.0
        %4760 = vadd.xlane.f32.xlu0 %v4759
        %v4761 = vpop.xlane.xlu0 %4760
        %v4762 = vsel %vm526, %v4648, 0.0
        %4763 = vadd.xlane.f32.xlu0 %v4762
        %v4764 = vpop.xlane.xlu0 %4763
        %v4765 = vsel %vm526, %v4649, 0.0
        %4766 = vadd.xlane.f32.xlu0 %v4765
        %v4767 = vpop.xlane.xlu0 %4766
        %v4768 = vsel %vm526, %v4650, 0.0
        %4769 = vadd.xlane.f32.xlu0 %v4768
        %v4770 = vpop.xlane.xlu0 %4769
        %v4771 = vsel %vm526, %v4651, 0.0
        %4772 = vadd.xlane.f32.xlu0 %v4771
        %v4773 = vpop.xlane.xlu0 %4772
        %v4774 = vsel %vm526, %v4652, 0.0
        %4775 = vadd.xlane.f32.xlu0 %v4774
        %v4776 = vpop.xlane.xlu0 %4775
        %v4777 = vsel %vm526, %v4653, 0.0
        %4778 = vadd.xlane.f32.xlu0 %v4777
        %v4779 = vpop.xlane.xlu0 %4778
        %v4780 = vsel %vm526, %v4654, 0.0
        %4781 = vadd.xlane.f32.xlu0 %v4780
        %v4782 = vpop.xlane.xlu0 %4781
        %v4783 = vsel %vm526, %v4655, 0.0
        %4784 = vadd.xlane.f32.xlu0 %v4783
        %v4785 = vpop.xlane.xlu0 %4784
        %v4786 = vsel %vm526, %v4656, 0.0
        %4787 = vadd.xlane.f32.xlu0 %v4786
        %v4788 = vpop.xlane.xlu0 %4787
        %v4789 = vsel %vm526, %v4657, 0.0
        %4790 = vadd.xlane.f32.xlu0 %v4789
        %v4791 = vpop.xlane.xlu0 %4790
        %v4792 = vsel %vm526, %v4658, 0.0
        %4793 = vadd.xlane.f32.xlu0 %v4792
        %v4794 = vpop.xlane.xlu0 %4793
        %v4795 = vsel %vm526, %v4659, 0.0
        %4796 = vadd.xlane.f32.xlu0 %v4795
        %v4797 = vpop.xlane.xlu0 %4796
        %v4798 = vsel %vm526, %v4660, 0.0
        %4799 = vadd.xlane.f32.xlu0 %v4798
        %v4800 = vpop.xlane.xlu0 %4799
        %v4801 = vsel %vm526, %v4661, 0.0
        %4802 = vadd.xlane.f32.xlu0 %v4801
        %v4803 = vpop.xlane.xlu0 %4802
        %v4804 = vsel %vm526, %v4662, 0.0
        %4805 = vadd.xlane.f32.xlu0 %v4804
        %v4806 = vpop.xlane.xlu0 %4805
        %v4807 = vsel %vm526, %v4663, 0.0
        %4808 = vadd.xlane.f32.xlu0 %v4807
        %v4809 = vpop.xlane.xlu0 %4808
        %v4810 = vsel %vm526, %v4664, 0.0
        %4811 = vadd.xlane.f32.xlu0 %v4810
        %v4812 = vpop.xlane.xlu0 %4811
        %v4813 = vsel %vm526, %v4665, 0.0
        %4814 = vadd.xlane.f32.xlu0 %v4813
        %v4815 = vpop.xlane.xlu0 %4814
        %v4816 = vsel %vm526, %v4666, 0.0
        %4817 = vadd.xlane.f32.xlu0 %v4816
        %v4818 = vpop.xlane.xlu0 %4817
        %v4819 = vsel %vm526, %v4667, 0.0
        %4820 = vadd.xlane.f32.xlu0 %v4819
        %v4821 = vpop.xlane.xlu0 %4820
        %v4822 = vsel %vm526, %v4668, 0.0
        %4823 = vadd.xlane.f32.xlu0 %v4822
        %v4824 = vpop.xlane.xlu0 %4823
        %v4825 = vsel %vm526, %v4669, 0.0
        %4826 = vadd.xlane.f32.xlu0 %v4825
        %v4827 = vpop.xlane.xlu0 %4826
        %v4828 = vsel %vm526, %v4670, 0.0
        %4829 = vadd.xlane.f32.xlu0 %v4828
        %v4830 = vpop.xlane.xlu0 %4829
        %v4831 = vsel %vm526, %v4671, 0.0
        %4832 = vadd.xlane.f32.xlu0 %v4831
        %v4833 = vpop.xlane.xlu0 %4832
        %v4834 = vsel %vm526, %v4672, 0.0
        %4835 = vadd.xlane.f32.xlu0 %v4834
        %v4836 = vpop.xlane.xlu0 %4835
        %v4837 = vsel %vm526, %v4673, 0.0
        %4838 = vadd.xlane.f32.xlu0 %v4837
        %v4839 = vpop.xlane.xlu0 %4838
        %v4840 = vsel %vm526, %v4674, 0.0
        %4841 = vadd.xlane.f32.xlu0 %v4840
        %v4842 = vpop.xlane.xlu0 %4841
        %v4843 = vsel %vm526, %v4675, 0.0
        %4844 = vadd.xlane.f32.xlu0 %v4843
        %v4845 = vpop.xlane.xlu0 %4844
        %v4846 = vsel %vm526, %v4676, 0.0
        %4847 = vadd.xlane.f32.xlu0 %v4846
        %v4848 = vpop.xlane.xlu0 %4847
        %v4849 = vsel %vm526, %v4677, 0.0
        %4850 = vadd.xlane.f32.xlu0 %v4849
        %v4851 = vpop.xlane.xlu0 %4850
        %v4852 = vsel %vm526, %v4678, 0.0
        %4853 = vadd.xlane.f32.xlu0 %v4852
        %v4854 = vpop.xlane.xlu0 %4853
        %v4855 = vsel %vm526, %v4679, 0.0
        %4856 = vadd.xlane.f32.xlu0 %v4855
        %v4857 = vpop.xlane.xlu0 %4856
        %v4858 = vsel %vm526, %v4680, 0.0
        %4859 = vadd.xlane.f32.xlu0 %v4858
        %v4860 = vpop.xlane.xlu0 %4859
        %v4861 = vsel %vm526, %v4681, 0.0
        %4862 = vadd.xlane.f32.xlu0 %v4861
        %v4863 = vpop.xlane.xlu0 %4862
        %v4864 = vsel %vm526, %v4682, 0.0
        %4865 = vadd.xlane.f32.xlu0 %v4864
        %v4866 = vpop.xlane.xlu0 %4865
        %v4867 = vsel %vm526, %v4683, 0.0
        %4868 = vadd.xlane.f32.xlu0 %v4867
        %v4869 = vpop.xlane.xlu0 %4868
        %v4870 = vsel %vm526, %v4684, 0.0
        %4871 = vadd.xlane.f32.xlu0 %v4870
        %v4872 = vpop.xlane.xlu0 %4871
        %v4873 = vsel %vm526, %v4685, 0.0
        %4874 = vadd.xlane.f32.xlu0 %v4873
        %v4875 = vpop.xlane.xlu0 %4874
        %v4876 = vsel %vm526, %v4686, 0.0
        %4877 = vadd.xlane.f32.xlu0 %v4876
        %v4878 = vpop.xlane.xlu0 %4877
        %v4879 = vmul.f32 %v4689, %v719
        %v4880 = vmul.f32 %v4692, %v719
        %v4881 = vmul.f32 %v4695, %v719
        %v4882 = vmul.f32 %v4698, %v719
        %v4883 = vmul.f32 %v4701, %v719
        %v4884 = vmul.f32 %v4704, %v719
        %v4885 = vmul.f32 %v4707, %v719
        %v4886 = vmul.f32 %v4710, %v719
        %v4887 = vmul.f32 %v4713, %v719
        %v4888 = vmul.f32 %v4716, %v719
        %v4889 = vmul.f32 %v4719, %v719
        %v4890 = vmul.f32 %v4722, %v719
        %v4891 = vmul.f32 %v4725, %v719
        %v4892 = vmul.f32 %v4728, %v719
        %v4893 = vmul.f32 %v4731, %v719
        %v4894 = vmul.f32 %v4734, %v719
        %v4895 = vmul.f32 %v4737, %v719
        %v4896 = vmul.f32 %v4740, %v719
        %v4897 = vmul.f32 %v4743, %v719
        %v4898 = vmul.f32 %v4746, %v719
        %v4899 = vmul.f32 %v4749, %v719
        %v4900 = vmul.f32 %v4752, %v719
        %v4901 = vmul.f32 %v4755, %v719
        %v4902 = vmul.f32 %v4758, %v719
        %v4903 = vmul.f32 %v4761, %v719
        %v4904 = vmul.f32 %v4764, %v719
        %v4905 = vmul.f32 %v4767, %v719
        %v4906 = vmul.f32 %v4770, %v719
        %v4907 = vmul.f32 %v4773, %v719
        %v4908 = vmul.f32 %v4776, %v719
        %v4909 = vmul.f32 %v4779, %v719
        %v4910 = vmul.f32 %v4782, %v719
        %v4911 = vmul.f32 %v4785, %v719
        %v4912 = vmul.f32 %v4788, %v719
        %v4913 = vmul.f32 %v4791, %v719
        %v4914 = vmul.f32 %v4794, %v719
        %v4915 = vmul.f32 %v4797, %v719
        %v4916 = vmul.f32 %v4800, %v719
        %v4917 = vmul.f32 %v4803, %v719
        %v4918 = vmul.f32 %v4806, %v719
        %v4919 = vmul.f32 %v4809, %v719
        %v4920 = vmul.f32 %v4812, %v719
        %v4921 = vmul.f32 %v4815, %v719
        %v4922 = vmul.f32 %v4818, %v719
        %v4923 = vmul.f32 %v4821, %v719
        %v4924 = vmul.f32 %v4824, %v719
        %v4925 = vmul.f32 %v4827, %v719
        %v4926 = vmul.f32 %v4830, %v719
        %v4927 = vmul.f32 %v4833, %v719
        %v4928 = vmul.f32 %v4836, %v719
        %v4929 = vmul.f32 %v4839, %v719
        %v4930 = vmul.f32 %v4842, %v719
        %v4931 = vmul.f32 %v4845, %v719
        %v4932 = vmul.f32 %v4848, %v719
        %v4933 = vmul.f32 %v4851, %v719
        %v4934 = vmul.f32 %v4854, %v719
        %v4935 = vmul.f32 %v4857, %v719
        %v4936 = vmul.f32 %v4860, %v719
        %v4937 = vmul.f32 %v4863, %v719
        %v4938 = vmul.f32 %v4866, %v719
        %v4939 = vmul.f32 %v4869, %v719
        %v4940 = vmul.f32 %v4872, %v719
        %v4941 = vmul.f32 %v4875, %v719
        %v4942 = vmul.f32 %v4878, %v719
        %v4943 = vadd.f32 %v4879, 1e-05
        %v4944 = vadd.f32 %v4880, 1e-05
        %v4945 = vadd.f32 %v4881, 1e-05
        %v4946 = vadd.f32 %v4882, 1e-05
        %v4947 = vadd.f32 %v4883, 1e-05
        %v4948 = vadd.f32 %v4884, 1e-05
        %v4949 = vadd.f32 %v4885, 1e-05
        %v4950 = vadd.f32 %v4886, 1e-05
        %v4951 = vadd.f32 %v4887, 1e-05
        %v4952 = vadd.f32 %v4888, 1e-05
        %v4953 = vadd.f32 %v4889, 1e-05
        %v4954 = vadd.f32 %v4890, 1e-05
        %v4955 = vadd.f32 %v4891, 1e-05
        %v4956 = vadd.f32 %v4892, 1e-05
        %v4957 = vadd.f32 %v4893, 1e-05
        %v4958 = vadd.f32 %v4894, 1e-05
        %v4959 = vadd.f32 %v4895, 1e-05
        %v4960 = vadd.f32 %v4896, 1e-05
        %v4961 = vadd.f32 %v4897, 1e-05
        %v4962 = vadd.f32 %v4898, 1e-05
        %v4963 = vadd.f32 %v4899, 1e-05
        %v4964 = vadd.f32 %v4900, 1e-05
        %v4965 = vadd.f32 %v4901, 1e-05
        %v4966 = vadd.f32 %v4902, 1e-05
        %v4967 = vadd.f32 %v4903, 1e-05
        %v4968 = vadd.f32 %v4904, 1e-05
        %v4969 = vadd.f32 %v4905, 1e-05
        %v4970 = vadd.f32 %v4906, 1e-05
        %v4971 = vadd.f32 %v4907, 1e-05
        %v4972 = vadd.f32 %v4908, 1e-05
        %v4973 = vadd.f32 %v4909, 1e-05
        %v4974 = vadd.f32 %v4910, 1e-05
        %v4975 = vadd.f32 %v4911, 1e-05
        %v4976 = vadd.f32 %v4912, 1e-05
        %v4977 = vadd.f32 %v4913, 1e-05
        %v4978 = vadd.f32 %v4914, 1e-05
        %v4979 = vadd.f32 %v4915, 1e-05
        %v4980 = vadd.f32 %v4916, 1e-05
        %v4981 = vadd.f32 %v4917, 1e-05
        %v4982 = vadd.f32 %v4918, 1e-05
        %v4983 = vadd.f32 %v4919, 1e-05
        %v4984 = vadd.f32 %v4920, 1e-05
        %v4985 = vadd.f32 %v4921, 1e-05
        %v4986 = vadd.f32 %v4922, 1e-05
        %v4987 = vadd.f32 %v4923, 1e-05
        %v4988 = vadd.f32 %v4924, 1e-05
        %v4989 = vadd.f32 %v4925, 1e-05
        %v4990 = vadd.f32 %v4926, 1e-05
        %v4991 = vadd.f32 %v4927, 1e-05
        %v4992 = vadd.f32 %v4928, 1e-05
        %v4993 = vadd.f32 %v4929, 1e-05
        %v4994 = vadd.f32 %v4930, 1e-05
        %v4995 = vadd.f32 %v4931, 1e-05
        %v4996 = vadd.f32 %v4932, 1e-05
        %v4997 = vadd.f32 %v4933, 1e-05
        %v4998 = vadd.f32 %v4934, 1e-05
        %v4999 = vadd.f32 %v4935, 1e-05
        %v5000 = vadd.f32 %v4936, 1e-05
        %v5001 = vadd.f32 %v4937, 1e-05
        %v5002 = vadd.f32 %v4938, 1e-05
        %v5003 = vadd.f32 %v4939, 1e-05
        %v5004 = vadd.f32 %v4940, 1e-05
        %v5005 = vadd.f32 %v4941, 1e-05
        %v5006 = vadd.f32 %v4942, 1e-05
        %v5007 = vrsqrt.pop %v4943
        %v5008 = vrsqrt.pop %v4944
        %v5009 = vrsqrt.pop %v4945
        %v5010 = vrsqrt.pop %v4946
        %v5011 = vrsqrt.pop %v4947
        %v5012 = vrsqrt.pop %v4948
        %v5013 = vrsqrt.pop %v4949
        %v5014 = vrsqrt.pop %v4950
        %v5015 = vrsqrt.pop %v4951
        %v5016 = vrsqrt.pop %v4952
        %v5017 = vrsqrt.pop %v4953
        %v5018 = vrsqrt.pop %v4954
        %v5019 = vrsqrt.pop %v4955
        %v5020 = vrsqrt.pop %v4956
        %v5021 = vrsqrt.pop %v4957
        %v5022 = vrsqrt.pop %v4958
        %v5023 = vrsqrt.pop %v4959
        %v5024 = vrsqrt.pop %v4960
        %v5025 = vrsqrt.pop %v4961
        %v5026 = vrsqrt.pop %v4962
        %v5027 = vrsqrt.pop %v4963
        %v5028 = vrsqrt.pop %v4964
        %v5029 = vrsqrt.pop %v4965
        %v5030 = vrsqrt.pop %v4966
        %v5031 = vrsqrt.pop %v4967
        %v5032 = vrsqrt.pop %v4968
        %v5033 = vrsqrt.pop %v4969
        %v5034 = vrsqrt.pop %v4970
        %v5035 = vrsqrt.pop %v4971
        %v5036 = vrsqrt.pop %v4972
        %v5037 = vrsqrt.pop %v4973
        %v5038 = vrsqrt.pop %v4974
        %v5039 = vrsqrt.pop %v4975
        %v5040 = vrsqrt.pop %v4976
        %v5041 = vrsqrt.pop %v4977
        %v5042 = vrsqrt.pop %v4978
        %v5043 = vrsqrt.pop %v4979
        %v5044 = vrsqrt.pop %v4980
        %v5045 = vrsqrt.pop %v4981
        %v5046 = vrsqrt.pop %v4982
        %v5047 = vrsqrt.pop %v4983
        %v5048 = vrsqrt.pop %v4984
        %v5049 = vrsqrt.pop %v4985
        %v5050 = vrsqrt.pop %v4986
        %v5051 = vrsqrt.pop %v4987
        %v5052 = vrsqrt.pop %v4988
        %v5053 = vrsqrt.pop %v4989
        %v5054 = vrsqrt.pop %v4990
        %v5055 = vrsqrt.pop %v4991
        %v5056 = vrsqrt.pop %v4992
        %v5057 = vrsqrt.pop %v4993
        %v5058 = vrsqrt.pop %v4994
        %v5059 = vrsqrt.pop %v4995
        %v5060 = vrsqrt.pop %v4996
        %v5061 = vrsqrt.pop %v4997
        %v5062 = vrsqrt.pop %v4998
        %v5063 = vrsqrt.pop %v4999
        %v5064 = vrsqrt.pop %v5000
        %v5065 = vrsqrt.pop %v5001
        %v5066 = vrsqrt.pop %v5002
        %v5067 = vrsqrt.pop %v5003
        %v5068 = vrsqrt.pop %v5004
        %v5069 = vrsqrt.pop %v5005
        %v5070 = vrsqrt.pop %v5006
        %v5071 = vmul.f32 %v4559, %v5007
        %v5072 = vmul.f32 %v4560, %v5008
        %v5073 = vmul.f32 %v4561, %v5009
        %v5074 = vmul.f32 %v4562, %v5010
        %v5075 = vmul.f32 %v4563, %v5011
        %v5076 = vmul.f32 %v4564, %v5012
        %v5077 = vmul.f32 %v4565, %v5013
        %v5078 = vmul.f32 %v4566, %v5014
        %v5079 = vmul.f32 %v4567, %v5015
        %v5080 = vmul.f32 %v4568, %v5016
        %v5081 = vmul.f32 %v4569, %v5017
        %v5082 = vmul.f32 %v4570, %v5018
        %v5083 = vmul.f32 %v4571, %v5019
        %v5084 = vmul.f32 %v4572, %v5020
        %v5085 = vmul.f32 %v4573, %v5021
        %v5086 = vmul.f32 %v4574, %v5022
        %v5087 = vmul.f32 %v4575, %v5023
        %v5088 = vmul.f32 %v4576, %v5024
        %v5089 = vmul.f32 %v4577, %v5025
        %v5090 = vmul.f32 %v4578, %v5026
        %v5091 = vmul.f32 %v4579, %v5027
        %v5092 = vmul.f32 %v4580, %v5028
        %v5093 = vmul.f32 %v4581, %v5029
        %v5094 = vmul.f32 %v4582, %v5030
        %v5095 = vmul.f32 %v4583, %v5031
        %v5096 = vmul.f32 %v4584, %v5032
        %v5097 = vmul.f32 %v4585, %v5033
        %v5098 = vmul.f32 %v4586, %v5034
        %v5099 = vmul.f32 %v4587, %v5035
        %v5100 = vmul.f32 %v4588, %v5036
        %v5101 = vmul.f32 %v4589, %v5037
        %v5102 = vmul.f32 %v4590, %v5038
        %v5103 = vmul.f32 %v4591, %v5039
        %v5104 = vmul.f32 %v4592, %v5040
        %v5105 = vmul.f32 %v4593, %v5041
        %v5106 = vmul.f32 %v4594, %v5042
        %v5107 = vmul.f32 %v4595, %v5043
        %v5108 = vmul.f32 %v4596, %v5044
        %v5109 = vmul.f32 %v4597, %v5045
        %v5110 = vmul.f32 %v4598, %v5046
        %v5111 = vmul.f32 %v4599, %v5047
        %v5112 = vmul.f32 %v4600, %v5048
        %v5113 = vmul.f32 %v4601, %v5049
        %v5114 = vmul.f32 %v4602, %v5050
        %v5115 = vmul.f32 %v4603, %v5051
        %v5116 = vmul.f32 %v4604, %v5052
        %v5117 = vmul.f32 %v4605, %v5053
        %v5118 = vmul.f32 %v4606, %v5054
        %v5119 = vmul.f32 %v4607, %v5055
        %v5120 = vmul.f32 %v4608, %v5056
        %v5121 = vmul.f32 %v4609, %v5057
        %v5122 = vmul.f32 %v4610, %v5058
        %v5123 = vmul.f32 %v4611, %v5059
        %v5124 = vmul.f32 %v4612, %v5060
        %v5125 = vmul.f32 %v4613, %v5061
        %v5126 = vmul.f32 %v4614, %v5062
        %v5127 = vmul.f32 %v4615, %v5063
        %v5128 = vmul.f32 %v4616, %v5064
        %v5129 = vmul.f32 %v4617, %v5065
        %v5130 = vmul.f32 %v4618, %v5066
        %v5131 = vmul.f32 %v4619, %v5067
        %v5132 = vmul.f32 %v4620, %v5068
        %v5133 = vmul.f32 %v4621, %v5069
        %v5134 = vmul.f32 %v4622, %v5070
        %v5136 = vlaneseq
        %v5137 = vshrl.u32 %v5136, 7
        %v5138 = vsub.s32 0, %v5137
        %v5139 = vrot.slane %v4301, %v5138
        %v5141 = vmul.f32 %v5071, %v5139
        %v5142 = vmul.f32 %v5072, %v5139
        %v5143 = vmul.f32 %v5073, %v5139
        %v5144 = vmul.f32 %v5074, %v5139
        %v5145 = vmul.f32 %v5075, %v5139
        %v5146 = vmul.f32 %v5076, %v5139
        %v5147 = vmul.f32 %v5077, %v5139
        %v5148 = vmul.f32 %v5078, %v5139
        %v5149 = vmul.f32 %v5079, %v5139
        %v5150 = vmul.f32 %v5080, %v5139
        %v5151 = vmul.f32 %v5081, %v5139
        %v5152 = vmul.f32 %v5082, %v5139
        %v5153 = vmul.f32 %v5083, %v5139
        %v5154 = vmul.f32 %v5084, %v5139
        %v5155 = vmul.f32 %v5085, %v5139
        %v5156 = vmul.f32 %v5086, %v5139
        %v5157 = vmul.f32 %v5087, %v5139
        %v5158 = vmul.f32 %v5088, %v5139
        %v5159 = vmul.f32 %v5089, %v5139
        %v5160 = vmul.f32 %v5090, %v5139
        %v5161 = vmul.f32 %v5091, %v5139
        %v5162 = vmul.f32 %v5092, %v5139
        %v5163 = vmul.f32 %v5093, %v5139
        %v5164 = vmul.f32 %v5094, %v5139
        %v5165 = vmul.f32 %v5095, %v5139
        %v5166 = vmul.f32 %v5096, %v5139
        %v5167 = vmul.f32 %v5097, %v5139
        %v5168 = vmul.f32 %v5098, %v5139
        %v5169 = vmul.f32 %v5099, %v5139
        %v5170 = vmul.f32 %v5100, %v5139
        %v5171 = vmul.f32 %v5101, %v5139
        %v5172 = vmul.f32 %v5102, %v5139
        %v5173 = vmul.f32 %v5103, %v5139
        %v5174 = vmul.f32 %v5104, %v5139
        %v5175 = vmul.f32 %v5105, %v5139
        %v5176 = vmul.f32 %v5106, %v5139
        %v5177 = vmul.f32 %v5107, %v5139
        %v5178 = vmul.f32 %v5108, %v5139
        %v5179 = vmul.f32 %v5109, %v5139
        %v5180 = vmul.f32 %v5110, %v5139
        %v5181 = vmul.f32 %v5111, %v5139
        %v5182 = vmul.f32 %v5112, %v5139
        %v5183 = vmul.f32 %v5113, %v5139
        %v5184 = vmul.f32 %v5114, %v5139
        %v5185 = vmul.f32 %v5115, %v5139
        %v5186 = vmul.f32 %v5116, %v5139
        %v5187 = vmul.f32 %v5117, %v5139
        %v5188 = vmul.f32 %v5118, %v5139
        %v5189 = vmul.f32 %v5119, %v5139
        %v5190 = vmul.f32 %v5120, %v5139
        %v5191 = vmul.f32 %v5121, %v5139
        %v5192 = vmul.f32 %v5122, %v5139
        %v5193 = vmul.f32 %v5123, %v5139
        %v5194 = vmul.f32 %v5124, %v5139
        %v5195 = vmul.f32 %v5125, %v5139
        %v5196 = vmul.f32 %v5126, %v5139
        %v5197 = vmul.f32 %v5127, %v5139
        %v5198 = vmul.f32 %v5128, %v5139
        %v5199 = vmul.f32 %v5129, %v5139
        %v5200 = vmul.f32 %v5130, %v5139
        %v5201 = vmul.f32 %v5131, %v5139
        %v5202 = vmul.f32 %v5132, %v5139
        %v5203 = vmul.f32 %v5133, %v5139
        %v5204 = vmul.f32 %v5134, %v5139
        %v5206 = vlaneseq
        %v5207 = vshrl.u32 %v5206, 7
        %v5208 = vsub.s32 0, %v5207
        %v5209 = vrot.slane %v4302, %v5208
        %v5211 = vadd.f32 %v5141, %v5209
        %v5212 = vadd.f32 %v5142, %v5209
        %v5213 = vadd.f32 %v5143, %v5209
        %v5214 = vadd.f32 %v5144, %v5209
        %v5215 = vadd.f32 %v5145, %v5209
        %v5216 = vadd.f32 %v5146, %v5209
        %v5217 = vadd.f32 %v5147, %v5209
        %v5218 = vadd.f32 %v5148, %v5209
        %v5219 = vadd.f32 %v5149, %v5209
        %v5220 = vadd.f32 %v5150, %v5209
        %v5221 = vadd.f32 %v5151, %v5209
        %v5222 = vadd.f32 %v5152, %v5209
        %v5223 = vadd.f32 %v5153, %v5209
        %v5224 = vadd.f32 %v5154, %v5209
        %v5225 = vadd.f32 %v5155, %v5209
        %v5226 = vadd.f32 %v5156, %v5209
        %v5227 = vadd.f32 %v5157, %v5209
        %v5228 = vadd.f32 %v5158, %v5209
        %v5229 = vadd.f32 %v5159, %v5209
        %v5230 = vadd.f32 %v5160, %v5209
        %v5231 = vadd.f32 %v5161, %v5209
        %v5232 = vadd.f32 %v5162, %v5209
        %v5233 = vadd.f32 %v5163, %v5209
        %v5234 = vadd.f32 %v5164, %v5209
        %v5235 = vadd.f32 %v5165, %v5209
        %v5236 = vadd.f32 %v5166, %v5209
        %v5237 = vadd.f32 %v5167, %v5209
        %v5238 = vadd.f32 %v5168, %v5209
        %v5239 = vadd.f32 %v5169, %v5209
        %v5240 = vadd.f32 %v5170, %v5209
        %v5241 = vadd.f32 %v5171, %v5209
        %v5242 = vadd.f32 %v5172, %v5209
        %v5243 = vadd.f32 %v5173, %v5209
        %v5244 = vadd.f32 %v5174, %v5209
        %v5245 = vadd.f32 %v5175, %v5209
        %v5246 = vadd.f32 %v5176, %v5209
        %v5247 = vadd.f32 %v5177, %v5209
        %v5248 = vadd.f32 %v5178, %v5209
        %v5249 = vadd.f32 %v5179, %v5209
        %v5250 = vadd.f32 %v5180, %v5209
        %v5251 = vadd.f32 %v5181, %v5209
        %v5252 = vadd.f32 %v5182, %v5209
        %v5253 = vadd.f32 %v5183, %v5209
        %v5254 = vadd.f32 %v5184, %v5209
        %v5255 = vadd.f32 %v5185, %v5209
        %v5256 = vadd.f32 %v5186, %v5209
        %v5257 = vadd.f32 %v5187, %v5209
        %v5258 = vadd.f32 %v5188, %v5209
        %v5259 = vadd.f32 %v5189, %v5209
        %v5260 = vadd.f32 %v5190, %v5209
        %v5261 = vadd.f32 %v5191, %v5209
        %v5262 = vadd.f32 %v5192, %v5209
        %v5263 = vadd.f32 %v5193, %v5209
        %v5264 = vadd.f32 %v5194, %v5209
        %v5265 = vadd.f32 %v5195, %v5209
        %v5266 = vadd.f32 %v5196, %v5209
        %v5267 = vadd.f32 %v5197, %v5209
        %v5268 = vadd.f32 %v5198, %v5209
        %v5269 = vadd.f32 %v5199, %v5209
        %v5270 = vadd.f32 %v5200, %v5209
        %v5271 = vadd.f32 %v5201, %v5209
        %v5272 = vadd.f32 %v5202, %v5209
        %v5273 = vadd.f32 %v5203, %v5209
        %v5274 = vadd.f32 %v5204, %v5209
        %v5275 = vpack.c.bf16 %v5212, %v5211
        %v5276 = vpack.c.bf16 %v5214, %v5213
        %v5277 = vpack.c.bf16 %v5216, %v5215
        %v5278 = vpack.c.bf16 %v5218, %v5217
        %v5279 = vpack.c.bf16 %v5220, %v5219
        %v5280 = vpack.c.bf16 %v5222, %v5221
        %v5281 = vpack.c.bf16 %v5224, %v5223
        %v5282 = vpack.c.bf16 %v5226, %v5225
        %v5283 = vpack.c.bf16 %v5228, %v5227
        %v5284 = vpack.c.bf16 %v5230, %v5229
        %v5285 = vpack.c.bf16 %v5232, %v5231
        %v5286 = vpack.c.bf16 %v5234, %v5233
        %v5287 = vpack.c.bf16 %v5236, %v5235
        %v5288 = vpack.c.bf16 %v5238, %v5237
        %v5289 = vpack.c.bf16 %v5240, %v5239
        %v5290 = vpack.c.bf16 %v5242, %v5241
        %v5291 = vpack.c.bf16 %v5244, %v5243
        %v5292 = vpack.c.bf16 %v5246, %v5245
        %v5293 = vpack.c.bf16 %v5248, %v5247
        %v5294 = vpack.c.bf16 %v5250, %v5249
        %v5295 = vpack.c.bf16 %v5252, %v5251
        %v5296 = vpack.c.bf16 %v5254, %v5253
        %v5297 = vpack.c.bf16 %v5256, %v5255
        %v5298 = vpack.c.bf16 %v5258, %v5257
        %v5299 = vpack.c.bf16 %v5260, %v5259
        %v5300 = vpack.c.bf16 %v5262, %v5261
        %v5301 = vpack.c.bf16 %v5264, %v5263
        %v5302 = vpack.c.bf16 %v5266, %v5265
        %v5303 = vpack.c.bf16 %v5268, %v5267
        %v5304 = vpack.c.bf16 %v5270, %v5269
        %v5305 = vpack.c.bf16 %v5272, %v5271
        %v5306 = vpack.c.bf16 %v5274, %v5273
        %v5307 = vld [vmem:[%s8] sm:$0xf]
        %v5308 = vld [vmem:[%s8 + $0x4] sm:$0xf]
        %v5309 = vld [vmem:[%s8 + $0x8] sm:$0xf]
        %v5310 = vld [vmem:[%s8 + $0xc] sm:$0xf]
        %v5311 = vld [vmem:[%s9] sm:$0x1]
        %v5313 = vlaneseq
        %v5314 = vshrl.u32 %v5313, 7
        %v5315 = vsub.s32 0, %v5314
        %v5316 = vrot.slane %v5311, %v5315
        %v5322 = vunpack.c.l.b16 %v5307
        %v5323 = vunpack.c.l.b16 %v5308
        %v5324 = vunpack.c.l.b16 %v5309
        %v5325 = vunpack.c.l.b16 %v5310
        %v5326 = vpack.c.b16 %v5323, %v5322
        %v5327 = vpack.c.b16 %v5325, %v5324
        %v5331 = vsel %vm526, %v5275, 0
        %v5334 = vsel %vm526, %v5276, 0
        %v5337 = vsel %vm526, %v5277, 0
        %v5340 = vsel %vm526, %v5278, 0
        %v5343 = vsel %vm526, %v5279, 0
        %v5346 = vsel %vm526, %v5280, 0
        %v5349 = vsel %vm526, %v5281, 0
        %v5352 = vsel %vm526, %v5282, 0
        %v5355 = vsel %vm526, %v5283, 0
        %v5358 = vsel %vm526, %v5284, 0
        %v5361 = vsel %vm526, %v5285, 0
        %v5364 = vsel %vm526, %v5286, 0
        %v5367 = vsel %vm526, %v5287, 0
        %v5370 = vsel %vm526, %v5288, 0
        %v5373 = vsel %vm526, %v5289, 0
        %v5376 = vsel %vm526, %v5290, 0
        %v5379 = vsel %vm526, %v5291, 0
        %v5382 = vsel %vm526, %v5292, 0
        %v5385 = vsel %vm526, %v5293, 0
        %v5388 = vsel %vm526, %v5294, 0
        %v5391 = vsel %vm526, %v5295, 0
        %v5394 = vsel %vm526, %v5296, 0
        %v5397 = vsel %vm526, %v5297, 0
        %v5400 = vsel %vm526, %v5298, 0
        %v5403 = vsel %vm526, %v5299, 0
        %v5406 = vsel %vm526, %v5300, 0
        %v5409 = vsel %vm526, %v5301, 0
        %v5412 = vsel %vm526, %v5302, 0
        %v5415 = vsel %vm526, %v5303, 0
        %v5418 = vsel %vm526, %v5304, 0
        %v5421 = vsel %vm526, %v5305, 0
        %v5424 = vsel %vm526, %v5306, 0
        %5426 = vmatprep.subr.bf16.mxu0 0
        %5427 = vmatpush1.bf16.msra.mxu0 0
        %5428 = vmatprep.subr.bf16.mxu0 0
        %5429 = vmatpush1.bf16.msra.mxu0 0
        %5430 = vmatprep.subr.bf16.mxu0 0
        %5431 = vmatpush1.bf16.msra.mxu0 0
        %5432 = vmatprep.subr.bf16.mxu0 0
        %5433 = vmatpush1.bf16.msra.mxu0 0
        %5434 = vmatprep.subr.bf16.mxu0 0
        %5435 = vmatpush1.bf16.msra.mxu0 0
        %5436 = vmatprep.subr.bf16.mxu0 0
        %5437 = vmatpush1.bf16.msra.mxu0 0
        %5438 = vmatprep.subr.bf16.mxu0 0
        %5439 = vmatpush1.bf16.msra.mxu0 %v5327
        %5440 = vmatprep.subr.bf16.mxu0 0
        %5441 = vmatpush1.bf16.msra.mxu0 %v5326
        %5442 = vmatprep.subr.bf16.mxu0 0
        %5443 = vmatpush2.bf16.msra.mxu0 0
        %5444 = vmatprep.subr.bf16.mxu0 0
        %5445 = vmatpush2.bf16.msra.mxu0 0
        %5446 = vmatprep.subr.bf16.mxu0 0
        %5447 = vmatpush2.bf16.msra.mxu0 0
        %5448 = vmatprep.subr.bf16.mxu0 0
        %5449 = vmatpush2.bf16.msra.mxu0 0
        %5450 = vmatprep.subr.bf16.mxu0 0
        %5451 = vmatpush2.bf16.msra.mxu0 0
        %5452 = vmatprep.subr.bf16.mxu0 0
        %5453 = vmatpush2.bf16.msra.mxu0 0
        %5454 = vmatprep.subr.bf16.mxu0 0
        %5455 = vmatpush2.bf16.msra.mxu0 0
        %5456 = vmatprep.subr.bf16.mxu0 0
        %5457 = vmatpush2.bf16.msra.mxu0 0
        %5458 = vmatprep.mubr.bf16.mxu0 0
        %5459 = vmatmul.mubr.bf16.gmra.mxu0 %v5331
        %v5460 = vpop.f32.mrf.mxu0
        %v5461 = vadd.f32 %v5316, %v5460
        %v5462 = vpop.f32.mrf.mxu0
        %v5463 = vpop.f32.mrf.mxu0
        %v5464 = vadd.f32 %v5316, %v5463
        %v5465 = vpop.f32.mrf.mxu0
        %5466 = vmatprep.mubr.bf16.mxu0 0
        %5467 = vmatmul.mubr.bf16.gmra.mxu0 %v5334
        %v5468 = vpop.f32.mrf.mxu0
        %v5469 = vadd.f32 %v5316, %v5468
        %v5470 = vpop.f32.mrf.mxu0
        %v5471 = vpop.f32.mrf.mxu0
        %v5472 = vadd.f32 %v5316, %v5471
        %v5473 = vpop.f32.mrf.mxu0
        %5474 = vmatprep.mubr.bf16.mxu0 0
        %5475 = vmatmul.mubr.bf16.gmra.mxu0 %v5337
        %v5476 = vpop.f32.mrf.mxu0
        %v5477 = vadd.f32 %v5316, %v5476
        %v5478 = vpop.f32.mrf.mxu0
        %v5479 = vpop.f32.mrf.mxu0
        %v5480 = vadd.f32 %v5316, %v5479
        %v5481 = vpop.f32.mrf.mxu0
        %5482 = vmatprep.mubr.bf16.mxu0 0
        %5483 = vmatmul.mubr.bf16.gmra.mxu0 %v5340
        %v5484 = vpop.f32.mrf.mxu0
        %v5485 = vadd.f32 %v5316, %v5484
        %v5486 = vpop.f32.mrf.mxu0
        %v5487 = vpop.f32.mrf.mxu0
        %v5488 = vadd.f32 %v5316, %v5487
        %v5489 = vpop.f32.mrf.mxu0
        %5490 = vmatprep.mubr.bf16.mxu0 0
        %5491 = vmatmul.mubr.bf16.gmra.mxu0 %v5343
        %v5492 = vpop.f32.mrf.mxu0
        %v5493 = vadd.f32 %v5316, %v5492
        %v5494 = vpop.f32.mrf.mxu0
        %v5495 = vpop.f32.mrf.mxu0
        %v5496 = vadd.f32 %v5316, %v5495
        %v5497 = vpop.f32.mrf.mxu0
        %5498 = vmatprep.mubr.bf16.mxu0 0
        %5499 = vmatmul.mubr.bf16.gmra.mxu0 %v5346
        %v5500 = vpop.f32.mrf.mxu0
        %v5501 = vadd.f32 %v5316, %v5500
        %v5502 = vpop.f32.mrf.mxu0
        %v5503 = vpop.f32.mrf.mxu0
        %v5504 = vadd.f32 %v5316, %v5503
        %v5505 = vpop.f32.mrf.mxu0
        %5506 = vmatprep.mubr.bf16.mxu0 0
        %5507 = vmatmul.mubr.bf16.gmra.mxu0 %v5349
        %v5508 = vpop.f32.mrf.mxu0
        %v5509 = vadd.f32 %v5316, %v5508
        %v5510 = vpop.f32.mrf.mxu0
        %v5511 = vpop.f32.mrf.mxu0
        %v5512 = vadd.f32 %v5316, %v5511
        %v5513 = vpop.f32.mrf.mxu0
        %5514 = vmatprep.mubr.bf16.mxu0 0
        %5515 = vmatmul.mubr.bf16.gmra.mxu0 %v5352
        %v5516 = vpop.f32.mrf.mxu0
        %v5517 = vadd.f32 %v5316, %v5516
        %v5518 = vpop.f32.mrf.mxu0
        %v5519 = vpop.f32.mrf.mxu0
        %v5520 = vadd.f32 %v5316, %v5519
        %v5521 = vpop.f32.mrf.mxu0
        %5522 = vmatprep.mubr.bf16.mxu0 0
        %5523 = vmatmul.mubr.bf16.gmra.mxu0 %v5355
        %v5524 = vpop.f32.mrf.mxu0
        %v5525 = vadd.f32 %v5316, %v5524
        %v5526 = vpop.f32.mrf.mxu0
        %v5527 = vpop.f32.mrf.mxu0
        %v5528 = vadd.f32 %v5316, %v5527
        %v5529 = vpop.f32.mrf.mxu0
        %5530 = vmatprep.mubr.bf16.mxu0 0
        %5531 = vmatmul.mubr.bf16.gmra.mxu0 %v5358
        %v5532 = vpop.f32.mrf.mxu0
        %v5533 = vadd.f32 %v5316, %v5532
        %v5534 = vpop.f32.mrf.mxu0
        %v5535 = vpop.f32.mrf.mxu0
        %v5536 = vadd.f32 %v5316, %v5535
        %v5537 = vpop.f32.mrf.mxu0
        %5538 = vmatprep.mubr.bf16.mxu0 0
        %5539 = vmatmul.mubr.bf16.gmra.mxu0 %v5361
        %v5540 = vpop.f32.mrf.mxu0
        %v5541 = vadd.f32 %v5316, %v5540
        %v5542 = vpop.f32.mrf.mxu0
        %v5543 = vpop.f32.mrf.mxu0
        %v5544 = vadd.f32 %v5316, %v5543
        %v5545 = vpop.f32.mrf.mxu0
        %5546 = vmatprep.mubr.bf16.mxu0 0
        %5547 = vmatmul.mubr.bf16.gmra.mxu0 %v5364
        %v5548 = vpop.f32.mrf.mxu0
        %v5549 = vadd.f32 %v5316, %v5548
        %v5550 = vpop.f32.mrf.mxu0
        %v5551 = vpop.f32.mrf.mxu0
        %v5552 = vadd.f32 %v5316, %v5551
        %v5553 = vpop.f32.mrf.mxu0
        %5554 = vmatprep.mubr.bf16.mxu0 0
        %5555 = vmatmul.mubr.bf16.gmra.mxu0 %v5367
        %v5556 = vpop.f32.mrf.mxu0
        %v5557 = vadd.f32 %v5316, %v5556
        %v5558 = vpop.f32.mrf.mxu0
        %v5559 = vpop.f32.mrf.mxu0
        %v5560 = vadd.f32 %v5316, %v5559
        %v5561 = vpop.f32.mrf.mxu0
        %5562 = vmatprep.mubr.bf16.mxu0 0
        %5563 = vmatmul.mubr.bf16.gmra.mxu0 %v5370
        %v5564 = vpop.f32.mrf.mxu0
        %v5565 = vadd.f32 %v5316, %v5564
        %v5566 = vpop.f32.mrf.mxu0
        %v5567 = vpop.f32.mrf.mxu0
        %v5568 = vadd.f32 %v5316, %v5567
        %v5569 = vpop.f32.mrf.mxu0
        %5570 = vmatprep.mubr.bf16.mxu0 0
        %5571 = vmatmul.mubr.bf16.gmra.mxu0 %v5373
        %v5572 = vpop.f32.mrf.mxu0
        %v5573 = vadd.f32 %v5316, %v5572
        %v5574 = vpop.f32.mrf.mxu0
        %v5575 = vpop.f32.mrf.mxu0
        %v5576 = vadd.f32 %v5316, %v5575
        %v5577 = vpop.f32.mrf.mxu0
        %5578 = vmatprep.mubr.bf16.mxu0 0
        %5579 = vmatmul.mubr.bf16.gmra.mxu0 %v5376
        %v5580 = vpop.f32.mrf.mxu0
        %v5581 = vadd.f32 %v5316, %v5580
        %v5582 = vpop.f32.mrf.mxu0
        %v5583 = vpop.f32.mrf.mxu0
        %v5584 = vadd.f32 %v5316, %v5583
        %v5585 = vpop.f32.mrf.mxu0
        %5586 = vmatprep.mubr.bf16.mxu0 0
        %5587 = vmatmul.mubr.bf16.gmra.mxu0 %v5379
        %v5588 = vpop.f32.mrf.mxu0
        %v5589 = vadd.f32 %v5316, %v5588
        %v5590 = vpop.f32.mrf.mxu0
        %v5591 = vpop.f32.mrf.mxu0
        %v5592 = vadd.f32 %v5316, %v5591
        %v5593 = vpop.f32.mrf.mxu0
        %5594 = vmatprep.mubr.bf16.mxu0 0
        %5595 = vmatmul.mubr.bf16.gmra.mxu0 %v5382
        %v5596 = vpop.f32.mrf.mxu0
        %v5597 = vadd.f32 %v5316, %v5596
        %v5598 = vpop.f32.mrf.mxu0
        %v5599 = vpop.f32.mrf.mxu0
        %v5600 = vadd.f32 %v5316, %v5599
        %v5601 = vpop.f32.mrf.mxu0
        %5602 = vmatprep.mubr.bf16.mxu0 0
        %5603 = vmatmul.mubr.bf16.gmra.mxu0 %v5385
        %v5604 = vpop.f32.mrf.mxu0
        %v5605 = vadd.f32 %v5316, %v5604
        %v5606 = vpop.f32.mrf.mxu0
        %v5607 = vpop.f32.mrf.mxu0
        %v5608 = vadd.f32 %v5316, %v5607
        %v5609 = vpop.f32.mrf.mxu0
        %5610 = vmatprep.mubr.bf16.mxu0 0
        %5611 = vmatmul.mubr.bf16.gmra.mxu0 %v5388
        %v5612 = vpop.f32.mrf.mxu0
        %v5613 = vadd.f32 %v5316, %v5612
        %v5614 = vpop.f32.mrf.mxu0
        %v5615 = vpop.f32.mrf.mxu0
        %v5616 = vadd.f32 %v5316, %v5615
        %v5617 = vpop.f32.mrf.mxu0
        %5618 = vmatprep.mubr.bf16.mxu0 0
        %5619 = vmatmul.mubr.bf16.gmra.mxu0 %v5391
        %v5620 = vpop.f32.mrf.mxu0
        %v5621 = vadd.f32 %v5316, %v5620
        %v5622 = vpop.f32.mrf.mxu0
        %v5623 = vpop.f32.mrf.mxu0
        %v5624 = vadd.f32 %v5316, %v5623
        %v5625 = vpop.f32.mrf.mxu0
        %5626 = vmatprep.mubr.bf16.mxu0 0
        %5627 = vmatmul.mubr.bf16.gmra.mxu0 %v5394
        %v5628 = vpop.f32.mrf.mxu0
        %v5629 = vadd.f32 %v5316, %v5628
        %v5630 = vpop.f32.mrf.mxu0
        %v5631 = vpop.f32.mrf.mxu0
        %v5632 = vadd.f32 %v5316, %v5631
        %v5633 = vpop.f32.mrf.mxu0
        %5634 = vmatprep.mubr.bf16.mxu0 0
        %5635 = vmatmul.mubr.bf16.gmra.mxu0 %v5397
        %v5636 = vpop.f32.mrf.mxu0
        %v5637 = vadd.f32 %v5316, %v5636
        %v5638 = vpop.f32.mrf.mxu0
        %v5639 = vpop.f32.mrf.mxu0
        %v5640 = vadd.f32 %v5316, %v5639
        %v5641 = vpop.f32.mrf.mxu0
        %5642 = vmatprep.mubr.bf16.mxu0 0
        %5643 = vmatmul.mubr.bf16.gmra.mxu0 %v5400
        %v5644 = vpop.f32.mrf.mxu0
        %v5645 = vadd.f32 %v5316, %v5644
        %v5646 = vpop.f32.mrf.mxu0
        %v5647 = vpop.f32.mrf.mxu0
        %v5648 = vadd.f32 %v5316, %v5647
        %v5649 = vpop.f32.mrf.mxu0
        %5650 = vmatprep.mubr.bf16.mxu0 0
        %5651 = vmatmul.mubr.bf16.gmra.mxu0 %v5403
        %v5652 = vpop.f32.mrf.mxu0
        %v5653 = vadd.f32 %v5316, %v5652
        %v5654 = vpop.f32.mrf.mxu0
        %v5655 = vpop.f32.mrf.mxu0
        %v5656 = vadd.f32 %v5316, %v5655
        %v5657 = vpop.f32.mrf.mxu0
        %5658 = vmatprep.mubr.bf16.mxu0 0
        %5659 = vmatmul.mubr.bf16.gmra.mxu0 %v5406
        %v5660 = vpop.f32.mrf.mxu0
        %v5661 = vadd.f32 %v5316, %v5660
        %v5662 = vpop.f32.mrf.mxu0
        %v5663 = vpop.f32.mrf.mxu0
        %v5664 = vadd.f32 %v5316, %v5663
        %v5665 = vpop.f32.mrf.mxu0
        %5666 = vmatprep.mubr.bf16.mxu0 0
        %5667 = vmatmul.mubr.bf16.gmra.mxu0 %v5409
        %v5668 = vpop.f32.mrf.mxu0
        %v5669 = vadd.f32 %v5316, %v5668
        %v5670 = vpop.f32.mrf.mxu0
        %v5671 = vpop.f32.mrf.mxu0
        %v5672 = vadd.f32 %v5316, %v5671
        %v5673 = vpop.f32.mrf.mxu0
        %5674 = vmatprep.mubr.bf16.mxu0 0
        %5675 = vmatmul.mubr.bf16.gmra.mxu0 %v5412
        %v5676 = vpop.f32.mrf.mxu0
        %v5677 = vadd.f32 %v5316, %v5676
        %v5678 = vpop.f32.mrf.mxu0
        %v5679 = vpop.f32.mrf.mxu0
        %v5680 = vadd.f32 %v5316, %v5679
        %v5681 = vpop.f32.mrf.mxu0
        %5682 = vmatprep.mubr.bf16.mxu0 0
        %5683 = vmatmul.mubr.bf16.gmra.mxu0 %v5415
        %v5684 = vpop.f32.mrf.mxu0
        %v5685 = vadd.f32 %v5316, %v5684
        %v5686 = vpop.f32.mrf.mxu0
        %v5687 = vpop.f32.mrf.mxu0
        %v5688 = vadd.f32 %v5316, %v5687
        %v5689 = vpop.f32.mrf.mxu0
        %5690 = vmatprep.mubr.bf16.mxu0 0
        %5691 = vmatmul.mubr.bf16.gmra.mxu0 %v5418
        %v5692 = vpop.f32.mrf.mxu0
        %v5693 = vadd.f32 %v5316, %v5692
        %v5694 = vpop.f32.mrf.mxu0
        %v5695 = vpop.f32.mrf.mxu0
        %v5696 = vadd.f32 %v5316, %v5695
        %v5697 = vpop.f32.mrf.mxu0
        %5698 = vmatprep.mubr.bf16.mxu0 0
        %5699 = vmatmul.mubr.bf16.gmra.mxu0 %v5421
        %v5700 = vpop.f32.mrf.mxu0
        %v5701 = vadd.f32 %v5316, %v5700
        %v5702 = vpop.f32.mrf.mxu0
        %v5703 = vpop.f32.mrf.mxu0
        %v5704 = vadd.f32 %v5316, %v5703
        %v5705 = vpop.f32.mrf.mxu0
        %5706 = vmatprep.mubr.bf16.mxu0 0
        %5707 = vmatmul.mubr.bf16.gmra.mxu0 %v5424
        %v5708 = vpop.f32.mrf.mxu0
        %v5709 = vadd.f32 %v5316, %v5708
        %v5710 = vpop.f32.mrf.mxu0
        %v5711 = vpop.f32.mrf.mxu0
        %v5712 = vadd.f32 %v5316, %v5711
        %v5713 = vpop.f32.mrf.mxu0
        %5714 = vdwg.mxu0
        %v5715 = vmul.f32 %v5461, 0.5
        %v5716 = vmul.f32 %v5464, 0.5
        %v5717 = vmul.f32 %v5469, 0.5
        %v5718 = vmul.f32 %v5472, 0.5
        %v5719 = vmul.f32 %v5477, 0.5
        %v5720 = vmul.f32 %v5480, 0.5
        %v5721 = vmul.f32 %v5485, 0.5
        %v5722 = vmul.f32 %v5488, 0.5
        %v5723 = vmul.f32 %v5493, 0.5
        %v5724 = vmul.f32 %v5496, 0.5
        %v5725 = vmul.f32 %v5501, 0.5
        %v5726 = vmul.f32 %v5504, 0.5
        %v5727 = vmul.f32 %v5509, 0.5
        %v5728 = vmul.f32 %v5512, 0.5
        %v5729 = vmul.f32 %v5517, 0.5
        %v5730 = vmul.f32 %v5520, 0.5
        %v5731 = vmul.f32 %v5525, 0.5
        %v5732 = vmul.f32 %v5528, 0.5
        %v5733 = vmul.f32 %v5533, 0.5
        %v5734 = vmul.f32 %v5536, 0.5
        %v5735 = vmul.f32 %v5541, 0.5
        %v5736 = vmul.f32 %v5544, 0.5
        %v5737 = vmul.f32 %v5549, 0.5
        %v5738 = vmul.f32 %v5552, 0.5
        %v5739 = vmul.f32 %v5557, 0.5
        %v5740 = vmul.f32 %v5560, 0.5
        %v5741 = vmul.f32 %v5565, 0.5
        %v5742 = vmul.f32 %v5568, 0.5
        %v5743 = vmul.f32 %v5573, 0.5
        %v5744 = vmul.f32 %v5576, 0.5
        %v5745 = vmul.f32 %v5581, 0.5
        %v5746 = vmul.f32 %v5584, 0.5
        %v5747 = vmul.f32 %v5589, 0.5
        %v5748 = vmul.f32 %v5592, 0.5
        %v5749 = vmul.f32 %v5597, 0.5
        %v5750 = vmul.f32 %v5600, 0.5
        %v5751 = vmul.f32 %v5605, 0.5
        %v5752 = vmul.f32 %v5608, 0.5
        %v5753 = vmul.f32 %v5613, 0.5
        %v5754 = vmul.f32 %v5616, 0.5
        %v5755 = vmul.f32 %v5621, 0.5
        %v5756 = vmul.f32 %v5624, 0.5
        %v5757 = vmul.f32 %v5629, 0.5
        %v5758 = vmul.f32 %v5632, 0.5
        %v5759 = vmul.f32 %v5637, 0.5
        %v5760 = vmul.f32 %v5640, 0.5
        %v5761 = vmul.f32 %v5645, 0.5
        %v5762 = vmul.f32 %v5648, 0.5
        %v5763 = vmul.f32 %v5653, 0.5
        %v5764 = vmul.f32 %v5656, 0.5
        %v5765 = vmul.f32 %v5661, 0.5
        %v5766 = vmul.f32 %v5664, 0.5
        %v5767 = vmul.f32 %v5669, 0.5
        %v5768 = vmul.f32 %v5672, 0.5
        %v5769 = vmul.f32 %v5677, 0.5
        %v5770 = vmul.f32 %v5680, 0.5
        %v5771 = vmul.f32 %v5685, 0.5
        %v5772 = vmul.f32 %v5688, 0.5
        %v5773 = vmul.f32 %v5693, 0.5
        %v5774 = vmul.f32 %v5696, 0.5
        %v5775 = vmul.f32 %v5701, 0.5
        %v5776 = vmul.f32 %v5704, 0.5
        %v5777 = vmul.f32 %v5709, 0.5
        %v5778 = vmul.f32 %v5712, 0.5
        %v5779 = vmul.f32 %v5461, 0.70710677
        %v5780 = vmul.f32 %v5464, 0.70710677
        %v5781 = vmul.f32 %v5469, 0.70710677
        %v5782 = vmul.f32 %v5472, 0.70710677
        %v5783 = vmul.f32 %v5477, 0.70710677
        %v5784 = vmul.f32 %v5480, 0.70710677
        %v5785 = vmul.f32 %v5485, 0.70710677
        %v5786 = vmul.f32 %v5488, 0.70710677
        %v5787 = vmul.f32 %v5493, 0.70710677
        %v5788 = vmul.f32 %v5496, 0.70710677
        %v5789 = vmul.f32 %v5501, 0.70710677
        %v5790 = vmul.f32 %v5504, 0.70710677
        %v5791 = vmul.f32 %v5509, 0.70710677
        %v5792 = vmul.f32 %v5512, 0.70710677
        %v5793 = vmul.f32 %v5517, 0.70710677
        %v5794 = vmul.f32 %v5520, 0.70710677
        %v5795 = vmul.f32 %v5525, 0.70710677
        %v5796 = vmul.f32 %v5528, 0.70710677
        %v5797 = vmul.f32 %v5533, 0.70710677
        %v5798 = vmul.f32 %v5536, 0.70710677
        %v5799 = vmul.f32 %v5541, 0.70710677
        %v5800 = vmul.f32 %v5544, 0.70710677
        %v5801 = vmul.f32 %v5549, 0.70710677
        %v5802 = vmul.f32 %v5552, 0.70710677
        %v5803 = vmul.f32 %v5557, 0.70710677
        %v5804 = vmul.f32 %v5560, 0.70710677
        %v5805 = vmul.f32 %v5565, 0.70710677
        %v5806 = vmul.f32 %v5568, 0.70710677
        %v5807 = vmul.f32 %v5573, 0.70710677
        %v5808 = vmul.f32 %v5576, 0.70710677
        %v5809 = vmul.f32 %v5581, 0.70710677
        %v5810 = vmul.f32 %v5584, 0.70710677
        %v5811 = vmul.f32 %v5589, 0.70710677
        %v5812 = vmul.f32 %v5592, 0.70710677
        %v5813 = vmul.f32 %v5597, 0.70710677
        %v5814 = vmul.f32 %v5600, 0.70710677
        %v5815 = vmul.f32 %v5605, 0.70710677
        %v5816 = vmul.f32 %v5608, 0.70710677
        %v5817 = vmul.f32 %v5613, 0.70710677
        %v5818 = vmul.f32 %v5616, 0.70710677
        %v5819 = vmul.f32 %v5621, 0.70710677
        %v5820 = vmul.f32 %v5624, 0.70710677
        %v5821 = vmul.f32 %v5629, 0.70710677
        %v5822 = vmul.f32 %v5632, 0.70710677
        %v5823 = vmul.f32 %v5637, 0.70710677
        %v5824 = vmul.f32 %v5640, 0.70710677
        %v5825 = vmul.f32 %v5645, 0.70710677
        %v5826 = vmul.f32 %v5648, 0.70710677
        %v5827 = vmul.f32 %v5653, 0.70710677
        %v5828 = vmul.f32 %v5656, 0.70710677
        %v5829 = vmul.f32 %v5661, 0.70710677
        %v5830 = vmul.f32 %v5664, 0.70710677
        %v5831 = vmul.f32 %v5669, 0.70710677
        %v5832 = vmul.f32 %v5672, 0.70710677
        %v5833 = vmul.f32 %v5677, 0.70710677
        %v5834 = vmul.f32 %v5680, 0.70710677
        %v5835 = vmul.f32 %v5685, 0.70710677
        %v5836 = vmul.f32 %v5688, 0.70710677
        %v5837 = vmul.f32 %v5693, 0.70710677
        %v5838 = vmul.f32 %v5696, 0.70710677
        %v5839 = vmul.f32 %v5701, 0.70710677
        %v5840 = vmul.f32 %v5704, 0.70710677
        %v5841 = vmul.f32 %v5709, 0.70710677
        %v5842 = vmul.f32 %v5712, 0.70710677
        %v5843 = verf.f32.pop %v5779
        %v5844 = verf.f32.pop %v5780
        %v5845 = verf.f32.pop %v5781
        %v5846 = verf.f32.pop %v5782
        %v5847 = verf.f32.pop %v5783
        %v5848 = verf.f32.pop %v5784
        %v5849 = verf.f32.pop %v5785
        %v5850 = verf.f32.pop %v5786
        %v5851 = verf.f32.pop %v5787
        %v5852 = verf.f32.pop %v5788
        %v5853 = verf.f32.pop %v5789
        %v5854 = verf.f32.pop %v5790
        %v5855 = verf.f32.pop %v5791
        %v5856 = verf.f32.pop %v5792
        %v5857 = verf.f32.pop %v5793
        %v5858 = verf.f32.pop %v5794
        %v5859 = verf.f32.pop %v5795
        %v5860 = verf.f32.pop %v5796
        %v5861 = verf.f32.pop %v5797
        %v5862 = verf.f32.pop %v5798
        %v5863 = verf.f32.pop %v5799
        %v5864 = verf.f32.pop %v5800
        %v5865 = verf.f32.pop %v5801
        %v5866 = verf.f32.pop %v5802
        %v5867 = verf.f32.pop %v5803
        %v5868 = verf.f32.pop %v5804
        %v5869 = verf.f32.pop %v5805
        %v5870 = verf.f32.pop %v5806
        %v5871 = verf.f32.pop %v5807
        %v5872 = verf.f32.pop %v5808
        %v5873 = verf.f32.pop %v5809
        %v5874 = verf.f32.pop %v5810
        %v5875 = verf.f32.pop %v5811
        %v5876 = verf.f32.pop %v5812
        %v5877 = verf.f32.pop %v5813
        %v5878 = verf.f32.pop %v5814
        %v5879 = verf.f32.pop %v5815
        %v5880 = verf.f32.pop %v5816
        %v5881 = verf.f32.pop %v5817
        %v5882 = verf.f32.pop %v5818
        %v5883 = verf.f32.pop %v5819
        %v5884 = verf.f32.pop %v5820
        %v5885 = verf.f32.pop %v5821
        %v5886 = verf.f32.pop %v5822
        %v5887 = verf.f32.pop %v5823
        %v5888 = verf.f32.pop %v5824
        %v5889 = verf.f32.pop %v5825
        %v5890 = verf.f32.pop %v5826
        %v5891 = verf.f32.pop %v5827
        %v5892 = verf.f32.pop %v5828
        %v5893 = verf.f32.pop %v5829
        %v5894 = verf.f32.pop %v5830
        %v5895 = verf.f32.pop %v5831
        %v5896 = verf.f32.pop %v5832
        %v5897 = verf.f32.pop %v5833
        %v5898 = verf.f32.pop %v5834
        %v5899 = verf.f32.pop %v5835
        %v5900 = verf.f32.pop %v5836
        %v5901 = verf.f32.pop %v5837
        %v5902 = verf.f32.pop %v5838
        %v5903 = verf.f32.pop %v5839
        %v5904 = verf.f32.pop %v5840
        %v5905 = verf.f32.pop %v5841
        %v5906 = verf.f32.pop %v5842
        %v5907 = vadd.f32 %v5843, 1.0
        %v5908 = vadd.f32 %v5844, 1.0
        %v5909 = vadd.f32 %v5845, 1.0
        %v5910 = vadd.f32 %v5846, 1.0
        %v5911 = vadd.f32 %v5847, 1.0
        %v5912 = vadd.f32 %v5848, 1.0
        %v5913 = vadd.f32 %v5849, 1.0
        %v5914 = vadd.f32 %v5850, 1.0
        %v5915 = vadd.f32 %v5851, 1.0
        %v5916 = vadd.f32 %v5852, 1.0
        %v5917 = vadd.f32 %v5853, 1.0
        %v5918 = vadd.f32 %v5854, 1.0
        %v5919 = vadd.f32 %v5855, 1.0
        %v5920 = vadd.f32 %v5856, 1.0
        %v5921 = vadd.f32 %v5857, 1.0
        %v5922 = vadd.f32 %v5858, 1.0
        %v5923 = vadd.f32 %v5859, 1.0
        %v5924 = vadd.f32 %v5860, 1.0
        %v5925 = vadd.f32 %v5861, 1.0
        %v5926 = vadd.f32 %v5862, 1.0
        %v5927 = vadd.f32 %v5863, 1.0
        %v5928 = vadd.f32 %v5864, 1.0
        %v5929 = vadd.f32 %v5865, 1.0
        %v5930 = vadd.f32 %v5866, 1.0
        %v5931 = vadd.f32 %v5867, 1.0
        %v5932 = vadd.f32 %v5868, 1.0
        %v5933 = vadd.f32 %v5869, 1.0
        %v5934 = vadd.f32 %v5870, 1.0
        %v5935 = vadd.f32 %v5871, 1.0
        %v5936 = vadd.f32 %v5872, 1.0
        %v5937 = vadd.f32 %v5873, 1.0
        %v5938 = vadd.f32 %v5874, 1.0
        %v5939 = vadd.f32 %v5875, 1.0
        %v5940 = vadd.f32 %v5876, 1.0
        %v5941 = vadd.f32 %v5877, 1.0
        %v5942 = vadd.f32 %v5878, 1.0
        %v5943 = vadd.f32 %v5879, 1.0
        %v5944 = vadd.f32 %v5880, 1.0
        %v5945 = vadd.f32 %v5881, 1.0
        %v5946 = vadd.f32 %v5882, 1.0
        %v5947 = vadd.f32 %v5883, 1.0
        %v5948 = vadd.f32 %v5884, 1.0
        %v5949 = vadd.f32 %v5885, 1.0
        %v5950 = vadd.f32 %v5886, 1.0
        %v5951 = vadd.f32 %v5887, 1.0
        %v5952 = vadd.f32 %v5888, 1.0
        %v5953 = vadd.f32 %v5889, 1.0
        %v5954 = vadd.f32 %v5890, 1.0
        %v5955 = vadd.f32 %v5891, 1.0
        %v5956 = vadd.f32 %v5892, 1.0
        %v5957 = vadd.f32 %v5893, 1.0
        %v5958 = vadd.f32 %v5894, 1.0
        %v5959 = vadd.f32 %v5895, 1.0
        %v5960 = vadd.f32 %v5896, 1.0
        %v5961 = vadd.f32 %v5897, 1.0
        %v5962 = vadd.f32 %v5898, 1.0
        %v5963 = vadd.f32 %v5899, 1.0
        %v5964 = vadd.f32 %v5900, 1.0
        %v5965 = vadd.f32 %v5901, 1.0
        %v5966 = vadd.f32 %v5902, 1.0
        %v5967 = vadd.f32 %v5903, 1.0
        %v5968 = vadd.f32 %v5904, 1.0
        %v5969 = vadd.f32 %v5905, 1.0
        %v5970 = vadd.f32 %v5906, 1.0
        %v5971 = vmul.f32 %v5715, %v5907
        %v5972 = vmul.f32 %v5716, %v5908
        %v5973 = vmul.f32 %v5717, %v5909
        %v5974 = vmul.f32 %v5718, %v5910
        %v5975 = vmul.f32 %v5719, %v5911
        %v5976 = vmul.f32 %v5720, %v5912
        %v5977 = vmul.f32 %v5721, %v5913
        %v5978 = vmul.f32 %v5722, %v5914
        %v5979 = vmul.f32 %v5723, %v5915
        %v5980 = vmul.f32 %v5724, %v5916
        %v5981 = vmul.f32 %v5725, %v5917
        %v5982 = vmul.f32 %v5726, %v5918
        %v5983 = vmul.f32 %v5727, %v5919
        %v5984 = vmul.f32 %v5728, %v5920
        %v5985 = vmul.f32 %v5729, %v5921
        %v5986 = vmul.f32 %v5730, %v5922
        %v5987 = vmul.f32 %v5731, %v5923
        %v5988 = vmul.f32 %v5732, %v5924
        %v5989 = vmul.f32 %v5733, %v5925
        %v5990 = vmul.f32 %v5734, %v5926
        %v5991 = vmul.f32 %v5735, %v5927
        %v5992 = vmul.f32 %v5736, %v5928
        %v5993 = vmul.f32 %v5737, %v5929
        %v5994 = vmul.f32 %v5738, %v5930
        %v5995 = vmul.f32 %v5739, %v5931
        %v5996 = vmul.f32 %v5740, %v5932
        %v5997 = vmul.f32 %v5741, %v5933
        %v5998 = vmul.f32 %v5742, %v5934
        %v5999 = vmul.f32 %v5743, %v5935
        %v6000 = vmul.f32 %v5744, %v5936
        %v6001 = vmul.f32 %v5745, %v5937
        %v6002 = vmul.f32 %v5746, %v5938
        %v6003 = vmul.f32 %v5747, %v5939
        %v6004 = vmul.f32 %v5748, %v5940
        %v6005 = vmul.f32 %v5749, %v5941
        %v6006 = vmul.f32 %v5750, %v5942
        %v6007 = vmul.f32 %v5751, %v5943
        %v6008 = vmul.f32 %v5752, %v5944
        %v6009 = vmul.f32 %v5753, %v5945
        %v6010 = vmul.f32 %v5754, %v5946
        %v6011 = vmul.f32 %v5755, %v5947
        %v6012 = vmul.f32 %v5756, %v5948
        %v6013 = vmul.f32 %v5757, %v5949
        %v6014 = vmul.f32 %v5758, %v5950
        %v6015 = vmul.f32 %v5759, %v5951
        %v6016 = vmul.f32 %v5760, %v5952
        %v6017 = vmul.f32 %v5761, %v5953
        %v6018 = vmul.f32 %v5762, %v5954
        %v6019 = vmul.f32 %v5763, %v5955
        %v6020 = vmul.f32 %v5764, %v5956
        %v6021 = vmul.f32 %v5765, %v5957
        %v6022 = vmul.f32 %v5766, %v5958
        %v6023 = vmul.f32 %v5767, %v5959
        %v6024 = vmul.f32 %v5768, %v5960
        %v6025 = vmul.f32 %v5769, %v5961
        %v6026 = vmul.f32 %v5770, %v5962
        %v6027 = vmul.f32 %v5771, %v5963
        %v6028 = vmul.f32 %v5772, %v5964
        %v6029 = vmul.f32 %v5773, %v5965
        %v6030 = vmul.f32 %v5774, %v5966
        %v6031 = vmul.f32 %v5775, %v5967
        %v6032 = vmul.f32 %v5776, %v5968
        %v6033 = vmul.f32 %v5777, %v5969
        %v6034 = vmul.f32 %v5778, %v5970
        %v6035 = vpack.c.bf16 %v5972, %v5971
        %v6036 = vpack.c.bf16 %v5974, %v5973
        %v6037 = vpack.c.bf16 %v5976, %v5975
        %v6038 = vpack.c.bf16 %v5978, %v5977
        %v6039 = vpack.c.bf16 %v5980, %v5979
        %v6040 = vpack.c.bf16 %v5982, %v5981
        %v6041 = vpack.c.bf16 %v5984, %v5983
        %v6042 = vpack.c.bf16 %v5986, %v5985
        %v6043 = vpack.c.bf16 %v5988, %v5987
        %v6044 = vpack.c.bf16 %v5990, %v5989
        %v6045 = vpack.c.bf16 %v5992, %v5991
        %v6046 = vpack.c.bf16 %v5994, %v5993
        %v6047 = vpack.c.bf16 %v5996, %v5995
        %v6048 = vpack.c.bf16 %v5998, %v5997
        %v6049 = vpack.c.bf16 %v6000, %v5999
        %v6050 = vpack.c.bf16 %v6002, %v6001
        %v6051 = vpack.c.bf16 %v6004, %v6003
        %v6052 = vpack.c.bf16 %v6006, %v6005
        %v6053 = vpack.c.bf16 %v6008, %v6007
        %v6054 = vpack.c.bf16 %v6010, %v6009
        %v6055 = vpack.c.bf16 %v6012, %v6011
        %v6056 = vpack.c.bf16 %v6014, %v6013
        %v6057 = vpack.c.bf16 %v6016, %v6015
        %v6058 = vpack.c.bf16 %v6018, %v6017
        %v6059 = vpack.c.bf16 %v6020, %v6019
        %v6060 = vpack.c.bf16 %v6022, %v6021
        %v6061 = vpack.c.bf16 %v6024, %v6023
        %v6062 = vpack.c.bf16 %v6026, %v6025
        %v6063 = vpack.c.bf16 %v6028, %v6027
        %v6064 = vpack.c.bf16 %v6030, %v6029
        %v6065 = vpack.c.bf16 %v6032, %v6031
        %v6066 = vpack.c.bf16 %v6034, %v6033
        %v6067 = vld [vmem:[%s10] sm:$0xf]
        %v6068 = vld [vmem:[%s10 + $0x4] sm:$0xf]
        %v6069 = vld [vmem:[%s10 + $0x8] sm:$0xf]
        %v6070 = vld [vmem:[%s10 + $0xc] sm:$0xf]
        %v6071 = vld [vmem:[%s10 + $0x10] sm:$0xf]
        %v6072 = vld [vmem:[%s10 + $0x14] sm:$0xf]
        %v6073 = vld [vmem:[%s10 + $0x18] sm:$0xf]
        %v6074 = vld [vmem:[%s10 + $0x1c] sm:$0xf]
        %v6075 = vld [vmem:[%s10 + $0x20] sm:$0xf]
        %v6076 = vld [vmem:[%s10 + $0x24] sm:$0xf]
        %v6077 = vld [vmem:[%s10 + $0x28] sm:$0xf]
        %v6078 = vld [vmem:[%s10 + $0x2c] sm:$0xf]
        %v6079 = vld [vmem:[%s10 + $0x30] sm:$0xf]
        %v6080 = vld [vmem:[%s10 + $0x34] sm:$0xf]
        %v6081 = vld [vmem:[%s10 + $0x38] sm:$0xf]
        %v6082 = vld [vmem:[%s10 + $0x3c] sm:$0xf]
        %v6083 = vld [vmem:[%s11] sm:$0x1]
        %v6085 = vlaneseq
        %v6086 = vshrl.u32 %v6085, 7
        %v6087 = vsub.s32 0, %v6086
        %v6088 = vrot.slane %v6083, %v6087
        %v6106 = vunpack.c.l.b16 %v6067
        %v6107 = vunpack.c.l.b16 %v6068
        %v6108 = vunpack.c.l.b16 %v6069
        %v6109 = vunpack.c.l.b16 %v6070
        %v6110 = vunpack.c.l.b16 %v6071
        %v6111 = vunpack.c.l.b16 %v6072
        %v6112 = vunpack.c.l.b16 %v6073
        %v6113 = vunpack.c.l.b16 %v6074
        %v6114 = vunpack.c.l.b16 %v6075
        %v6115 = vunpack.c.l.b16 %v6076
        %v6116 = vunpack.c.l.b16 %v6077
        %v6117 = vunpack.c.l.b16 %v6078
        %v6118 = vunpack.c.l.b16 %v6079
        %v6119 = vunpack.c.l.b16 %v6080
        %v6120 = vunpack.c.l.b16 %v6081
        %v6121 = vunpack.c.l.b16 %v6082
        %v6122 = vpack.c.b16 %v6107, %v6106
        %v6123 = vpack.c.b16 %v6109, %v6108
        %v6124 = vpack.c.b16 %v6111, %v6110
        %v6125 = vpack.c.b16 %v6113, %v6112
        %v6126 = vpack.c.b16 %v6115, %v6114
        %v6127 = vpack.c.b16 %v6117, %v6116
        %v6128 = vpack.c.b16 %v6119, %v6118
        %v6129 = vpack.c.b16 %v6121, %v6120
        %6138 = vmatprep.subr.bf16.mxu0 0
        %6139 = vmatpush1.bf16.msra.mxu0 %v6129
        %6140 = vmatprep.subr.bf16.mxu0 0
        %6141 = vmatpush1.bf16.msra.mxu0 %v6128
        %6142 = vmatprep.subr.bf16.mxu0 0
        %6143 = vmatpush1.bf16.msra.mxu0 %v6127
        %6144 = vmatprep.subr.bf16.mxu0 0
        %6145 = vmatpush1.bf16.msra.mxu0 %v6126
        %6146 = vmatprep.subr.bf16.mxu0 0
        %6147 = vmatpush1.bf16.msra.mxu0 %v6125
        %6148 = vmatprep.subr.bf16.mxu0 0
        %6149 = vmatpush1.bf16.msra.mxu0 %v6124
        %6150 = vmatprep.subr.bf16.mxu0 0
        %6151 = vmatpush1.bf16.msra.mxu0 %v6123
        %6152 = vmatprep.subr.bf16.mxu0 0
        %6153 = vmatpush1.bf16.msra.mxu0 %v6122
        %6154 = vmatprep.subr.bf16.mxu0 0
        %6155 = vmatpush2.bf16.msra.mxu0 0
        %6156 = vmatprep.subr.bf16.mxu0 0
        %6157 = vmatpush2.bf16.msra.mxu0 0
        %6158 = vmatprep.subr.bf16.mxu0 0
        %6159 = vmatpush2.bf16.msra.mxu0 0
        %6160 = vmatprep.subr.bf16.mxu0 0
        %6161 = vmatpush2.bf16.msra.mxu0 0
        %6162 = vmatprep.subr.bf16.mxu0 0
        %6163 = vmatpush2.bf16.msra.mxu0 0
        %6164 = vmatprep.subr.bf16.mxu0 0
        %6165 = vmatpush2.bf16.msra.mxu0 0
        %6166 = vmatprep.subr.bf16.mxu0 0
        %6167 = vmatpush2.bf16.msra.mxu0 0
        %6168 = vmatprep.subr.bf16.mxu0 0
        %6169 = vmatpush2.bf16.msra.mxu0 0
        %6170 = vmatprep.mubr.bf16.mxu0 0
        %6171 = vmatmul.mubr.bf16.gmra.mxu0 %v6035
        %v6172 = vpop.f32.mrf.mxu0
        %v6173 = vadd.f32 %v6088, %v6172
        %v6174 = vpop.f32.mrf.mxu0
        %v6175 = vpop.f32.mrf.mxu0
        %v6176 = vadd.f32 %v6088, %v6175
        %v6177 = vpop.f32.mrf.mxu0
        %6178 = vmatprep.mubr.bf16.mxu0 0
        %6179 = vmatmul.mubr.bf16.gmra.mxu0 %v6036
        %v6180 = vpop.f32.mrf.mxu0
        %v6181 = vadd.f32 %v6088, %v6180
        %v6182 = vpop.f32.mrf.mxu0
        %v6183 = vpop.f32.mrf.mxu0
        %v6184 = vadd.f32 %v6088, %v6183
        %v6185 = vpop.f32.mrf.mxu0
        %6186 = vmatprep.mubr.bf16.mxu0 0
        %6187 = vmatmul.mubr.bf16.gmra.mxu0 %v6037
        %v6188 = vpop.f32.mrf.mxu0
        %v6189 = vadd.f32 %v6088, %v6188
        %v6190 = vpop.f32.mrf.mxu0
        %v6191 = vpop.f32.mrf.mxu0
        %v6192 = vadd.f32 %v6088, %v6191
        %v6193 = vpop.f32.mrf.mxu0
        %6194 = vmatprep.mubr.bf16.mxu0 0
        %6195 = vmatmul.mubr.bf16.gmra.mxu0 %v6038
        %v6196 = vpop.f32.mrf.mxu0
        %v6197 = vadd.f32 %v6088, %v6196
        %v6198 = vpop.f32.mrf.mxu0
        %v6199 = vpop.f32.mrf.mxu0
        %v6200 = vadd.f32 %v6088, %v6199
        %v6201 = vpop.f32.mrf.mxu0
        %6202 = vmatprep.mubr.bf16.mxu0 0
        %6203 = vmatmul.mubr.bf16.gmra.mxu0 %v6039
        %v6204 = vpop.f32.mrf.mxu0
        %v6205 = vadd.f32 %v6088, %v6204
        %v6206 = vpop.f32.mrf.mxu0
        %v6207 = vpop.f32.mrf.mxu0
        %v6208 = vadd.f32 %v6088, %v6207
        %v6209 = vpop.f32.mrf.mxu0
        %6210 = vmatprep.mubr.bf16.mxu0 0
        %6211 = vmatmul.mubr.bf16.gmra.mxu0 %v6040
        %v6212 = vpop.f32.mrf.mxu0
        %v6213 = vadd.f32 %v6088, %v6212
        %v6214 = vpop.f32.mrf.mxu0
        %v6215 = vpop.f32.mrf.mxu0
        %v6216 = vadd.f32 %v6088, %v6215
        %v6217 = vpop.f32.mrf.mxu0
        %6218 = vmatprep.mubr.bf16.mxu0 0
        %6219 = vmatmul.mubr.bf16.gmra.mxu0 %v6041
        %v6220 = vpop.f32.mrf.mxu0
        %v6221 = vadd.f32 %v6088, %v6220
        %v6222 = vpop.f32.mrf.mxu0
        %v6223 = vpop.f32.mrf.mxu0
        %v6224 = vadd.f32 %v6088, %v6223
        %v6225 = vpop.f32.mrf.mxu0
        %6226 = vmatprep.mubr.bf16.mxu0 0
        %6227 = vmatmul.mubr.bf16.gmra.mxu0 %v6042
        %v6228 = vpop.f32.mrf.mxu0
        %v6229 = vadd.f32 %v6088, %v6228
        %v6230 = vpop.f32.mrf.mxu0
        %v6231 = vpop.f32.mrf.mxu0
        %v6232 = vadd.f32 %v6088, %v6231
        %v6233 = vpop.f32.mrf.mxu0
        %6234 = vmatprep.mubr.bf16.mxu0 0
        %6235 = vmatmul.mubr.bf16.gmra.mxu0 %v6043
        %v6236 = vpop.f32.mrf.mxu0
        %v6237 = vadd.f32 %v6088, %v6236
        %v6238 = vpop.f32.mrf.mxu0
        %v6239 = vpop.f32.mrf.mxu0
        %v6240 = vadd.f32 %v6088, %v6239
        %v6241 = vpop.f32.mrf.mxu0
        %6242 = vmatprep.mubr.bf16.mxu0 0
        %6243 = vmatmul.mubr.bf16.gmra.mxu0 %v6044
        %v6244 = vpop.f32.mrf.mxu0
        %v6245 = vadd.f32 %v6088, %v6244
        %v6246 = vpop.f32.mrf.mxu0
        %v6247 = vpop.f32.mrf.mxu0
        %v6248 = vadd.f32 %v6088, %v6247
        %v6249 = vpop.f32.mrf.mxu0
        %6250 = vmatprep.mubr.bf16.mxu0 0
        %6251 = vmatmul.mubr.bf16.gmra.mxu0 %v6045
        %v6252 = vpop.f32.mrf.mxu0
        %v6253 = vadd.f32 %v6088, %v6252
        %v6254 = vpop.f32.mrf.mxu0
        %v6255 = vpop.f32.mrf.mxu0
        %v6256 = vadd.f32 %v6088, %v6255
        %v6257 = vpop.f32.mrf.mxu0
        %6258 = vmatprep.mubr.bf16.mxu0 0
        %6259 = vmatmul.mubr.bf16.gmra.mxu0 %v6046
        %v6260 = vpop.f32.mrf.mxu0
        %v6261 = vadd.f32 %v6088, %v6260
        %v6262 = vpop.f32.mrf.mxu0
        %v6263 = vpop.f32.mrf.mxu0
        %v6264 = vadd.f32 %v6088, %v6263
        %v6265 = vpop.f32.mrf.mxu0
        %6266 = vmatprep.mubr.bf16.mxu0 0
        %6267 = vmatmul.mubr.bf16.gmra.mxu0 %v6047
        %v6268 = vpop.f32.mrf.mxu0
        %v6269 = vadd.f32 %v6088, %v6268
        %v6270 = vpop.f32.mrf.mxu0
        %v6271 = vpop.f32.mrf.mxu0
        %v6272 = vadd.f32 %v6088, %v6271
        %v6273 = vpop.f32.mrf.mxu0
        %6274 = vmatprep.mubr.bf16.mxu0 0
        %6275 = vmatmul.mubr.bf16.gmra.mxu0 %v6048
        %v6276 = vpop.f32.mrf.mxu0
        %v6277 = vadd.f32 %v6088, %v6276
        %v6278 = vpop.f32.mrf.mxu0
        %v6279 = vpop.f32.mrf.mxu0
        %v6280 = vadd.f32 %v6088, %v6279
        %v6281 = vpop.f32.mrf.mxu0
        %6282 = vmatprep.mubr.bf16.mxu0 0
        %6283 = vmatmul.mubr.bf16.gmra.mxu0 %v6049
        %v6284 = vpop.f32.mrf.mxu0
        %v6285 = vadd.f32 %v6088, %v6284
        %v6286 = vpop.f32.mrf.mxu0
        %v6287 = vpop.f32.mrf.mxu0
        %v6288 = vadd.f32 %v6088, %v6287
        %v6289 = vpop.f32.mrf.mxu0
        %6290 = vmatprep.mubr.bf16.mxu0 0
        %6291 = vmatmul.mubr.bf16.gmra.mxu0 %v6050
        %v6292 = vpop.f32.mrf.mxu0
        %v6293 = vadd.f32 %v6088, %v6292
        %v6294 = vpop.f32.mrf.mxu0
        %v6295 = vpop.f32.mrf.mxu0
        %v6296 = vadd.f32 %v6088, %v6295
        %v6297 = vpop.f32.mrf.mxu0
        %6298 = vmatprep.mubr.bf16.mxu0 0
        %6299 = vmatmul.mubr.bf16.gmra.mxu0 %v6051
        %v6300 = vpop.f32.mrf.mxu0
        %v6301 = vadd.f32 %v6088, %v6300
        %v6302 = vpop.f32.mrf.mxu0
        %v6303 = vpop.f32.mrf.mxu0
        %v6304 = vadd.f32 %v6088, %v6303
        %v6305 = vpop.f32.mrf.mxu0
        %6306 = vmatprep.mubr.bf16.mxu0 0
        %6307 = vmatmul.mubr.bf16.gmra.mxu0 %v6052
        %v6308 = vpop.f32.mrf.mxu0
        %v6309 = vadd.f32 %v6088, %v6308
        %v6310 = vpop.f32.mrf.mxu0
        %v6311 = vpop.f32.mrf.mxu0
        %v6312 = vadd.f32 %v6088, %v6311
        %v6313 = vpop.f32.mrf.mxu0
        %6314 = vmatprep.mubr.bf16.mxu0 0
        %6315 = vmatmul.mubr.bf16.gmra.mxu0 %v6053
        %v6316 = vpop.f32.mrf.mxu0
        %v6317 = vadd.f32 %v6088, %v6316
        %v6318 = vpop.f32.mrf.mxu0
        %v6319 = vpop.f32.mrf.mxu0
        %v6320 = vadd.f32 %v6088, %v6319
        %v6321 = vpop.f32.mrf.mxu0
        %6322 = vmatprep.mubr.bf16.mxu0 0
        %6323 = vmatmul.mubr.bf16.gmra.mxu0 %v6054
        %v6324 = vpop.f32.mrf.mxu0
        %v6325 = vadd.f32 %v6088, %v6324
        %v6326 = vpop.f32.mrf.mxu0
        %v6327 = vpop.f32.mrf.mxu0
        %v6328 = vadd.f32 %v6088, %v6327
        %v6329 = vpop.f32.mrf.mxu0
        %6330 = vmatprep.mubr.bf16.mxu0 0
        %6331 = vmatmul.mubr.bf16.gmra.mxu0 %v6055
        %v6332 = vpop.f32.mrf.mxu0
        %v6333 = vadd.f32 %v6088, %v6332
        %v6334 = vpop.f32.mrf.mxu0
        %v6335 = vpop.f32.mrf.mxu0
        %v6336 = vadd.f32 %v6088, %v6335
        %v6337 = vpop.f32.mrf.mxu0
        %6338 = vmatprep.mubr.bf16.mxu0 0
        %6339 = vmatmul.mubr.bf16.gmra.mxu0 %v6056
        %v6340 = vpop.f32.mrf.mxu0
        %v6341 = vadd.f32 %v6088, %v6340
        %v6342 = vpop.f32.mrf.mxu0
        %v6343 = vpop.f32.mrf.mxu0
        %v6344 = vadd.f32 %v6088, %v6343
        %v6345 = vpop.f32.mrf.mxu0
        %6346 = vmatprep.mubr.bf16.mxu0 0
        %6347 = vmatmul.mubr.bf16.gmra.mxu0 %v6057
        %v6348 = vpop.f32.mrf.mxu0
        %v6349 = vadd.f32 %v6088, %v6348
        %v6350 = vpop.f32.mrf.mxu0
        %v6351 = vpop.f32.mrf.mxu0
        %v6352 = vadd.f32 %v6088, %v6351
        %v6353 = vpop.f32.mrf.mxu0
        %6354 = vmatprep.mubr.bf16.mxu0 0
        %6355 = vmatmul.mubr.bf16.gmra.mxu0 %v6058
        %v6356 = vpop.f32.mrf.mxu0
        %v6357 = vadd.f32 %v6088, %v6356
        %v6358 = vpop.f32.mrf.mxu0
        %v6359 = vpop.f32.mrf.mxu0
        %v6360 = vadd.f32 %v6088, %v6359
        %v6361 = vpop.f32.mrf.mxu0
        %6362 = vmatprep.mubr.bf16.mxu0 0
        %6363 = vmatmul.mubr.bf16.gmra.mxu0 %v6059
        %v6364 = vpop.f32.mrf.mxu0
        %v6365 = vadd.f32 %v6088, %v6364
        %v6366 = vpop.f32.mrf.mxu0
        %v6367 = vpop.f32.mrf.mxu0
        %v6368 = vadd.f32 %v6088, %v6367
        %v6369 = vpop.f32.mrf.mxu0
        %6370 = vmatprep.mubr.bf16.mxu0 0
        %6371 = vmatmul.mubr.bf16.gmra.mxu0 %v6060
        %v6372 = vpop.f32.mrf.mxu0
        %v6373 = vadd.f32 %v6088, %v6372
        %v6374 = vpop.f32.mrf.mxu0
        %v6375 = vpop.f32.mrf.mxu0
        %v6376 = vadd.f32 %v6088, %v6375
        %v6377 = vpop.f32.mrf.mxu0
        %6378 = vmatprep.mubr.bf16.mxu0 0
        %6379 = vmatmul.mubr.bf16.gmra.mxu0 %v6061
        %v6380 = vpop.f32.mrf.mxu0
        %v6381 = vadd.f32 %v6088, %v6380
        %v6382 = vpop.f32.mrf.mxu0
        %v6383 = vpop.f32.mrf.mxu0
        %v6384 = vadd.f32 %v6088, %v6383
        %v6385 = vpop.f32.mrf.mxu0
        %6386 = vmatprep.mubr.bf16.mxu0 0
        %6387 = vmatmul.mubr.bf16.gmra.mxu0 %v6062
        %v6388 = vpop.f32.mrf.mxu0
        %v6389 = vadd.f32 %v6088, %v6388
        %v6390 = vpop.f32.mrf.mxu0
        %v6391 = vpop.f32.mrf.mxu0
        %v6392 = vadd.f32 %v6088, %v6391
        %v6393 = vpop.f32.mrf.mxu0
        %6394 = vmatprep.mubr.bf16.mxu0 0
        %6395 = vmatmul.mubr.bf16.gmra.mxu0 %v6063
        %v6396 = vpop.f32.mrf.mxu0
        %v6397 = vadd.f32 %v6088, %v6396
        %v6398 = vpop.f32.mrf.mxu0
        %v6399 = vpop.f32.mrf.mxu0
        %v6400 = vadd.f32 %v6088, %v6399
        %v6401 = vpop.f32.mrf.mxu0
        %6402 = vmatprep.mubr.bf16.mxu0 0
        %6403 = vmatmul.mubr.bf16.gmra.mxu0 %v6064
        %v6404 = vpop.f32.mrf.mxu0
        %v6405 = vadd.f32 %v6088, %v6404
        %v6406 = vpop.f32.mrf.mxu0
        %v6407 = vpop.f32.mrf.mxu0
        %v6408 = vadd.f32 %v6088, %v6407
        %v6409 = vpop.f32.mrf.mxu0
        %6410 = vmatprep.mubr.bf16.mxu0 0
        %6411 = vmatmul.mubr.bf16.gmra.mxu0 %v6065
        %v6412 = vpop.f32.mrf.mxu0
        %v6413 = vadd.f32 %v6088, %v6412
        %v6414 = vpop.f32.mrf.mxu0
        %v6415 = vpop.f32.mrf.mxu0
        %v6416 = vadd.f32 %v6088, %v6415
        %v6417 = vpop.f32.mrf.mxu0
        %6418 = vmatprep.mubr.bf16.mxu0 0
        %6419 = vmatmul.mubr.bf16.gmra.mxu0 %v6066
        %v6420 = vpop.f32.mrf.mxu0
        %v6421 = vadd.f32 %v6088, %v6420
        %v6422 = vpop.f32.mrf.mxu0
        %v6423 = vpop.f32.mrf.mxu0
        %v6424 = vadd.f32 %v6088, %v6423
        %v6425 = vpop.f32.mrf.mxu0
        %6426 = vdwg.mxu0
        %v6427 = vadd.f32 %v4237, %v6173
        %v6428 = vadd.f32 %v4238, %v6176
        %v6429 = vadd.f32 %v4239, %v6181
        %v6430 = vadd.f32 %v4240, %v6184
        %v6431 = vadd.f32 %v4241, %v6189
        %v6432 = vadd.f32 %v4242, %v6192
        %v6433 = vadd.f32 %v4243, %v6197
        %v6434 = vadd.f32 %v4244, %v6200
        %v6435 = vadd.f32 %v4245, %v6205
        %v6436 = vadd.f32 %v4246, %v6208
        %v6437 = vadd.f32 %v4247, %v6213
        %v6438 = vadd.f32 %v4248, %v6216
        %v6439 = vadd.f32 %v4249, %v6221
        %v6440 = vadd.f32 %v4250, %v6224
        %v6441 = vadd.f32 %v4251, %v6229
        %v6442 = vadd.f32 %v4252, %v6232
        %v6443 = vadd.f32 %v4253, %v6237
        %v6444 = vadd.f32 %v4254, %v6240
        %v6445 = vadd.f32 %v4255, %v6245
        %v6446 = vadd.f32 %v4256, %v6248
        %v6447 = vadd.f32 %v4257, %v6253
        %v6448 = vadd.f32 %v4258, %v6256
        %v6449 = vadd.f32 %v4259, %v6261
        %v6450 = vadd.f32 %v4260, %v6264
        %v6451 = vadd.f32 %v4261, %v6269
        %v6452 = vadd.f32 %v4262, %v6272
        %v6453 = vadd.f32 %v4263, %v6277
        %v6454 = vadd.f32 %v4264, %v6280
        %v6455 = vadd.f32 %v4265, %v6285
        %v6456 = vadd.f32 %v4266, %v6288
        %v6457 = vadd.f32 %v4267, %v6293
        %v6458 = vadd.f32 %v4268, %v6296
        %v6459 = vadd.f32 %v4269, %v6301
        %v6460 = vadd.f32 %v4270, %v6304
        %v6461 = vadd.f32 %v4271, %v6309
        %v6462 = vadd.f32 %v4272, %v6312
        %v6463 = vadd.f32 %v4273, %v6317
        %v6464 = vadd.f32 %v4274, %v6320
        %v6465 = vadd.f32 %v4275, %v6325
        %v6466 = vadd.f32 %v4276, %v6328
        %v6467 = vadd.f32 %v4277, %v6333
        %v6468 = vadd.f32 %v4278, %v6336
        %v6469 = vadd.f32 %v4279, %v6341
        %v6470 = vadd.f32 %v4280, %v6344
        %v6471 = vadd.f32 %v4281, %v6349
        %v6472 = vadd.f32 %v4282, %v6352
        %v6473 = vadd.f32 %v4283, %v6357
        %v6474 = vadd.f32 %v4284, %v6360
        %v6475 = vadd.f32 %v4285, %v6365
        %v6476 = vadd.f32 %v4286, %v6368
        %v6477 = vadd.f32 %v4287, %v6373
        %v6478 = vadd.f32 %v4288, %v6376
        %v6479 = vadd.f32 %v4289, %v6381
        %v6480 = vadd.f32 %v4290, %v6384
        %v6481 = vadd.f32 %v4291, %v6389
        %v6482 = vadd.f32 %v4292, %v6392
        %v6483 = vadd.f32 %v4293, %v6397
        %v6484 = vadd.f32 %v4294, %v6400
        %v6485 = vadd.f32 %v4295, %v6405
        %v6486 = vadd.f32 %v4296, %v6408
        %v6487 = vadd.f32 %v4297, %v6413
        %v6488 = vadd.f32 %v4298, %v6416
        %v6489 = vadd.f32 %v4299, %v6421
        %v6490 = vadd.f32 %v4300, %v6424
        %v6491 = vld [vmem:[%s12] sm:$0xff]
        %v6492 = vld [vmem:[%s12 + $0x8] sm:$0xff]
        %v6495 = vcombine.high %v6491, %v6491
        %v6496 = vcombine.high %v6492, %v6492
        %6499 = vmatprep.subr.mxu0 0.0
        %6500 = vmatpush1.msra.mxu0 %v6442
        %6501 = vmatprep.subr.mxu0 0.0
        %6502 = vmatpush1.msra.mxu0 %v6441
        %6503 = vmatprep.subr.mxu0 0.0
        %6504 = vmatpush1.msra.mxu0 %v6440
        %6505 = vmatprep.subr.mxu0 0.0
        %6506 = vmatpush1.msra.mxu0 %v6439
        %6507 = vmatprep.subr.mxu0 0.0
        %6508 = vmatpush1.msra.mxu0 %v6438
        %6509 = vmatprep.subr.mxu0 0.0
        %6510 = vmatpush1.msra.mxu0 %v6437
        %6511 = vmatprep.subr.mxu0 0.0
        %6512 = vmatpush1.msra.mxu0 %v6436
        %6513 = vmatprep.subr.mxu0 0.0
        %6514 = vmatpush1.msra.mxu0 %v6435
        %6515 = vmatprep.subr.mxu0 0.0
        %6516 = vmatpush1.msra.mxu0 %v6434
        %6517 = vmatprep.subr.mxu0 0.0
        %6518 = vmatpush1.msra.mxu0 %v6433
        %6519 = vmatprep.subr.mxu0 0.0
        %6520 = vmatpush1.msra.mxu0 %v6432
        %6521 = vmatprep.subr.mxu0 0.0
        %6522 = vmatpush1.msra.mxu0 %v6431
        %6523 = vmatprep.subr.mxu0 0.0
        %6524 = vmatpush1.msra.mxu0 %v6430
        %6525 = vmatprep.subr.mxu0 0.0
        %6526 = vmatpush1.msra.mxu0 %v6429
        %6527 = vmatprep.subr.mxu0 0.0
        %6528 = vmatpush1.msra.mxu0 %v6428
        %6529 = vmatprep.subr.mxu0 0.0
        %6530 = vmatpush1.msra.mxu0 %v6427
        %6531 = vmatprep.subr.mxu0 0.0
        %6532 = vmatpush2.msra.mxu0 %v6458
        %6533 = vmatprep.subr.mxu0 0.0
        %6534 = vmatpush2.msra.mxu0 %v6457
        %6535 = vmatprep.subr.mxu0 0.0
        %6536 = vmatpush2.msra.mxu0 %v6456
        %6537 = vmatprep.subr.mxu0 0.0
        %6538 = vmatpush2.msra.mxu0 %v6455
        %6539 = vmatprep.subr.mxu0 0.0
        %6540 = vmatpush2.msra.mxu0 %v6454
        %6541 = vmatprep.subr.mxu0 0.0
        %6542 = vmatpush2.msra.mxu0 %v6453
        %6543 = vmatprep.subr.mxu0 0.0
        %6544 = vmatpush2.msra.mxu0 %v6452
        %6545 = vmatprep.subr.mxu0 0.0
        %6546 = vmatpush2.msra.mxu0 %v6451
        %6547 = vmatprep.subr.mxu0 0.0
        %6548 = vmatpush2.msra.mxu0 %v6450
        %6549 = vmatprep.subr.mxu0 0.0
        %6550 = vmatpush2.msra.mxu0 %v6449
        %6551 = vmatprep.subr.mxu0 0.0
        %6552 = vmatpush2.msra.mxu0 %v6448
        %6553 = vmatprep.subr.mxu0 0.0
        %6554 = vmatpush2.msra.mxu0 %v6447
        %6555 = vmatprep.subr.mxu0 0.0
        %6556 = vmatpush2.msra.mxu0 %v6446
        %6557 = vmatprep.subr.mxu0 0.0
        %6558 = vmatpush2.msra.mxu0 %v6445
        %6559 = vmatprep.subr.mxu0 0.0
        %6560 = vmatpush2.msra.mxu0 %v6444
        %6561 = vmatprep.subr.mxu0 0.0
        %6562 = vmatpush2.msra.mxu0 %v6443
        %6563 = vmatprep.mubr.f32.mxu0 %v6495
        %6564 = vmatmul.mubr.f32.gmra.mxu0 %v6491
        %v6565 = vpop.f32.mrf.mxu0
        %v6566 = vadd.f32 0.0, %v6565
        %v6567 = vpop.f32.mrf.mxu0
        %6568 = vdwg.mxu0
        %6569 = vmatprep.subr.mxu0 0.0
        %6570 = vmatpush1.msra.mxu0 %v6474
        %6571 = vmatprep.subr.mxu0 0.0
        %6572 = vmatpush1.msra.mxu0 %v6473
        %6573 = vmatprep.subr.mxu0 0.0
        %6574 = vmatpush1.msra.mxu0 %v6472
        %6575 = vmatprep.subr.mxu0 0.0
        %6576 = vmatpush1.msra.mxu0 %v6471
        %6577 = vmatprep.subr.mxu0 0.0
        %6578 = vmatpush1.msra.mxu0 %v6470
        %6579 = vmatprep.subr.mxu0 0.0
        %6580 = vmatpush1.msra.mxu0 %v6469
        %6581 = vmatprep.subr.mxu0 0.0
        %6582 = vmatpush1.msra.mxu0 %v6468
        %6583 = vmatprep.subr.mxu0 0.0
        %6584 = vmatpush1.msra.mxu0 %v6467
        %6585 = vmatprep.subr.mxu0 0.0
        %6586 = vmatpush1.msra.mxu0 %v6466
        %6587 = vmatprep.subr.mxu0 0.0
        %6588 = vmatpush1.msra.mxu0 %v6465
        %6589 = vmatprep.subr.mxu0 0.0
        %6590 = vmatpush1.msra.mxu0 %v6464
        %6591 = vmatprep.subr.mxu0 0.0
        %6592 = vmatpush1.msra.mxu0 %v6463
        %6593 = vmatprep.subr.mxu0 0.0
        %6594 = vmatpush1.msra.mxu0 %v6462
        %6595 = vmatprep.subr.mxu0 0.0
        %6596 = vmatpush1.msra.mxu0 %v6461
        %6597 = vmatprep.subr.mxu0 0.0
        %6598 = vmatpush1.msra.mxu0 %v6460
        %6599 = vmatprep.subr.mxu0 0.0
        %6600 = vmatpush1.msra.mxu0 %v6459
        %6601 = vmatprep.subr.mxu0 0.0
        %6602 = vmatpush2.msra.mxu0 %v6490
        %6603 = vmatprep.subr.mxu0 0.0
        %6604 = vmatpush2.msra.mxu0 %v6489
        %6605 = vmatprep.subr.mxu0 0.0
        %6606 = vmatpush2.msra.mxu0 %v6488
        %6607 = vmatprep.subr.mxu0 0.0
        %6608 = vmatpush2.msra.mxu0 %v6487
        %6609 = vmatprep.subr.mxu0 0.0
        %6610 = vmatpush2.msra.mxu0 %v6486
        %6611 = vmatprep.subr.mxu0 0.0
        %6612 = vmatpush2.msra.mxu0 %v6485
        %6613 = vmatprep.subr.mxu0 0.0
        %6614 = vmatpush2.msra.mxu0 %v6484
        %6615 = vmatprep.subr.mxu0 0.0
        %6616 = vmatpush2.msra.mxu0 %v6483
        %6617 = vmatprep.subr.mxu0 0.0
        %6618 = vmatpush2.msra.mxu0 %v6482
        %6619 = vmatprep.subr.mxu0 0.0
        %6620 = vmatpush2.msra.mxu0 %v6481
        %6621 = vmatprep.subr.mxu0 0.0
        %6622 = vmatpush2.msra.mxu0 %v6480
        %6623 = vmatprep.subr.mxu0 0.0
        %6624 = vmatpush2.msra.mxu0 %v6479
        %6625 = vmatprep.subr.mxu0 0.0
        %6626 = vmatpush2.msra.mxu0 %v6478
        %6627 = vmatprep.subr.mxu0 0.0
        %6628 = vmatpush2.msra.mxu0 %v6477
        %6629 = vmatprep.subr.mxu0 0.0
        %6630 = vmatpush2.msra.mxu0 %v6476
        %6631 = vmatprep.subr.mxu0 0.0
        %6632 = vmatpush2.msra.mxu0 %v6475
        %6633 = vmatprep.mubr.f32.mxu0 %v6496
        %6634 = vmatmul.mubr.f32.gmra.mxu0 %v6492
        %v6635 = vpop.f32.mrf.mxu0
        %v6636 = vadd.f32 %v6566, %v6635
        %v6637 = vpop.f32.mrf.mxu0
        %6638 = vdwg.mxu0
        %vm6639 = vcmask 257024
        %6640 = vst.msk [vmem:[%s458] sm:$0xf] %vm6639, %v6636
        %p6641 = scmp.lt.s32.totalorder %s27, 1
        %s6642 = scalar_select %p6641, %s27, 1
        %s6643 = smul.addr %s6642, 4
        %s6644 = scalar_lea.vmem %s13, %s6643
        // Predicated region
        $region77: #{transformer_multi_image_pooling.1} parent=71 // pred_check
          %p6645 = pneg %p323
        $region78: #{transformer_multi_image_pooling.1} parent=71 // pred_check_branch
          %6647 = sbr.rel (%p6645) target = $region80
        $region79: #{transformer_multi_image_pooling.1} parent=71 // pred_region
          _
        $region80: #{transformer_multi_image_pooling.1} parent=71 // pred_fallthru
          _
      $region72: #{transformer_multi_image_pooling.1} parent=5 // pred_fallthru
        _
      %p6648 = scmp.le.s32.totalorder 2, %s22
      // Predicated region
      $region81: #{transformer_multi_image_pooling.1} parent=5 // pred_check
        %p6649 = pneg %p6648
      $region82: #{transformer_multi_image_pooling.1} parent=5 // pred_check_branch
        %6651 = sbr.rel (%p6649) target = $region84
      $region83: #{transformer_multi_image_pooling.1} parent=5 // pred_region
        %s6652 = ssub.s32 %s22, 2
        // Predicated region
        $region85: #{transformer_multi_image_pooling.1} parent=83 // pred_check
          %p6653 = pneg %p329
        $region86: #{transformer_multi_image_pooling.1} parent=83 // pred_check_branch
          %6655 = sbr.rel (%p6653) target = $region88
        $region87: #{transformer_multi_image_pooling.1} parent=83 // pred_region
          %p6656 = scmp.lt.s32.totalorder %s28, 1
          %s6657 = scalar_select %p6656, %s28, 1
          %s6658 = smul.addr %s6657, 4
          %s6659 = scalar_lea.vmem %s13, %s6658
        $region88: #{transformer_multi_image_pooling.1} parent=83 // pred_fallthru
          _
      $region84: #{transformer_multi_image_pooling.1} parent=5 // pred_fallthru
        _
    $region6: #{transformer_multi_image_pooling.1} parent=1 // loop_footer
      %s26 = sadd.s32 1, %s22
    $region7: #{transformer_multi_image_pooling.1} parent=1 // loop_footer_branch
      %21 = sbr.rel target = $region3
    $region8: #{transformer_multi_image_pooling.1} parent=1 // loop_exit
      _
    %6660 = vsyncpa [#allocation3], 1
    %s6661 = scalar_lea.sflag [#allocation3], 1
    %6662 = vsyncpa %s6661, 1

</llo_original>
